<compile_context>
chip_gen: v7x
topology: tpu7x:2x2x1
jax: 0.10.0
libtpu: 0.0.40
codegen_flags: <defaults>
</compile_context>

<pallas_src>
import math

import jax
import jax.numpy as jnp
from jax import lax
from jax.experimental import pallas as pl
from jax.experimental.pallas import tpu as pltpu

# ----- small, module-consistent hyperparameters -----
B = 2          # batch
S = 8          # sequence length
BS = B * S     # fused (batch, seq) rows
IN_F = 2       # nn.Linear(2, feature_size) input dim
D = 40         # feature_size (d_model), divisible by nhead=10
H = 10         # nhead (fixed by the module)
HD = D // H    # head dim
DFF = 2048     # TransformerEncoderLayer default dim_feedforward
MLP = 32       # mlp_units
NC = 10        # n_classes
LN_EPS = 1e-5  # LayerNorm default eps
NEG = -1e9     # finite "masked" value (avoids exp(-inf - -inf) NaN risk)

# ----- packed-constant layout: one (PACK_ROWS, 128) f32 array, one DMA -----
PACK_W = 128
_PACK_ENTRIES = [
    ("pe",    (BS, D)),        # PE row per (batch, seq) position (module quirk)
    ("mask",  (BS, BS)),       # additive causal + same-batch mask
    ("w_emb", (IN_F, D)),
    ("b_emb", (1, D)),
    ("wqkv",  (D, 3 * D)),     # fused in_proj (q|k|v), PyTorch layout
    ("bqkv",  (1, 3 * D)),
    ("wo",    (D, D)),
    ("bo",    (1, D)),
    ("ln1_w", (1, D)),
    ("ln1_b", (1, D)),
    ("b2",    (1, D)),
    ("ln2_w", (1, D)),
    ("ln2_b", (1, D)),
    ("wd1",   (D, MLP)),
    ("bd1",   (1, MLP)),
    ("wd2",   (MLP, NC)),
    ("bd2",   (1, NC)),
]
_PACK = {}
_row = 0
for _name, _shape in _PACK_ENTRIES:
    _PACK[_name] = (_row, _shape)
    _row += -(-_shape[0] // 8) * 8      # keep every entry's start 8-sublane aligned
PACK_ROWS = _row                        # 272 rows -> ~139 KB


def _layernorm(x, w, b):
    mu = jnp.mean(x, axis=-1, keepdims=True)
    var = jnp.mean((x - mu) ** 2, axis=-1, keepdims=True)
    return (x - mu) * lax.rsqrt(var + LN_EPS) * w + b


def trans_tc_kernel(src_ref, pack_ref, b1_ref, w1_hbm, w2_hbm, out_ref,
                    w1_vmem, w2_vmem, dma_sem):
    # Kick off the FFN-weight DMAs (the only nontrivial HBM bytes) immediately
    # so they overlap with the embedding / QKV / attention compute below.
    cp1 = pltpu.make_async_copy(w1_hbm, w1_vmem, dma_sem.at[0])
    cp2 = pltpu.make_async_copy(w2_hbm, w2_vmem, dma_sem.at[1])
    cp1.start()
    cp2.start()

    def cst(name):
        r0, (nr, nc) = _PACK[name]
        return pack_ref[r0:r0 + nr, 0:nc]     # static slice of the packed constants

    # ----- input embedding + (batch-indexed) positional encoding -----
    x = jnp.dot(src_ref[...], cst("w_emb"), preferred_element_type=jnp.float32)
    x = x + cst("b_emb") + cst("pe")                                        # (BS, D)

    # ----- fused QKV projection: one (BS, D) @ (D, 3D) matmul -----
    qkv = jnp.dot(x, cst("wqkv"), preferred_element_type=jnp.float32) + cst("bqkv")
    q = qkv[:, 0 * D:1 * D] * (1.0 / math.sqrt(HD))
    k = qkv[:, 1 * D:2 * D]
    v = qkv[:, 2 * D:3 * D]

    # ----- per-head scores; the k-transpose is absorbed into the MXU feed -----
    dn = (((1,), (1,)), ((), ()))     # contract last dims: q_h @ k_h^T, no explicit .T
    s = jnp.stack(
        [lax.dot_general(q[:, h * HD:(h + 1) * HD], k[:, h * HD:(h + 1) * HD],
                         dn, preferred_element_type=jnp.float32)
         for h in range(H)], axis=0)                                        # (H, BS, BS)

    # single fused mask/softmax chain; overwrite in place to keep live ranges short
    s = s + cst("mask")[None]
    s = jnp.exp(s - jnp.max(s, axis=-1, keepdims=True))
    s = s * pl.reciprocal(jnp.sum(s, axis=-1, keepdims=True), approx=True)

    # ----- per-head attention -> concat heads -> single out-proj matmul -----
    ctx = jnp.concatenate(
        [jnp.dot(s[h], v[:, h * HD:(h + 1) * HD], preferred_element_type=jnp.float32)
         for h in range(H)], axis=-1)                                       # (BS, D)
    attn = jnp.dot(ctx, cst("wo"), preferred_element_type=jnp.float32) + cst("bo")

    # ----- residual + LayerNorm1 (post-norm, PyTorch default norm_first=False) -----
    x = _layernorm(x + attn, cst("ln1_w"), cst("ln1_b"))

    # ----- feed-forward (bf16 weights, f32 accumulation); dropout = identity (eval) -----
    cp1.wait()   # w1 VMEM copy must be complete just before its matmul
    h1 = jnp.dot(x.astype(jnp.bfloat16), w1_vmem[...],
                 preferred_element_type=jnp.float32) + b1_ref[...]
    h1 = jnp.maximum(h1, 0.0)
    cp2.wait()   # w2 VMEM copy must be complete just before its matmul
    h2 = jnp.dot(h1.astype(jnp.bfloat16), w2_vmem[...],
                 preferred_element_type=jnp.float32) + cst("b2")
    x = _layernorm(x + h2, cst("ln2_w"), cst("ln2_b"))

    # ----- AdaptiveAvgPool1d(1): mean over the S rows of each batch -----
    pooled = jnp.concatenate(
        [jnp.mean(x[b * S:(b + 1) * S, :], axis=0, keepdims=True) for b in range(B)],
        axis=0)                                                             # (B, D)

    # ----- decoder MLP + exact softmax over classes -----
    z = jnp.maximum(
        jnp.dot(pooled, cst("wd1"), preferred_element_type=jnp.float32) + cst("bd1"), 0.0)
    logits = jnp.dot(z, cst("wd2"), preferred_element_type=jnp.float32) + cst("bd2")
    logits = logits - jnp.max(logits, axis=-1, keepdims=True)
    e = jnp.exp(logits)
    out_ref[...] = e / jnp.sum(e, axis=-1, keepdims=True)


def positional_encoding(max_len, d_model):
    # Reproduces the module's own (quirky) formula: div_term has length d_model
    # and sin/cos within a pair use different frequencies.
    position = jnp.arange(max_len, dtype=jnp.float32)[:, None]
    div_term = 1.0 / (10000.0 ** (2.0 * jnp.arange(d_model, dtype=jnp.float32) / d_model))
    pe = jnp.zeros((max_len, d_model), jnp.float32)
    pe = pe.at[:, 0::2].set(jnp.sin(position * div_term[0::2]))
    pe = pe.at[:, 1::2].set(jnp.cos(position * div_term[1::2]))
    return pe


def attention_mask():
    # Combined causal (within a sequence) + same-batch block mask for the fused
    # (B*S, B*S) score tiles.  Additive: 0 where allowed, -1e9 where masked.
    idx = jnp.arange(BS)
    bi, si = idx // S, idx % S
    allowed = (bi[:, None] == bi[None, :]) & (si[:, None] >= si[None, :])
    return jnp.where(allowed, 0.0, NEG).astype(jnp.float32)


def make_params(key):
    ks = jax.random.split(key, 14)

    def w(k, shape, fan_in, dtype=jnp.float32):
        return (jax.random.normal(k, shape, jnp.float32) / math.sqrt(fan_in)).astype(dtype)

    def b(k, n):
        return 0.01 * jax.random.normal(k, (1, n), jnp.float32)

    consts = {
        "w_emb": w(ks[0], (IN_F, D), IN_F), "b_emb": b(ks[1], D),          # input_embedding
        "wqkv": w(ks[2], (D, 3 * D), D),    "bqkv": b(ks[3], 3 * D),       # fused in_proj
        "wo": w(ks[4], (D, D), D),          "bo": b(ks[5], D),             # attn out_proj
        "ln1_w": jnp.ones((1, D), jnp.float32), "ln1_b": jnp.zeros((1, D), jnp.float32),
        "b2": b(ks[9], D),                                                 # ffn linear2 bias
        "ln2_w": jnp.ones((1, D), jnp.float32), "ln2_b": jnp.zeros((1, D), jnp.float32),
        "wd1": w(ks[10], (D, MLP), D),      "bd1": b(ks[11], MLP),         # decoder linear1
        "wd2": w(ks[12], (MLP, NC), MLP),   "bd2": b(ks[13], NC),          # decoder linear2
    }
    w1 = w(ks[6], (D, DFF), D, jnp.bfloat16)      # ffn linear1 weight (bf16, stays in HBM)
    b1 = b(ks[7], DFF)                            # ffn linear1 bias (f32, own input: 2048 lanes)
    w2 = w(ks[8], (DFF, D), DFF, jnp.bfloat16)    # ffn linear2 weight (bf16, stays in HBM)
    return consts, w1, b1, w2


def pack_constants(consts):
    # Built ONCE: pe rows (batch-indexed, module quirk) and the combined mask are
    # folded into the same packed array as the small parameters.
    entries = dict(consts)
    pe_rows = positional_encoding(B, D)                                     # (B, D)
    entries["pe"] = jnp.broadcast_to(pe_rows[:, None, :], (B, S, D)).reshape(BS, D)
    entries["mask"] = attention_mask()
    pack = jnp.zeros((PACK_ROWS, PACK_W), jnp.float32)
    for name, (r0, (nr, nc)) in _PACK.items():
        pack = pack.at[r0:r0 + nr, 0:nc].set(entries[name])
    return pack


@jax.jit
def trans_tc_forward(src, pack, b1, w1, w2):
    # Host-side layout plumbing only: flatten batch into the sublane axis.
    src2d = src.reshape(BS, IN_F)

    # Grid-less call: whole problem (<1 MiB of VMEM) fits on every generation,
    # so no tiling / no grid-step overhead.  4 auto-DMA'd inputs + 2 manual.
    return pl.pallas_call(
        trans_tc_kernel,
        out_shape=jax.ShapeDtypeStruct((B, NC), jnp.float32),
        in_specs=[
            pl.BlockSpec(memory_space=pltpu.MemorySpace.VMEM),   # src   (tiny)
            pl.BlockSpec(memory_space=pltpu.MemorySpace.VMEM),   # packed constants (1 DMA)
            pl.BlockSpec(memory_space=pltpu.MemorySpace.VMEM),   # b1    (1x2048 f32)
            pl.BlockSpec(memory_space=pl.ANY),                   # w1 stays in HBM (manual DMA)
            pl.BlockSpec(memory_space=pl.ANY),                   # w2 stays in HBM (manual DMA)
        ],
        out_specs=pl.BlockSpec(memory_space=pltpu.MemorySpace.VMEM),
        scratch_shapes=[
            pltpu.VMEM((D, DFF), jnp.bfloat16),                  # w1 landing buffer
            pltpu.VMEM((DFF, D), jnp.bfloat16),                  # w2 landing buffer
            pltpu.SemaphoreType.DMA((2,)),
        ],
    )(src2d, pack, b1, w1, w2)


if __name__ == "__main__":
    key = jax.random.PRNGKey(0)
    kx, kp = jax.random.split(key)
    src = jax.random.normal(kx, (B, S, IN_F), jnp.float32)
    consts, w1, b1, w2 = make_params(kp)
    pack = pack_constants(consts)     # built once, reused across calls

    out = trans_tc_forward(src, pack, b1, w1, w2)
    out = jax.block_until_ready(out)

    assert out.shape == (B, NC)
    assert bool(jnp.all(jnp.isfinite(out)))
    assert bool(jnp.allclose(jnp.sum(out, axis=1), 1.0, atol=1e-5))
    print("KERNEL_OK")
</pallas_src>

<mosaic_0001>
module attributes {stable_mosaic.version = 11 : i64} {
  func.func @trans_tc_kernel(%arg0: memref<16x2xf32, #tpu.memory_space<vmem>>, %arg1: memref<272x128xf32, #tpu.memory_space<vmem>>, %arg2: memref<1x2048xf32, #tpu.memory_space<vmem>>, %arg3: memref<40x2048xbf16, #tpu.memory_space<any>>, %arg4: memref<2048x40xbf16, #tpu.memory_space<any>>, %arg5: memref<2x10xf32, #tpu.memory_space<vmem>>, %arg6: memref<40x2048xbf16, #tpu.memory_space<vmem>>, %arg7: memref<2048x40xbf16, #tpu.memory_space<vmem>>, %arg8: memref<2x!tpu.dma_semaphore, #tpu.memory_space<semaphore_mem>>) attributes {dimension_semantics = [], scalar_prefetch = 0 : i64, scratch_operands = 3 : i64, tpu.core_type = #tpu.core_type<tc>} {
    %c0_i32 = arith.constant 0 : i32
    %0 = tpu.memref_slice %arg8[%c0_i32] : memref<2x!tpu.dma_semaphore, #tpu.memory_space<semaphore_mem>> -> memref<1x!tpu.dma_semaphore, #tpu.memory_space<semaphore_mem>>
    %1 = tpu.memref_squeeze %0 : memref<1x!tpu.dma_semaphore, #tpu.memory_space<semaphore_mem>> -> memref<!tpu.dma_semaphore, #tpu.memory_space<semaphore_mem>>
    tpu.enqueue_dma source(%arg3 : memref<40x2048xbf16, #tpu.memory_space<any>>) target(%arg6 : memref<40x2048xbf16, #tpu.memory_space<vmem>>) target_semaphore(%1 : memref<!tpu.dma_semaphore, #tpu.memory_space<semaphore_mem>>)
    %c1_i32 = arith.constant 1 : i32
    %2 = tpu.memref_slice %arg8[%c1_i32] : memref<2x!tpu.dma_semaphore, #tpu.memory_space<semaphore_mem>> -> memref<1x!tpu.dma_semaphore, #tpu.memory_space<semaphore_mem>>
    %3 = tpu.memref_squeeze %2 : memref<1x!tpu.dma_semaphore, #tpu.memory_space<semaphore_mem>> -> memref<!tpu.dma_semaphore, #tpu.memory_space<semaphore_mem>>
    tpu.enqueue_dma source(%arg4 : memref<2048x40xbf16, #tpu.memory_space<any>>) target(%arg7 : memref<2048x40xbf16, #tpu.memory_space<vmem>>) target_semaphore(%3 : memref<!tpu.dma_semaphore, #tpu.memory_space<semaphore_mem>>)
    %c0 = arith.constant 0 : index
    %c0_0 = arith.constant 0 : index
    %4 = vector.load %arg0[%c0, %c0_0] : memref<16x2xf32, #tpu.memory_space<vmem>>, vector<16x2xf32>
    %c32 = arith.constant 32 : index
    %c0_1 = arith.constant 0 : index
    %5 = vector.load %arg1[%c32, %c0_1] : memref<272x128xf32, #tpu.memory_space<vmem>>, vector<2x40xf32>
    %cst = arith.constant dense<0.000000e+00> : vector<16x40xf32>
    %6 = tpu.matmul %4, %5, %cst {dimension_numbers = #tpu.dot_dimension_numbers<[1], [0], [0], [1], [0, 0, 1, 1], [], []>} : vector<16x2xf32>, vector<2x40xf32>, vector<16x40xf32> -> vector<16x40xf32>
    %c40 = arith.constant 40 : index
    %c0_2 = arith.constant 0 : index
    %7 = vector.load %arg1[%c40, %c0_2] : memref<272x128xf32, #tpu.memory_space<vmem>>, vector<1x40xf32>
    %8 = vector.broadcast %7 : vector<1x40xf32> to vector<16x40xf32>
    %9 = arith.addf %6, %8 : vector<16x40xf32>
    %c0_3 = arith.constant 0 : index
    %c0_4 = arith.constant 0 : index
    %10 = vector.load %arg1[%c0_3, %c0_4] : memref<272x128xf32, #tpu.memory_space<vmem>>, vector<16x40xf32>
    %11 = arith.addf %9, %10 : vector<16x40xf32>
    %c48 = arith.constant 48 : index
    %c0_5 = arith.constant 0 : index
    %12 = vector.load %arg1[%c48, %c0_5] : memref<272x128xf32, #tpu.memory_space<vmem>>, vector<40x120xf32>
    %cst_6 = arith.constant dense<0.000000e+00> : vector<16x120xf32>
    %13 = tpu.matmul %11, %12, %cst_6 {dimension_numbers = #tpu.dot_dimension_numbers<[1], [0], [0], [1], [0, 0, 1, 1], [], []>} : vector<16x40xf32>, vector<40x120xf32>, vector<16x120xf32> -> vector<16x120xf32>
    %c88 = arith.constant 88 : index
    %c0_7 = arith.constant 0 : index
    %14 = vector.load %arg1[%c88, %c0_7] : memref<272x128xf32, #tpu.memory_space<vmem>>, vector<1x120xf32>
    %15 = vector.broadcast %14 : vector<1x120xf32> to vector<16x120xf32>
    %16 = arith.addf %13, %15 : vector<16x120xf32>
    %17 = vector.extract_strided_slice %16 {offsets = [0, 0], sizes = [16, 40], strides = [1, 1]} : vector<16x120xf32> to vector<16x40xf32>
    %cst_8 = arith.constant 5.000000e-01 : f32
    %18 = vector.broadcast %cst_8 : f32 to vector<16x40xf32>
    %19 = arith.mulf %17, %18 : vector<16x40xf32>
    %20 = vector.extract_strided_slice %16 {offsets = [0, 40], sizes = [16, 40], strides = [1, 1]} : vector<16x120xf32> to vector<16x40xf32>
    %21 = vector.extract_strided_slice %16 {offsets = [0, 80], sizes = [16, 40], strides = [1, 1]} : vector<16x120xf32> to vector<16x40xf32>
    %22 = vector.extract_strided_slice %19 {offsets = [0, 0], sizes = [16, 4], strides = [1, 1]} : vector<16x40xf32> to vector<16x4xf32>
    %23 = vector.extract_strided_slice %20 {offsets = [0, 0], sizes = [16, 4], strides = [1, 1]} : vector<16x40xf32> to vector<16x4xf32>
    %cst_9 = arith.constant dense<0.000000e+00> : vector<16x16xf32>
    %24 = tpu.matmul %22, %23, %cst_9 {dimension_numbers = #tpu.dot_dimension_numbers<[1], [1], [0], [0], [0, 0, 1, 0], [], []>} : vector<16x4xf32>, vector<16x4xf32>, vector<16x16xf32> -> vector<16x16xf32>
    %25 = vector.extract_strided_slice %19 {offsets = [0, 4], sizes = [16, 4], strides = [1, 1]} : vector<16x40xf32> to vector<16x4xf32>
    %26 = vector.extract_strided_slice %20 {offsets = [0, 4], sizes = [16, 4], strides = [1, 1]} : vector<16x40xf32> to vector<16x4xf32>
    %cst_10 = arith.constant dense<0.000000e+00> : vector<16x16xf32>
    %27 = tpu.matmul %25, %26, %cst_10 {dimension_numbers = #tpu.dot_dimension_numbers<[1], [1], [0], [0], [0, 0, 1, 0], [], []>} : vector<16x4xf32>, vector<16x4xf32>, vector<16x16xf32> -> vector<16x16xf32>
    %28 = vector.extract_strided_slice %19 {offsets = [0, 8], sizes = [16, 4], strides = [1, 1]} : vector<16x40xf32> to vector<16x4xf32>
    %29 = vector.extract_strided_slice %20 {offsets = [0, 8], sizes = [16, 4], strides = [1, 1]} : vector<16x40xf32> to vector<16x4xf32>
    %cst_11 = arith.constant dense<0.000000e+00> : vector<16x16xf32>
    %30 = tpu.matmul %28, %29, %cst_11 {dimension_numbers = #tpu.dot_dimension_numbers<[1], [1], [0], [0], [0, 0, 1, 0], [], []>} : vector<16x4xf32>, vector<16x4xf32>, vector<16x16xf32> -> vector<16x16xf32>
    %31 = vector.extract_strided_slice %19 {offsets = [0, 12], sizes = [16, 4], strides = [1, 1]} : vector<16x40xf32> to vector<16x4xf32>
    %32 = vector.extract_strided_slice %20 {offsets = [0, 12], sizes = [16, 4], strides = [1, 1]} : vector<16x40xf32> to vector<16x4xf32>
    %cst_12 = arith.constant dense<0.000000e+00> : vector<16x16xf32>
    %33 = tpu.matmul %31, %32, %cst_12 {dimension_numbers = #tpu.dot_dimension_numbers<[1], [1], [0], [0], [0, 0, 1, 0], [], []>} : vector<16x4xf32>, vector<16x4xf32>, vector<16x16xf32> -> vector<16x16xf32>
    %34 = vector.extract_strided_slice %19 {offsets = [0, 16], sizes = [16, 4], strides = [1, 1]} : vector<16x40xf32> to vector<16x4xf32>
    %35 = vector.extract_strided_slice %20 {offsets = [0, 16], sizes = [16, 4], strides = [1, 1]} : vector<16x40xf32> to vector<16x4xf32>
    %cst_13 = arith.constant dense<0.000000e+00> : vector<16x16xf32>
    %36 = tpu.matmul %34, %35, %cst_13 {dimension_numbers = #tpu.dot_dimension_numbers<[1], [1], [0], [0], [0, 0, 1, 0], [], []>} : vector<16x4xf32>, vector<16x4xf32>, vector<16x16xf32> -> vector<16x16xf32>
    %37 = vector.extract_strided_slice %19 {offsets = [0, 20], sizes = [16, 4], strides = [1, 1]} : vector<16x40xf32> to vector<16x4xf32>
    %38 = vector.extract_strided_slice %20 {offsets = [0, 20], sizes = [16, 4], strides = [1, 1]} : vector<16x40xf32> to vector<16x4xf32>
    %cst_14 = arith.constant dense<0.000000e+00> : vector<16x16xf32>
    %39 = tpu.matmul %37, %38, %cst_14 {dimension_numbers = #tpu.dot_dimension_numbers<[1], [1], [0], [0], [0, 0, 1, 0], [], []>} : vector<16x4xf32>, vector<16x4xf32>, vector<16x16xf32> -> vector<16x16xf32>
    %40 = vector.extract_strided_slice %19 {offsets = [0, 24], sizes = [16, 4], strides = [1, 1]} : vector<16x40xf32> to vector<16x4xf32>
    %41 = vector.extract_strided_slice %20 {offsets = [0, 24], sizes = [16, 4], strides = [1, 1]} : vector<16x40xf32> to vector<16x4xf32>
    %cst_15 = arith.constant dense<0.000000e+00> : vector<16x16xf32>
    %42 = tpu.matmul %40, %41, %cst_15 {dimension_numbers = #tpu.dot_dimension_numbers<[1], [1], [0], [0], [0, 0, 1, 0], [], []>} : vector<16x4xf32>, vector<16x4xf32>, vector<16x16xf32> -> vector<16x16xf32>
    %43 = vector.extract_strided_slice %19 {offsets = [0, 28], sizes = [16, 4], strides = [1, 1]} : vector<16x40xf32> to vector<16x4xf32>
    %44 = vector.extract_strided_slice %20 {offsets = [0, 28], sizes = [16, 4], strides = [1, 1]} : vector<16x40xf32> to vector<16x4xf32>
    %cst_16 = arith.constant dense<0.000000e+00> : vector<16x16xf32>
    %45 = tpu.matmul %43, %44, %cst_16 {dimension_numbers = #tpu.dot_dimension_numbers<[1], [1], [0], [0], [0, 0, 1, 0], [], []>} : vector<16x4xf32>, vector<16x4xf32>, vector<16x16xf32> -> vector<16x16xf32>
    %46 = vector.extract_strided_slice %19 {offsets = [0, 32], sizes = [16, 4], strides = [1, 1]} : vector<16x40xf32> to vector<16x4xf32>
    %47 = vector.extract_strided_slice %20 {offsets = [0, 32], sizes = [16, 4], strides = [1, 1]} : vector<16x40xf32> to vector<16x4xf32>
    %cst_17 = arith.constant dense<0.000000e+00> : vector<16x16xf32>
    %48 = tpu.matmul %46, %47, %cst_17 {dimension_numbers = #tpu.dot_dimension_numbers<[1], [1], [0], [0], [0, 0, 1, 0], [], []>} : vector<16x4xf32>, vector<16x4xf32>, vector<16x16xf32> -> vector<16x16xf32>
    %49 = vector.extract_strided_slice %19 {offsets = [0, 36], sizes = [16, 4], strides = [1, 1]} : vector<16x40xf32> to vector<16x4xf32>
    %50 = vector.extract_strided_slice %20 {offsets = [0, 36], sizes = [16, 4], strides = [1, 1]} : vector<16x40xf32> to vector<16x4xf32>
    %cst_18 = arith.constant dense<0.000000e+00> : vector<16x16xf32>
    %51 = tpu.matmul %49, %50, %cst_18 {dimension_numbers = #tpu.dot_dimension_numbers<[1], [1], [0], [0], [0, 0, 1, 0], [], []>} : vector<16x4xf32>, vector<16x4xf32>, vector<16x16xf32> -> vector<16x16xf32>
    %52 = vector.shape_cast %24 : vector<16x16xf32> to vector<1x16x16xf32>
    %53 = vector.shape_cast %27 : vector<16x16xf32> to vector<1x16x16xf32>
    %54 = vector.shape_cast %30 : vector<16x16xf32> to vector<1x16x16xf32>
    %55 = vector.shape_cast %33 : vector<16x16xf32> to vector<1x16x16xf32>
    %56 = vector.shape_cast %36 : vector<16x16xf32> to vector<1x16x16xf32>
    %57 = vector.shape_cast %39 : vector<16x16xf32> to vector<1x16x16xf32>
    %58 = vector.shape_cast %42 : vector<16x16xf32> to vector<1x16x16xf32>
    %59 = vector.shape_cast %45 : vector<16x16xf32> to vector<1x16x16xf32>
    %60 = vector.shape_cast %48 : vector<16x16xf32> to vector<1x16x16xf32>
    %61 = vector.shape_cast %51 : vector<16x16xf32> to vector<1x16x16xf32>
    %62 = tpu.concatenate %52, %53, %54, %55, %56, %57, %58, %59, %60, %61 in 0 : vector<1x16x16xf32>, vector<1x16x16xf32>, vector<1x16x16xf32>, vector<1x16x16xf32>, vector<1x16x16xf32>, vector<1x16x16xf32>, vector<1x16x16xf32>, vector<1x16x16xf32>, vector<1x16x16xf32>, vector<1x16x16xf32> -> vector<10x16x16xf32>
    %c16 = arith.constant 16 : index
    %c0_19 = arith.constant 0 : index
    %63 = vector.load %arg1[%c16, %c0_19] : memref<272x128xf32, #tpu.memory_space<vmem>>, vector<16x16xf32>
    %64 = vector.shape_cast %63 : vector<16x16xf32> to vector<1x16x16xf32>
    %65 = vector.broadcast %64 : vector<1x16x16xf32> to vector<10x16x16xf32>
    %66 = arith.addf %62, %65 : vector<10x16x16xf32>
    %cst_20 = arith.constant dense<0xFF800000> : vector<10x16xf32>
    %67 = vector.multi_reduction <maximumf>, %66, %cst_20 [2] : vector<10x16x16xf32> to vector<10x16xf32>
    %68 = vector.shape_cast %67 : vector<10x16xf32> to vector<10x16x1xf32>
    %69 = vector.broadcast %68 : vector<10x16x1xf32> to vector<10x16x16xf32>
    %70 = arith.subf %66, %69 : vector<10x16x16xf32>
    %71 = math.exp %70 : vector<10x16x16xf32>
    %cst_21 = arith.constant dense<0.000000e+00> : vector<10x16xf32>
    %72 = vector.multi_reduction <add>, %71, %cst_21 [2] : vector<10x16x16xf32> to vector<10x16xf32>
    %73 = vector.shape_cast %72 : vector<10x16xf32> to vector<10x16x1xf32>
    %74 = tpu.reciprocal %73 {approx = true} : vector<10x16x1xf32> -> vector<10x16x1xf32>
    %75 = vector.broadcast %74 : vector<10x16x1xf32> to vector<10x16x16xf32>
    %76 = arith.mulf %71, %75 : vector<10x16x16xf32>
    %77 = vector.extract_strided_slice %76 {offsets = [0, 0, 0], sizes = [1, 16, 16], strides = [1, 1, 1]} : vector<10x16x16xf32> to vector<1x16x16xf32>
    %78 = vector.shape_cast %77 : vector<1x16x16xf32> to vector<16x16xf32>
    %79 = vector.extract_strided_slice %21 {offsets = [0, 0], sizes = [16, 4], strides = [1, 1]} : vector<16x40xf32> to vector<16x4xf32>
    %cst_22 = arith.constant dense<0.000000e+00> : vector<16x4xf32>
    %80 = tpu.matmul %78, %79, %cst_22 {dimension_numbers = #tpu.dot_dimension_numbers<[1], [0], [0], [1], [0, 0, 1, 1], [], []>} : vector<16x16xf32>, vector<16x4xf32>, vector<16x4xf32> -> vector<16x4xf32>
    %81 = vector.extract_strided_slice %76 {offsets = [1, 0, 0], sizes = [1, 16, 16], strides = [1, 1, 1]} : vector<10x16x16xf32> to vector<1x16x16xf32>
    %82 = vector.shape_cast %81 : vector<1x16x16xf32> to vector<16x16xf32>
    %83 = vector.extract_strided_slice %21 {offsets = [0, 4], sizes = [16, 4], strides = [1, 1]} : vector<16x40xf32> to vector<16x4xf32>
    %cst_23 = arith.constant dense<0.000000e+00> : vector<16x4xf32>
    %84 = tpu.matmul %82, %83, %cst_23 {dimension_numbers = #tpu.dot_dimension_numbers<[1], [0], [0], [1], [0, 0, 1, 1], [], []>} : vector<16x16xf32>, vector<16x4xf32>, vector<16x4xf32> -> vector<16x4xf32>
    %85 = vector.extract_strided_slice %76 {offsets = [2, 0, 0], sizes = [1, 16, 16], strides = [1, 1, 1]} : vector<10x16x16xf32> to vector<1x16x16xf32>
    %86 = vector.shape_cast %85 : vector<1x16x16xf32> to vector<16x16xf32>
    %87 = vector.extract_strided_slice %21 {offsets = [0, 8], sizes = [16, 4], strides = [1, 1]} : vector<16x40xf32> to vector<16x4xf32>
    %cst_24 = arith.constant dense<0.000000e+00> : vector<16x4xf32>
    %88 = tpu.matmul %86, %87, %cst_24 {dimension_numbers = #tpu.dot_dimension_numbers<[1], [0], [0], [1], [0, 0, 1, 1], [], []>} : vector<16x16xf32>, vector<16x4xf32>, vector<16x4xf32> -> vector<16x4xf32>
    %89 = vector.extract_strided_slice %76 {offsets = [3, 0, 0], sizes = [1, 16, 16], strides = [1, 1, 1]} : vector<10x16x16xf32> to vector<1x16x16xf32>
    %90 = vector.shape_cast %89 : vector<1x16x16xf32> to vector<16x16xf32>
    %91 = vector.extract_strided_slice %21 {offsets = [0, 12], sizes = [16, 4], strides = [1, 1]} : vector<16x40xf32> to vector<16x4xf32>
    %cst_25 = arith.constant dense<0.000000e+00> : vector<16x4xf32>
    %92 = tpu.matmul %90, %91, %cst_25 {dimension_numbers = #tpu.dot_dimension_numbers<[1], [0], [0], [1], [0, 0, 1, 1], [], []>} : vector<16x16xf32>, vector<16x4xf32>, vector<16x4xf32> -> vector<16x4xf32>
    %93 = vector.extract_strided_slice %76 {offsets = [4, 0, 0], sizes = [1, 16, 16], strides = [1, 1, 1]} : vector<10x16x16xf32> to vector<1x16x16xf32>
    %94 = vector.shape_cast %93 : vector<1x16x16xf32> to vector<16x16xf32>
    %95 = vector.extract_strided_slice %21 {offsets = [0, 16], sizes = [16, 4], strides = [1, 1]} : vector<16x40xf32> to vector<16x4xf32>
    %cst_26 = arith.constant dense<0.000000e+00> : vector<16x4xf32>
    %96 = tpu.matmul %94, %95, %cst_26 {dimension_numbers = #tpu.dot_dimension_numbers<[1], [0], [0], [1], [0, 0, 1, 1], [], []>} : vector<16x16xf32>, vector<16x4xf32>, vector<16x4xf32> -> vector<16x4xf32>
    %97 = vector.extract_strided_slice %76 {offsets = [5, 0, 0], sizes = [1, 16, 16], strides = [1, 1, 1]} : vector<10x16x16xf32> to vector<1x16x16xf32>
    %98 = vector.shape_cast %97 : vector<1x16x16xf32> to vector<16x16xf32>
    %99 = vector.extract_strided_slice %21 {offsets = [0, 20], sizes = [16, 4], strides = [1, 1]} : vector<16x40xf32> to vector<16x4xf32>
    %cst_27 = arith.constant dense<0.000000e+00> : vector<16x4xf32>
    %100 = tpu.matmul %98, %99, %cst_27 {dimension_numbers = #tpu.dot_dimension_numbers<[1], [0], [0], [1], [0, 0, 1, 1], [], []>} : vector<16x16xf32>, vector<16x4xf32>, vector<16x4xf32> -> vector<16x4xf32>
    %101 = vector.extract_strided_slice %76 {offsets = [6, 0, 0], sizes = [1, 16, 16], strides = [1, 1, 1]} : vector<10x16x16xf32> to vector<1x16x16xf32>
    %102 = vector.shape_cast %101 : vector<1x16x16xf32> to vector<16x16xf32>
    %103 = vector.extract_strided_slice %21 {offsets = [0, 24], sizes = [16, 4], strides = [1, 1]} : vector<16x40xf32> to vector<16x4xf32>
    %cst_28 = arith.constant dense<0.000000e+00> : vector<16x4xf32>
    %104 = tpu.matmul %102, %103, %cst_28 {dimension_numbers = #tpu.dot_dimension_numbers<[1], [0], [0], [1], [0, 0, 1, 1], [], []>} : vector<16x16xf32>, vector<16x4xf32>, vector<16x4xf32> -> vector<16x4xf32>
    %105 = vector.extract_strided_slice %76 {offsets = [7, 0, 0], sizes = [1, 16, 16], strides = [1, 1, 1]} : vector<10x16x16xf32> to vector<1x16x16xf32>
    %106 = vector.shape_cast %105 : vector<1x16x16xf32> to vector<16x16xf32>
    %107 = vector.extract_strided_slice %21 {offsets = [0, 28], sizes = [16, 4], strides = [1, 1]} : vector<16x40xf32> to vector<16x4xf32>
    %cst_29 = arith.constant dense<0.000000e+00> : vector<16x4xf32>
    %108 = tpu.matmul %106, %107, %cst_29 {dimension_numbers = #tpu.dot_dimension_numbers<[1], [0], [0], [1], [0, 0, 1, 1], [], []>} : vector<16x16xf32>, vector<16x4xf32>, vector<16x4xf32> -> vector<16x4xf32>
    %109 = vector.extract_strided_slice %76 {offsets = [8, 0, 0], sizes = [1, 16, 16], strides = [1, 1, 1]} : vector<10x16x16xf32> to vector<1x16x16xf32>
    %110 = vector.shape_cast %109 : vector<1x16x16xf32> to vector<16x16xf32>
    %111 = vector.extract_strided_slice %21 {offsets = [0, 32], sizes = [16, 4], strides = [1, 1]} : vector<16x40xf32> to vector<16x4xf32>
    %cst_30 = arith.constant dense<0.000000e+00> : vector<16x4xf32>
    %112 = tpu.matmul %110, %111, %cst_30 {dimension_numbers = #tpu.dot_dimension_numbers<[1], [0], [0], [1], [0, 0, 1, 1], [], []>} : vector<16x16xf32>, vector<16x4xf32>, vector<16x4xf32> -> vector<16x4xf32>
    %113 = vector.extract_strided_slice %76 {offsets = [9, 0, 0], sizes = [1, 16, 16], strides = [1, 1, 1]} : vector<10x16x16xf32> to vector<1x16x16xf32>
    %114 = vector.shape_cast %113 : vector<1x16x16xf32> to vector<16x16xf32>
    %115 = vector.extract_strided_slice %21 {offsets = [0, 36], sizes = [16, 4], strides = [1, 1]} : vector<16x40xf32> to vector<16x4xf32>
    %cst_31 = arith.constant dense<0.000000e+00> : vector<16x4xf32>
    %116 = tpu.matmul %114, %115, %cst_31 {dimension_numbers = #tpu.dot_dimension_numbers<[1], [0], [0], [1], [0, 0, 1, 1], [], []>} : vector<16x16xf32>, vector<16x4xf32>, vector<16x4xf32> -> vector<16x4xf32>
    %117 = tpu.concatenate %80, %84, %88, %92, %96, %100, %104, %108, %112, %116 in 1 : vector<16x4xf32>, vector<16x4xf32>, vector<16x4xf32>, vector<16x4xf32>, vector<16x4xf32>, vector<16x4xf32>, vector<16x4xf32>, vector<16x4xf32>, vector<16x4xf32>, vector<16x4xf32> -> vector<16x40xf32>
    %c96 = arith.constant 96 : index
    %c0_32 = arith.constant 0 : index
    %118 = vector.load %arg1[%c96, %c0_32] : memref<272x128xf32, #tpu.memory_space<vmem>>, vector<40x40xf32>
    %cst_33 = arith.constant dense<0.000000e+00> : vector<16x40xf32>
    %119 = tpu.matmul %117, %118, %cst_33 {dimension_numbers = #tpu.dot_dimension_numbers<[1], [0], [0], [1], [0, 0, 1, 1], [], []>} : vector<16x40xf32>, vector<40x40xf32>, vector<16x40xf32> -> vector<16x40xf32>
    %c136 = arith.constant 136 : index
    %c0_34 = arith.constant 0 : index
    %120 = vector.load %arg1[%c136, %c0_34] : memref<272x128xf32, #tpu.memory_space<vmem>>, vector<1x40xf32>
    %121 = vector.broadcast %120 : vector<1x40xf32> to vector<16x40xf32>
    %122 = arith.addf %119, %121 : vector<16x40xf32>
    %123 = arith.addf %11, %122 : vector<16x40xf32>
    %c144 = arith.constant 144 : index
    %c0_35 = arith.constant 0 : index
    %124 = vector.load %arg1[%c144, %c0_35] : memref<272x128xf32, #tpu.memory_space<vmem>>, vector<1x40xf32>
    %c152 = arith.constant 152 : index
    %c0_36 = arith.constant 0 : index
    %125 = vector.load %arg1[%c152, %c0_36] : memref<272x128xf32, #tpu.memory_space<vmem>>, vector<1x40xf32>
    %cst_37 = arith.constant dense<0.000000e+00> : vector<16xf32>
    %126 = vector.multi_reduction <add>, %123, %cst_37 [1] : vector<16x40xf32> to vector<16xf32>
    %127 = vector.shape_cast %126 : vector<16xf32> to vector<16x1xf32>
    %cst_38 = arith.constant 4.000000e+01 : f32
    %128 = vector.broadcast %cst_38 : f32 to vector<16x1xf32>
    %129 = arith.divf %127, %128 : vector<16x1xf32>
    %130 = vector.broadcast %129 : vector<16x1xf32> to vector<16x40xf32>
    %131 = arith.subf %123, %130 : vector<16x40xf32>
    %132 = arith.mulf %131, %131 : vector<16x40xf32>
    %cst_39 = arith.constant dense<0.000000e+00> : vector<16xf32>
    %133 = vector.multi_reduction <add>, %132, %cst_39 [1] : vector<16x40xf32> to vector<16xf32>
    %134 = vector.shape_cast %133 : vector<16xf32> to vector<16x1xf32>
    %cst_40 = arith.constant 4.000000e+01 : f32
    %135 = vector.broadcast %cst_40 : f32 to vector<16x1xf32>
    %136 = arith.divf %134, %135 : vector<16x1xf32>
    %137 = vector.broadcast %129 : vector<16x1xf32> to vector<16x40xf32>
    %138 = arith.subf %123, %137 : vector<16x40xf32>
    %cst_41 = arith.constant 9.99999974E-6 : f32
    %139 = vector.broadcast %cst_41 : f32 to vector<16x1xf32>
    %140 = arith.addf %136, %139 : vector<16x1xf32>
    %141 = math.rsqrt %140 : vector<16x1xf32>
    %142 = vector.broadcast %141 : vector<16x1xf32> to vector<16x40xf32>
    %143 = arith.mulf %138, %142 : vector<16x40xf32>
    %144 = vector.broadcast %124 : vector<1x40xf32> to vector<16x40xf32>
    %145 = arith.mulf %143, %144 : vector<16x40xf32>
    %146 = vector.broadcast %125 : vector<1x40xf32> to vector<16x40xf32>
    %147 = arith.addf %145, %146 : vector<16x40xf32>
    %c0_i32_42 = arith.constant 0 : i32
    %148 = tpu.memref_slice %arg8[%c0_i32_42] : memref<2x!tpu.dma_semaphore, #tpu.memory_space<semaphore_mem>> -> memref<1x!tpu.dma_semaphore, #tpu.memory_space<semaphore_mem>>
    %149 = tpu.memref_squeeze %148 : memref<1x!tpu.dma_semaphore, #tpu.memory_space<semaphore_mem>> -> memref<!tpu.dma_semaphore, #tpu.memory_space<semaphore_mem>>
    tpu.wait_dma2 semaphore(%149 : memref<!tpu.dma_semaphore, #tpu.memory_space<semaphore_mem>>) src(%arg3 : memref<40x2048xbf16, #tpu.memory_space<any>>) dst(%arg6 : memref<40x2048xbf16, #tpu.memory_space<vmem>>)
    %150 = arith.truncf %147 : vector<16x40xf32> to vector<16x40xbf16>
    %c0_43 = arith.constant 0 : index
    %c0_44 = arith.constant 0 : index
    %151 = vector.load %arg6[%c0_43, %c0_44] : memref<40x2048xbf16, #tpu.memory_space<vmem>>, vector<40x2048xbf16>
    %cst_45 = arith.constant dense<0.000000e+00> : vector<16x2048xf32>
    %152 = tpu.matmul %150, %151, %cst_45 {dimension_numbers = #tpu.dot_dimension_numbers<[1], [0], [0], [1], [0, 0, 1, 1], [], []>} : vector<16x40xbf16>, vector<40x2048xbf16>, vector<16x2048xf32> -> vector<16x2048xf32>
    %c0_46 = arith.constant 0 : index
    %c0_47 = arith.constant 0 : index
    %153 = vector.load %arg2[%c0_46, %c0_47] : memref<1x2048xf32, #tpu.memory_space<vmem>>, vector<1x2048xf32>
    %154 = vector.broadcast %153 : vector<1x2048xf32> to vector<16x2048xf32>
    %155 = arith.addf %152, %154 : vector<16x2048xf32>
    %cst_48 = arith.constant 0.000000e+00 : f32
    %156 = vector.broadcast %cst_48 : f32 to vector<16x2048xf32>
    %157 = arith.maximumf %155, %156 : vector<16x2048xf32>
    %c1_i32_49 = arith.constant 1 : i32
    %158 = tpu.memref_slice %arg8[%c1_i32_49] : memref<2x!tpu.dma_semaphore, #tpu.memory_space<semaphore_mem>> -> memref<1x!tpu.dma_semaphore, #tpu.memory_space<semaphore_mem>>
    %159 = tpu.memref_squeeze %158 : memref<1x!tpu.dma_semaphore, #tpu.memory_space<semaphore_mem>> -> memref<!tpu.dma_semaphore, #tpu.memory_space<semaphore_mem>>
    tpu.wait_dma2 semaphore(%159 : memref<!tpu.dma_semaphore, #tpu.memory_space<semaphore_mem>>) src(%arg4 : memref<2048x40xbf16, #tpu.memory_space<any>>) dst(%arg7 : memref<2048x40xbf16, #tpu.memory_space<vmem>>)
    %160 = arith.truncf %157 : vector<16x2048xf32> to vector<16x2048xbf16>
    %c0_50 = arith.constant 0 : index
    %c0_51 = arith.constant 0 : index
    %161 = vector.load %arg7[%c0_50, %c0_51] : memref<2048x40xbf16, #tpu.memory_space<vmem>>, vector<2048x40xbf16>
    %cst_52 = arith.constant dense<0.000000e+00> : vector<16x40xf32>
    %162 = tpu.matmul %160, %161, %cst_52 {dimension_numbers = #tpu.dot_dimension_numbers<[1], [0], [0], [1], [0, 0, 1, 1], [], []>} : vector<16x2048xbf16>, vector<2048x40xbf16>, vector<16x40xf32> -> vector<16x40xf32>
    %c160 = arith.constant 160 : index
    %c0_53 = arith.constant 0 : index
    %163 = vector.load %arg1[%c160, %c0_53] : memref<272x128xf32, #tpu.memory_space<vmem>>, vector<1x40xf32>
    %164 = vector.broadcast %163 : vector<1x40xf32> to vector<16x40xf32>
    %165 = arith.addf %162, %164 : vector<16x40xf32>
    %166 = arith.addf %147, %165 : vector<16x40xf32>
    %c168 = arith.constant 168 : index
    %c0_54 = arith.constant 0 : index
    %167 = vector.load %arg1[%c168, %c0_54] : memref<272x128xf32, #tpu.memory_space<vmem>>, vector<1x40xf32>
    %c176 = arith.constant 176 : index
    %c0_55 = arith.constant 0 : index
    %168 = vector.load %arg1[%c176, %c0_55] : memref<272x128xf32, #tpu.memory_space<vmem>>, vector<1x40xf32>
    %cst_56 = arith.constant dense<0.000000e+00> : vector<16xf32>
    %169 = vector.multi_reduction <add>, %166, %cst_56 [1] : vector<16x40xf32> to vector<16xf32>
    %170 = vector.shape_cast %169 : vector<16xf32> to vector<16x1xf32>
    %cst_57 = arith.constant 4.000000e+01 : f32
    %171 = vector.broadcast %cst_57 : f32 to vector<16x1xf32>
    %172 = arith.divf %170, %171 : vector<16x1xf32>
    %173 = vector.broadcast %172 : vector<16x1xf32> to vector<16x40xf32>
    %174 = arith.subf %166, %173 : vector<16x40xf32>
    %175 = arith.mulf %174, %174 : vector<16x40xf32>
    %cst_58 = arith.constant dense<0.000000e+00> : vector<16xf32>
    %176 = vector.multi_reduction <add>, %175, %cst_58 [1] : vector<16x40xf32> to vector<16xf32>
    %177 = vector.shape_cast %176 : vector<16xf32> to vector<16x1xf32>
    %cst_59 = arith.constant 4.000000e+01 : f32
    %178 = vector.broadcast %cst_59 : f32 to vector<16x1xf32>
    %179 = arith.divf %177, %178 : vector<16x1xf32>
    %180 = vector.broadcast %172 : vector<16x1xf32> to vector<16x40xf32>
    %181 = arith.subf %166, %180 : vector<16x40xf32>
    %cst_60 = arith.constant 9.99999974E-6 : f32
    %182 = vector.broadcast %cst_60 : f32 to vector<16x1xf32>
    %183 = arith.addf %179, %182 : vector<16x1xf32>
    %184 = math.rsqrt %183 : vector<16x1xf32>
    %185 = vector.broadcast %184 : vector<16x1xf32> to vector<16x40xf32>
    %186 = arith.mulf %181, %185 : vector<16x40xf32>
    %187 = vector.broadcast %167 : vector<1x40xf32> to vector<16x40xf32>
    %188 = arith.mulf %186, %187 : vector<16x40xf32>
    %189 = vector.broadcast %168 : vector<1x40xf32> to vector<16x40xf32>
    %190 = arith.addf %188, %189 : vector<16x40xf32>
    %191 = vector.extract_strided_slice %190 {offsets = [0, 0], sizes = [8, 40], strides = [1, 1]} : vector<16x40xf32> to vector<8x40xf32>
    %cst_61 = arith.constant dense<0.000000e+00> : vector<40xf32>
    %192 = vector.multi_reduction <add>, %191, %cst_61 [0] : vector<8x40xf32> to vector<40xf32>
    %193 = vector.shape_cast %192 : vector<40xf32> to vector<1x40xf32>
    %cst_62 = arith.constant 8.000000e+00 : f32
    %194 = vector.broadcast %cst_62 : f32 to vector<1x40xf32>
    %195 = arith.divf %193, %194 : vector<1x40xf32>
    %196 = vector.extract_strided_slice %190 {offsets = [8, 0], sizes = [8, 40], strides = [1, 1]} : vector<16x40xf32> to vector<8x40xf32>
    %cst_63 = arith.constant dense<0.000000e+00> : vector<40xf32>
    %197 = vector.multi_reduction <add>, %196, %cst_63 [0] : vector<8x40xf32> to vector<40xf32>
    %198 = vector.shape_cast %197 : vector<40xf32> to vector<1x40xf32>
    %cst_64 = arith.constant 8.000000e+00 : f32
    %199 = vector.broadcast %cst_64 : f32 to vector<1x40xf32>
    %200 = arith.divf %198, %199 : vector<1x40xf32>
    %201 = tpu.concatenate %195, %200 in 0 : vector<1x40xf32>, vector<1x40xf32> -> vector<2x40xf32>
    %c184 = arith.constant 184 : index
    %c0_65 = arith.constant 0 : index
    %202 = vector.load %arg1[%c184, %c0_65] : memref<272x128xf32, #tpu.memory_space<vmem>>, vector<40x32xf32>
    %cst_66 = arith.constant dense<0.000000e+00> : vector<2x32xf32>
    %203 = tpu.matmul %201, %202, %cst_66 {dimension_numbers = #tpu.dot_dimension_numbers<[1], [0], [0], [1], [0, 0, 1, 1], [], []>} : vector<2x40xf32>, vector<40x32xf32>, vector<2x32xf32> -> vector<2x32xf32>
    %c224 = arith.constant 224 : index
    %c0_67 = arith.constant 0 : index
    %204 = vector.load %arg1[%c224, %c0_67] : memref<272x128xf32, #tpu.memory_space<vmem>>, vector<1x32xf32>
    %205 = vector.broadcast %204 : vector<1x32xf32> to vector<2x32xf32>
    %206 = arith.addf %203, %205 : vector<2x32xf32>
    %cst_68 = arith.constant 0.000000e+00 : f32
    %207 = vector.broadcast %cst_68 : f32 to vector<2x32xf32>
    %208 = arith.maximumf %206, %207 : vector<2x32xf32>
    %c232 = arith.constant 232 : index
    %c0_69 = arith.constant 0 : index
    %209 = vector.load %arg1[%c232, %c0_69] : memref<272x128xf32, #tpu.memory_space<vmem>>, vector<32x10xf32>
    %cst_70 = arith.constant dense<0.000000e+00> : vector<2x10xf32>
    %210 = tpu.matmul %208, %209, %cst_70 {dimension_numbers = #tpu.dot_dimension_numbers<[1], [0], [0], [1], [0, 0, 1, 1], [], []>} : vector<2x32xf32>, vector<32x10xf32>, vector<2x10xf32> -> vector<2x10xf32>
    %c264 = arith.constant 264 : index
    %c0_71 = arith.constant 0 : index
    %211 = vector.load %arg1[%c264, %c0_71] : memref<272x128xf32, #tpu.memory_space<vmem>>, vector<1x10xf32>
    %212 = vector.broadcast %211 : vector<1x10xf32> to vector<2x10xf32>
    %213 = arith.addf %210, %212 : vector<2x10xf32>
    %cst_72 = arith.constant dense<0xFF800000> : vector<2xf32>
    %214 = vector.multi_reduction <maximumf>, %213, %cst_72 [1] : vector<2x10xf32> to vector<2xf32>
    %215 = vector.shape_cast %214 : vector<2xf32> to vector<2x1xf32>
    %216 = vector.broadcast %215 : vector<2x1xf32> to vector<2x10xf32>
    %217 = arith.subf %213, %216 : vector<2x10xf32>
    %218 = math.exp %217 : vector<2x10xf32>
    %cst_73 = arith.constant dense<0.000000e+00> : vector<2xf32>
    %219 = vector.multi_reduction <add>, %218, %cst_73 [1] : vector<2x10xf32> to vector<2xf32>
    %220 = vector.shape_cast %219 : vector<2xf32> to vector<2x1xf32>
    %221 = vector.broadcast %220 : vector<2x1xf32> to vector<2x10xf32>
    %222 = arith.divf %218, %221 : vector<2x10xf32>
    %c0_74 = arith.constant 0 : index
    %c0_75 = arith.constant 0 : index
    %223 = vector.load %arg5[%c0_74, %c0_75] : memref<2x10xf32, #tpu.memory_space<vmem>>, vector<2x10xf32>
    tpu.vector_store %arg5[%c0_74, %c0_75], %222 {strides = array<i32>} : memref<2x10xf32, #tpu.memory_space<vmem>>, vector<2x10xf32>,
    return
  }
}

</mosaic_0001>

<llo_original>
// kernel: trans_tc_forward.1
$region0: #{trans_tc_forward.1}
  #allocation0 [shape = 'u32[]', space=smem, size = 0x4, offset = 0x4, fixed_abs, tag = 'smem constant byte address 0x4 - core index']
  #allocation1 [shape = 'u32[144,128]{1,0:T(1,128)}', space=vmem, size = 0x12000, scoped, tag = 'internal scratch']
  #allocation2 [shape = 'bf16[40,2048]{1,0:T(8,128)(2,1)}', space=vmem, size = 0x28000, scoped, tag = 'scratch operand']
  #allocation3 [shape = 'bf16[2048,40]{1,0:T(16,128)(2,1)}', space=vmem, size = 0x80000, scoped, tag = 'scratch operand']
  #allocation4 [shape = 's32[2]{0}', space=sflag, size = 0x8, scoped, tag = 'scratch operand']
  #allocation7 [shape = 's32[]', space=sflag, size = 0x4, offset = 0, fixed_abs, tag = 'sflag constant byte address 0x0 - dummy sync flag']
  #allocation8 [shape = 's32[]', space=sflag, size = 0x4, offset = 0, fixed_abs, tag = 'sflag constant byte address 0x0 - dummy sync flag']
  %s0 = inlined_call_operand.vmem [shape: f32[16,2], index: 0, kind: input, shape index: {}]
  %s1 = inlined_call_operand.vmem [shape: f32[272,128], index: 1, kind: input, shape index: {}]
  %s2 = inlined_call_operand.vmem [shape: f32[1,2048], index: 2, kind: input, shape index: {}]
  %s3 = inlined_call_operand.vmem [shape: bf16[40,2048], index: 3, kind: input, shape index: {}]
  %s4 = inlined_call_operand.vmem [shape: bf16[2048,40], index: 4, kind: input, shape index: {}]
  %s5 = inlined_call_operand.hbm [shape: f32[2,10], index: 5, kind: output, shape index: {}]
  %s6 = sld [smem:[#allocation0]]
  $region90: #{trans_tc_forward.1} parent=0
    _
  %s8 = ssub.s32 1, %s6
  %s9 = scalar_select 0, %s8, %s6
  $region1: #{trans_tc_forward.1} parent=0
    #allocation5 [shape = 'u8[1024]{0}', space=vmem, size = 0x400, scoped, tag = 'output window, operand 0, single buffered']
    #allocation6 [shape = 's32[1]{0}', space=sflag, size = 0x4, scoped, tag = 'scoped memory for trans_tc_forward.1']
    %10 = vsyncpa [#allocation6], 0
    // Predicated region
    $region2: #{trans_tc_forward.1} parent=1 // pred_check
      _
    $region3: #{trans_tc_forward.1} parent=1 // pred_check_branch
      %12 = sbr.rel (0) target = $region5
    $region4: #{trans_tc_forward.1} parent=1 // pred_region
      _
    $region5: #{trans_tc_forward.1} parent=1 // pred_fallthru
      _
    // Predicated region
    $region6: #{trans_tc_forward.1} parent=1 // pred_check
      _
    $region7: #{trans_tc_forward.1} parent=1 // pred_check_branch
      %14 = sbr.rel (0) target = $region9
    $region8: #{trans_tc_forward.1} parent=1 // pred_region
      _
    $region9: #{trans_tc_forward.1} parent=1 // pred_fallthru
      _
    // Predicated region
    $region10: #{trans_tc_forward.1} parent=1 // pred_check
      _
    $region11: #{trans_tc_forward.1} parent=1 // pred_check_branch
      %16 = sbr.rel (0) target = $region13
    $region12: #{trans_tc_forward.1} parent=1 // pred_region
      _
    $region13: #{trans_tc_forward.1} parent=1 // pred_fallthru
      _
    %p19 = scmp.lt.u32.totalorder 320, 8
    %p20 = pneg %p19
    // Predicated region
    $region14: #{trans_tc_forward.1} parent=1 // pred_check
      _
    $region15: #{trans_tc_forward.1} parent=1 // pred_check_branch
      %22 = sbr.rel (%p19) target = $region17
    $region16: #{trans_tc_forward.1} parent=1 // pred_region
      %s37 = sand.u32 320, 7
      %p38 = scmp.eq.s32.totalorder %s37, 0
      // Predicated region
      $region29: #{trans_tc_forward.1} parent=16 // pred_check
        %p39 = pneg %p38
      $region30: #{trans_tc_forward.1} parent=16 // pred_check_branch
        %41 = sbr.rel (%p39) target = $region32
      $region31: #{trans_tc_forward.1} parent=16 // pred_region
        loop: start=0, step=1, limit=1
        $region33: #{trans_tc_forward.1} parent=31 // loop_pre_header
          _
        $region34: #{trans_tc_forward.1} parent=31 // loop_header
          %s43 = sphi 0, %s47
          %p44 = scmp.ge.s32.totalorder %s43, 1
          %s48 = sphi %s3, %s3
          %s49 = sphi [#allocation2], [#allocation2]
        $region35: #{trans_tc_forward.1} parent=31 // loop_header_branch
          %46 = sbr.rel (%p44) target = $region39
        $region36: #{trans_tc_forward.1} parent=31 // loop_body
          %v50 = vld [vmem:[%s48] sm:$0xff]
          %51 = vst [vmem:[%s49] sm:$0xff] %v50
          %v52 = vld [vmem:[%s48 + $0x8] sm:$0xff]
          %53 = vst [vmem:[%s49 + $0x8] sm:$0xff] %v52
          %v54 = vld [vmem:[%s48 + $0x10] sm:$0xff]
          %55 = vst [vmem:[%s49 + $0x10] sm:$0xff] %v54
          %v56 = vld [vmem:[%s48 + $0x18] sm:$0xff]
          %57 = vst [vmem:[%s49 + $0x18] sm:$0xff] %v56
          %v58 = vld [vmem:[%s48 + $0x20] sm:$0xff]
          %59 = vst [vmem:[%s49 + $0x20] sm:$0xff] %v58
          %v60 = vld [vmem:[%s48 + $0x28] sm:$0xff]
          %61 = vst [vmem:[%s49 + $0x28] sm:$0xff] %v60
          %v62 = vld [vmem:[%s48 + $0x30] sm:$0xff]
          %63 = vst [vmem:[%s49 + $0x30] sm:$0xff] %v62
          %v64 = vld [vmem:[%s48 + $0x38] sm:$0xff]
          %65 = vst [vmem:[%s49 + $0x38] sm:$0xff] %v64
          %v66 = vld [vmem:[%s48 + $0x40] sm:$0xff]
          %67 = vst [vmem:[%s49 + $0x40] sm:$0xff] %v66
          %v68 = vld [vmem:[%s48 + $0x48] sm:$0xff]
          %69 = vst [vmem:[%s49 + $0x48] sm:$0xff] %v68
          %v70 = vld [vmem:[%s48 + $0x50] sm:$0xff]
          %71 = vst [vmem:[%s49 + $0x50] sm:$0xff] %v70
          %v72 = vld [vmem:[%s48 + $0x58] sm:$0xff]
          %73 = vst [vmem:[%s49 + $0x58] sm:$0xff] %v72
          %v74 = vld [vmem:[%s48 + $0x60] sm:$0xff]
          %75 = vst [vmem:[%s49 + $0x60] sm:$0xff] %v74
          %v76 = vld [vmem:[%s48 + $0x68] sm:$0xff]
          %77 = vst [vmem:[%s49 + $0x68] sm:$0xff] %v76
          %v78 = vld [vmem:[%s48 + $0x70] sm:$0xff]
          %79 = vst [vmem:[%s49 + $0x70] sm:$0xff] %v78
          %v80 = vld [vmem:[%s48 + $0x78] sm:$0xff]
          %81 = vst [vmem:[%s49 + $0x78] sm:$0xff] %v80
          %v82 = vld [vmem:[%s48 + $0x80] sm:$0xff]
          %83 = vst [vmem:[%s49 + $0x80] sm:$0xff] %v82
          %v84 = vld [vmem:[%s48 + $0x88] sm:$0xff]
          %85 = vst [vmem:[%s49 + $0x88] sm:$0xff] %v84
          %v86 = vld [vmem:[%s48 + $0x90] sm:$0xff]
          %87 = vst [vmem:[%s49 + $0x90] sm:$0xff] %v86
          %v88 = vld [vmem:[%s48 + $0x98] sm:$0xff]
          %89 = vst [vmem:[%s49 + $0x98] sm:$0xff] %v88
          %v90 = vld [vmem:[%s48 + $0xa0] sm:$0xff]
          %91 = vst [vmem:[%s49 + $0xa0] sm:$0xff] %v90
          %v92 = vld [vmem:[%s48 + $0xa8] sm:$0xff]
          %93 = vst [vmem:[%s49 + $0xa8] sm:$0xff] %v92
          %v94 = vld [vmem:[%s48 + $0xb0] sm:$0xff]
          %95 = vst [vmem:[%s49 + $0xb0] sm:$0xff] %v94
          %v96 = vld [vmem:[%s48 + $0xb8] sm:$0xff]
          %97 = vst [vmem:[%s49 + $0xb8] sm:$0xff] %v96
          %v98 = vld [vmem:[%s48 + $0xc0] sm:$0xff]
          %99 = vst [vmem:[%s49 + $0xc0] sm:$0xff] %v98
          %v100 = vld [vmem:[%s48 + $0xc8] sm:$0xff]
          %101 = vst [vmem:[%s49 + $0xc8] sm:$0xff] %v100
          %v102 = vld [vmem:[%s48 + $0xd0] sm:$0xff]
          %103 = vst [vmem:[%s49 + $0xd0] sm:$0xff] %v102
          %v104 = vld [vmem:[%s48 + $0xd8] sm:$0xff]
          %105 = vst [vmem:[%s49 + $0xd8] sm:$0xff] %v104
          %v106 = vld [vmem:[%s48 + $0xe0] sm:$0xff]
          %107 = vst [vmem:[%s49 + $0xe0] sm:$0xff] %v106
          %v108 = vld [vmem:[%s48 + $0xe8] sm:$0xff]
          %109 = vst [vmem:[%s49 + $0xe8] sm:$0xff] %v108
          %v110 = vld [vmem:[%s48 + $0xf0] sm:$0xff]
          %111 = vst [vmem:[%s49 + $0xf0] sm:$0xff] %v110
          %v112 = vld [vmem:[%s48 + $0xf8] sm:$0xff]
          %113 = vst [vmem:[%s49 + $0xf8] sm:$0xff] %v112
          %v114 = vld [vmem:[%s48 + $0x100] sm:$0xff]
          %115 = vst [vmem:[%s49 + $0x100] sm:$0xff] %v114
          %v116 = vld [vmem:[%s48 + $0x108] sm:$0xff]
          %117 = vst [vmem:[%s49 + $0x108] sm:$0xff] %v116
          %v118 = vld [vmem:[%s48 + $0x110] sm:$0xff]
          %119 = vst [vmem:[%s49 + $0x110] sm:$0xff] %v118
          %v120 = vld [vmem:[%s48 + $0x118] sm:$0xff]
          %121 = vst [vmem:[%s49 + $0x118] sm:$0xff] %v120
          %v122 = vld [vmem:[%s48 + $0x120] sm:$0xff]
          %123 = vst [vmem:[%s49 + $0x120] sm:$0xff] %v122
          %v124 = vld [vmem:[%s48 + $0x128] sm:$0xff]
          %125 = vst [vmem:[%s49 + $0x128] sm:$0xff] %v124
          %v126 = vld [vmem:[%s48 + $0x130] sm:$0xff]
          %127 = vst [vmem:[%s49 + $0x130] sm:$0xff] %v126
          %v128 = vld [vmem:[%s48 + $0x138] sm:$0xff]
          %129 = vst [vmem:[%s49 + $0x138] sm:$0xff] %v128
        $region37: #{trans_tc_forward.1} parent=31 // loop_footer
          %s47 = sadd.s32 1, %s43
        $region38: #{trans_tc_forward.1} parent=31 // loop_footer_branch
          %42 = sbr.rel target = $region34
        $region39: #{trans_tc_forward.1} parent=31 // loop_exit
          _
      $region32: #{trans_tc_forward.1} parent=16 // pred_fallthru
        _
      %p130 = pneg %p38
      // Predicated region
      $region40: #{trans_tc_forward.1} parent=16 // pred_check
        _
      $region41: #{trans_tc_forward.1} parent=16 // pred_check_branch
        %132 = sbr.rel (%p38) target = $region43
      $region42: #{trans_tc_forward.1} parent=16 // pred_region
        %s133 = sand.u32 320, 7
      $region43: #{trans_tc_forward.1} parent=16 // pred_fallthru
        _
    $region17: #{trans_tc_forward.1} parent=1 // pred_fallthru
      _
    // Predicated region
    $region18: #{trans_tc_forward.1} parent=1 // pred_check
      %p23 = pneg %p19
    $region19: #{trans_tc_forward.1} parent=1 // pred_check_branch
      %25 = sbr.rel (%p23) target = $region21
    $region20: #{trans_tc_forward.1} parent=1 // pred_region
      %s26 = sshllo.u32 0, 320
      loop: start=0, step=1, limit=1
      $region22: #{trans_tc_forward.1} parent=20 // loop_pre_header
        _
      $region23: #{trans_tc_forward.1} parent=20 // loop_header
        %s28 = sphi 0, %s32
        %p29 = scmp.ge.s32.totalorder %s28, 1
        %s33 = sphi %s3, %s3
        %s34 = sphi [#allocation2], [#allocation2]
      $region24: #{trans_tc_forward.1} parent=20 // loop_header_branch
        %31 = sbr.rel (%p29) target = $region28
      $region25: #{trans_tc_forward.1} parent=20 // loop_body
        %v35 = vld [vmem:[%s33] sm:%s26]
        %36 = vst [vmem:[%s34] sm:%s26] %v35
      $region26: #{trans_tc_forward.1} parent=20 // loop_footer
        %s32 = sadd.s32 1, %s28
      $region27: #{trans_tc_forward.1} parent=20 // loop_footer_branch
        %27 = sbr.rel target = $region23
      $region28: #{trans_tc_forward.1} parent=20 // loop_exit
        _
    $region21: #{trans_tc_forward.1} parent=1 // pred_fallthru
      _
    // Predicated region
    $region44: #{trans_tc_forward.1} parent=1 // pred_check
      _
    $region45: #{trans_tc_forward.1} parent=1 // pred_check_branch
      %136 = sbr.rel (0) target = $region47
    $region46: #{trans_tc_forward.1} parent=1 // pred_region
      %137 = vsyncadd [#allocation4], 5120
    $region47: #{trans_tc_forward.1} parent=1 // pred_fallthru
      _
    %s138 = scalar_lea.sflag [#allocation4], 1
    %p140 = scmp.lt.u32.totalorder 1024, 8
    %p141 = pneg %p140
    // Predicated region
    $region48: #{trans_tc_forward.1} parent=1 // pred_check
      _
    $region49: #{trans_tc_forward.1} parent=1 // pred_check_branch
      %143 = sbr.rel (%p140) target = $region51
    $region50: #{trans_tc_forward.1} parent=1 // pred_region
      %s158 = sand.u32 1024, 7
      %p159 = scmp.eq.s32.totalorder %s158, 0
      // Predicated region
      $region63: #{trans_tc_forward.1} parent=50 // pred_check
        %p160 = pneg %p159
      $region64: #{trans_tc_forward.1} parent=50 // pred_check_branch
        %162 = sbr.rel (%p160) target = $region66
      $region65: #{trans_tc_forward.1} parent=50 // pred_region
        loop: start=0, step=1, limit=1
        $region67: #{trans_tc_forward.1} parent=65 // loop_pre_header
          _
        $region68: #{trans_tc_forward.1} parent=65 // loop_header
          %s164 = sphi 0, %s168
          %p165 = scmp.ge.s32.totalorder %s164, 1
          %s169 = sphi %s4, %s4
          %s170 = sphi [#allocation3], [#allocation3]
        $region69: #{trans_tc_forward.1} parent=65 // loop_header_branch
          %167 = sbr.rel (%p165) target = $region73
        $region70: #{trans_tc_forward.1} parent=65 // loop_body
          %v171 = vld [vmem:[%s169] sm:$0xff]
          %172 = vst [vmem:[%s170] sm:$0xff] %v171
          %v173 = vld [vmem:[%s169 + $0x8] sm:$0xff]
          %174 = vst [vmem:[%s170 + $0x8] sm:$0xff] %v173
          %v175 = vld [vmem:[%s169 + $0x10] sm:$0xff]
          %176 = vst [vmem:[%s170 + $0x10] sm:$0xff] %v175
          %v177 = vld [vmem:[%s169 + $0x18] sm:$0xff]
          %178 = vst [vmem:[%s170 + $0x18] sm:$0xff] %v177
          %v179 = vld [vmem:[%s169 + $0x20] sm:$0xff]
          %180 = vst [vmem:[%s170 + $0x20] sm:$0xff] %v179
          %v181 = vld [vmem:[%s169 + $0x28] sm:$0xff]
          %182 = vst [vmem:[%s170 + $0x28] sm:$0xff] %v181
          %v183 = vld [vmem:[%s169 + $0x30] sm:$0xff]
          %184 = vst [vmem:[%s170 + $0x30] sm:$0xff] %v183
          %v185 = vld [vmem:[%s169 + $0x38] sm:$0xff]
          %186 = vst [vmem:[%s170 + $0x38] sm:$0xff] %v185
          %v187 = vld [vmem:[%s169 + $0x40] sm:$0xff]
          %188 = vst [vmem:[%s170 + $0x40] sm:$0xff] %v187
          %v189 = vld [vmem:[%s169 + $0x48] sm:$0xff]
          %190 = vst [vmem:[%s170 + $0x48] sm:$0xff] %v189
          %v191 = vld [vmem:[%s169 + $0x50] sm:$0xff]
          %192 = vst [vmem:[%s170 + $0x50] sm:$0xff] %v191
          %v193 = vld [vmem:[%s169 + $0x58] sm:$0xff]
          %194 = vst [vmem:[%s170 + $0x58] sm:$0xff] %v193
          %v195 = vld [vmem:[%s169 + $0x60] sm:$0xff]
          %196 = vst [vmem:[%s170 + $0x60] sm:$0xff] %v195
          %v197 = vld [vmem:[%s169 + $0x68] sm:$0xff]
          %198 = vst [vmem:[%s170 + $0x68] sm:$0xff] %v197
          %v199 = vld [vmem:[%s169 + $0x70] sm:$0xff]
          %200 = vst [vmem:[%s170 + $0x70] sm:$0xff] %v199
          %v201 = vld [vmem:[%s169 + $0x78] sm:$0xff]
          %202 = vst [vmem:[%s170 + $0x78] sm:$0xff] %v201
          %v203 = vld [vmem:[%s169 + $0x80] sm:$0xff]
          %204 = vst [vmem:[%s170 + $0x80] sm:$0xff] %v203
          %v205 = vld [vmem:[%s169 + $0x88] sm:$0xff]
          %206 = vst [vmem:[%s170 + $0x88] sm:$0xff] %v205
          %v207 = vld [vmem:[%s169 + $0x90] sm:$0xff]
          %208 = vst [vmem:[%s170 + $0x90] sm:$0xff] %v207
          %v209 = vld [vmem:[%s169 + $0x98] sm:$0xff]
          %210 = vst [vmem:[%s170 + $0x98] sm:$0xff] %v209
          %v211 = vld [vmem:[%s169 + $0xa0] sm:$0xff]
          %212 = vst [vmem:[%s170 + $0xa0] sm:$0xff] %v211
          %v213 = vld [vmem:[%s169 + $0xa8] sm:$0xff]
          %214 = vst [vmem:[%s170 + $0xa8] sm:$0xff] %v213
          %v215 = vld [vmem:[%s169 + $0xb0] sm:$0xff]
          %216 = vst [vmem:[%s170 + $0xb0] sm:$0xff] %v215
          %v217 = vld [vmem:[%s169 + $0xb8] sm:$0xff]
          %218 = vst [vmem:[%s170 + $0xb8] sm:$0xff] %v217
          %v219 = vld [vmem:[%s169 + $0xc0] sm:$0xff]
          %220 = vst [vmem:[%s170 + $0xc0] sm:$0xff] %v219
          %v221 = vld [vmem:[%s169 + $0xc8] sm:$0xff]
          %222 = vst [vmem:[%s170 + $0xc8] sm:$0xff] %v221
          %v223 = vld [vmem:[%s169 + $0xd0] sm:$0xff]
          %224 = vst [vmem:[%s170 + $0xd0] sm:$0xff] %v223
          %v225 = vld [vmem:[%s169 + $0xd8] sm:$0xff]
          %226 = vst [vmem:[%s170 + $0xd8] sm:$0xff] %v225
          %v227 = vld [vmem:[%s169 + $0xe0] sm:$0xff]
          %228 = vst [vmem:[%s170 + $0xe0] sm:$0xff] %v227
          %v229 = vld [vmem:[%s169 + $0xe8] sm:$0xff]
          %230 = vst [vmem:[%s170 + $0xe8] sm:$0xff] %v229
          %v231 = vld [vmem:[%s169 + $0xf0] sm:$0xff]
          %232 = vst [vmem:[%s170 + $0xf0] sm:$0xff] %v231
          %v233 = vld [vmem:[%s169 + $0xf8] sm:$0xff]
          %234 = vst [vmem:[%s170 + $0xf8] sm:$0xff] %v233
          %v235 = vld [vmem:[%s169 + $0x100] sm:$0xff]
          %236 = vst [vmem:[%s170 + $0x100] sm:$0xff] %v235
          %v237 = vld [vmem:[%s169 + $0x108] sm:$0xff]
          %238 = vst [vmem:[%s170 + $0x108] sm:$0xff] %v237
          %v239 = vld [vmem:[%s169 + $0x110] sm:$0xff]
          %240 = vst [vmem:[%s170 + $0x110] sm:$0xff] %v239
          %v241 = vld [vmem:[%s169 + $0x118] sm:$0xff]
          %242 = vst [vmem:[%s170 + $0x118] sm:$0xff] %v241
          %v243 = vld [vmem:[%s169 + $0x120] sm:$0xff]
          %244 = vst [vmem:[%s170 + $0x120] sm:$0xff] %v243
          %v245 = vld [vmem:[%s169 + $0x128] sm:$0xff]
          %246 = vst [vmem:[%s170 + $0x128] sm:$0xff] %v245
          %v247 = vld [vmem:[%s169 + $0x130] sm:$0xff]
          %248 = vst [vmem:[%s170 + $0x130] sm:$0xff] %v247
          %v249 = vld [vmem:[%s169 + $0x138] sm:$0xff]
          %250 = vst [vmem:[%s170 + $0x138] sm:$0xff] %v249
          %v251 = vld [vmem:[%s169 + $0x140] sm:$0xff]
          %252 = vst [vmem:[%s170 + $0x140] sm:$0xff] %v251
          %v253 = vld [vmem:[%s169 + $0x148] sm:$0xff]
          %254 = vst [vmem:[%s170 + $0x148] sm:$0xff] %v253
          %v255 = vld [vmem:[%s169 + $0x150] sm:$0xff]
          %256 = vst [vmem:[%s170 + $0x150] sm:$0xff] %v255
          %v257 = vld [vmem:[%s169 + $0x158] sm:$0xff]
          %258 = vst [vmem:[%s170 + $0x158] sm:$0xff] %v257
          %v259 = vld [vmem:[%s169 + $0x160] sm:$0xff]
          %260 = vst [vmem:[%s170 + $0x160] sm:$0xff] %v259
          %v261 = vld [vmem:[%s169 + $0x168] sm:$0xff]
          %262 = vst [vmem:[%s170 + $0x168] sm:$0xff] %v261
          %v263 = vld [vmem:[%s169 + $0x170] sm:$0xff]
          %264 = vst [vmem:[%s170 + $0x170] sm:$0xff] %v263
          %v265 = vld [vmem:[%s169 + $0x178] sm:$0xff]
          %266 = vst [vmem:[%s170 + $0x178] sm:$0xff] %v265
          %v267 = vld [vmem:[%s169 + $0x180] sm:$0xff]
          %268 = vst [vmem:[%s170 + $0x180] sm:$0xff] %v267
          %v269 = vld [vmem:[%s169 + $0x188] sm:$0xff]
          %270 = vst [vmem:[%s170 + $0x188] sm:$0xff] %v269
          %v271 = vld [vmem:[%s169 + $0x190] sm:$0xff]
          %272 = vst [vmem:[%s170 + $0x190] sm:$0xff] %v271
          %v273 = vld [vmem:[%s169 + $0x198] sm:$0xff]
          %274 = vst [vmem:[%s170 + $0x198] sm:$0xff] %v273
          %v275 = vld [vmem:[%s169 + $0x1a0] sm:$0xff]
          %276 = vst [vmem:[%s170 + $0x1a0] sm:$0xff] %v275
          %v277 = vld [vmem:[%s169 + $0x1a8] sm:$0xff]
          %278 = vst [vmem:[%s170 + $0x1a8] sm:$0xff] %v277
          %v279 = vld [vmem:[%s169 + $0x1b0] sm:$0xff]
          %280 = vst [vmem:[%s170 + $0x1b0] sm:$0xff] %v279
          %v281 = vld [vmem:[%s169 + $0x1b8] sm:$0xff]
          %282 = vst [vmem:[%s170 + $0x1b8] sm:$0xff] %v281
          %v283 = vld [vmem:[%s169 + $0x1c0] sm:$0xff]
          %284 = vst [vmem:[%s170 + $0x1c0] sm:$0xff] %v283
          %v285 = vld [vmem:[%s169 + $0x1c8] sm:$0xff]
          %286 = vst [vmem:[%s170 + $0x1c8] sm:$0xff] %v285
          %v287 = vld [vmem:[%s169 + $0x1d0] sm:$0xff]
          %288 = vst [vmem:[%s170 + $0x1d0] sm:$0xff] %v287
          %v289 = vld [vmem:[%s169 + $0x1d8] sm:$0xff]
          %290 = vst [vmem:[%s170 + $0x1d8] sm:$0xff] %v289
          %v291 = vld [vmem:[%s169 + $0x1e0] sm:$0xff]
          %292 = vst [vmem:[%s170 + $0x1e0] sm:$0xff] %v291
          %v293 = vld [vmem:[%s169 + $0x1e8] sm:$0xff]
          %294 = vst [vmem:[%s170 + $0x1e8] sm:$0xff] %v293
          %v295 = vld [vmem:[%s169 + $0x1f0] sm:$0xff]
          %296 = vst [vmem:[%s170 + $0x1f0] sm:$0xff] %v295
          %v297 = vld [vmem:[%s169 + $0x1f8] sm:$0xff]
          %298 = vst [vmem:[%s170 + $0x1f8] sm:$0xff] %v297
          %v299 = vld [vmem:[%s169 + $0x200] sm:$0xff]
          %300 = vst [vmem:[%s170 + $0x200] sm:$0xff] %v299
          %v301 = vld [vmem:[%s169 + $0x208] sm:$0xff]
          %302 = vst [vmem:[%s170 + $0x208] sm:$0xff] %v301
          %v303 = vld [vmem:[%s169 + $0x210] sm:$0xff]
          %304 = vst [vmem:[%s170 + $0x210] sm:$0xff] %v303
          %v305 = vld [vmem:[%s169 + $0x218] sm:$0xff]
          %306 = vst [vmem:[%s170 + $0x218] sm:$0xff] %v305
          %v307 = vld [vmem:[%s169 + $0x220] sm:$0xff]
          %308 = vst [vmem:[%s170 + $0x220] sm:$0xff] %v307
          %v309 = vld [vmem:[%s169 + $0x228] sm:$0xff]
          %310 = vst [vmem:[%s170 + $0x228] sm:$0xff] %v309
          %v311 = vld [vmem:[%s169 + $0x230] sm:$0xff]
          %312 = vst [vmem:[%s170 + $0x230] sm:$0xff] %v311
          %v313 = vld [vmem:[%s169 + $0x238] sm:$0xff]
          %314 = vst [vmem:[%s170 + $0x238] sm:$0xff] %v313
          %v315 = vld [vmem:[%s169 + $0x240] sm:$0xff]
          %316 = vst [vmem:[%s170 + $0x240] sm:$0xff] %v315
          %v317 = vld [vmem:[%s169 + $0x248] sm:$0xff]
          %318 = vst [vmem:[%s170 + $0x248] sm:$0xff] %v317
          %v319 = vld [vmem:[%s169 + $0x250] sm:$0xff]
          %320 = vst [vmem:[%s170 + $0x250] sm:$0xff] %v319
          %v321 = vld [vmem:[%s169 + $0x258] sm:$0xff]
          %322 = vst [vmem:[%s170 + $0x258] sm:$0xff] %v321
          %v323 = vld [vmem:[%s169 + $0x260] sm:$0xff]
          %324 = vst [vmem:[%s170 + $0x260] sm:$0xff] %v323
          %v325 = vld [vmem:[%s169 + $0x268] sm:$0xff]
          %326 = vst [vmem:[%s170 + $0x268] sm:$0xff] %v325
          %v327 = vld [vmem:[%s169 + $0x270] sm:$0xff]
          %328 = vst [vmem:[%s170 + $0x270] sm:$0xff] %v327
          %v329 = vld [vmem:[%s169 + $0x278] sm:$0xff]
          %330 = vst [vmem:[%s170 + $0x278] sm:$0xff] %v329
          %v331 = vld [vmem:[%s169 + $0x280] sm:$0xff]
          %332 = vst [vmem:[%s170 + $0x280] sm:$0xff] %v331
          %v333 = vld [vmem:[%s169 + $0x288] sm:$0xff]
          %334 = vst [vmem:[%s170 + $0x288] sm:$0xff] %v333
          %v335 = vld [vmem:[%s169 + $0x290] sm:$0xff]
          %336 = vst [vmem:[%s170 + $0x290] sm:$0xff] %v335
          %v337 = vld [vmem:[%s169 + $0x298] sm:$0xff]
          %338 = vst [vmem:[%s170 + $0x298] sm:$0xff] %v337
          %v339 = vld [vmem:[%s169 + $0x2a0] sm:$0xff]
          %340 = vst [vmem:[%s170 + $0x2a0] sm:$0xff] %v339
          %v341 = vld [vmem:[%s169 + $0x2a8] sm:$0xff]
          %342 = vst [vmem:[%s170 + $0x2a8] sm:$0xff] %v341
          %v343 = vld [vmem:[%s169 + $0x2b0] sm:$0xff]
          %344 = vst [vmem:[%s170 + $0x2b0] sm:$0xff] %v343
          %v345 = vld [vmem:[%s169 + $0x2b8] sm:$0xff]
          %346 = vst [vmem:[%s170 + $0x2b8] sm:$0xff] %v345
          %v347 = vld [vmem:[%s169 + $0x2c0] sm:$0xff]
          %348 = vst [vmem:[%s170 + $0x2c0] sm:$0xff] %v347
          %v349 = vld [vmem:[%s169 + $0x2c8] sm:$0xff]
          %350 = vst [vmem:[%s170 + $0x2c8] sm:$0xff] %v349
          %v351 = vld [vmem:[%s169 + $0x2d0] sm:$0xff]
          %352 = vst [vmem:[%s170 + $0x2d0] sm:$0xff] %v351
          %v353 = vld [vmem:[%s169 + $0x2d8] sm:$0xff]
          %354 = vst [vmem:[%s170 + $0x2d8] sm:$0xff] %v353
          %v355 = vld [vmem:[%s169 + $0x2e0] sm:$0xff]
          %356 = vst [vmem:[%s170 + $0x2e0] sm:$0xff] %v355
          %v357 = vld [vmem:[%s169 + $0x2e8] sm:$0xff]
          %358 = vst [vmem:[%s170 + $0x2e8] sm:$0xff] %v357
          %v359 = vld [vmem:[%s169 + $0x2f0] sm:$0xff]
          %360 = vst [vmem:[%s170 + $0x2f0] sm:$0xff] %v359
          %v361 = vld [vmem:[%s169 + $0x2f8] sm:$0xff]
          %362 = vst [vmem:[%s170 + $0x2f8] sm:$0xff] %v361
          %v363 = vld [vmem:[%s169 + $0x300] sm:$0xff]
          %364 = vst [vmem:[%s170 + $0x300] sm:$0xff] %v363
          %v365 = vld [vmem:[%s169 + $0x308] sm:$0xff]
          %366 = vst [vmem:[%s170 + $0x308] sm:$0xff] %v365
          %v367 = vld [vmem:[%s169 + $0x310] sm:$0xff]
          %368 = vst [vmem:[%s170 + $0x310] sm:$0xff] %v367
          %v369 = vld [vmem:[%s169 + $0x318] sm:$0xff]
          %370 = vst [vmem:[%s170 + $0x318] sm:$0xff] %v369
          %v371 = vld [vmem:[%s169 + $0x320] sm:$0xff]
          %372 = vst [vmem:[%s170 + $0x320] sm:$0xff] %v371
          %v373 = vld [vmem:[%s169 + $0x328] sm:$0xff]
          %374 = vst [vmem:[%s170 + $0x328] sm:$0xff] %v373
          %v375 = vld [vmem:[%s169 + $0x330] sm:$0xff]
          %376 = vst [vmem:[%s170 + $0x330] sm:$0xff] %v375
          %v377 = vld [vmem:[%s169 + $0x338] sm:$0xff]
          %378 = vst [vmem:[%s170 + $0x338] sm:$0xff] %v377
          %v379 = vld [vmem:[%s169 + $0x340] sm:$0xff]
          %380 = vst [vmem:[%s170 + $0x340] sm:$0xff] %v379
          %v381 = vld [vmem:[%s169 + $0x348] sm:$0xff]
          %382 = vst [vmem:[%s170 + $0x348] sm:$0xff] %v381
          %v383 = vld [vmem:[%s169 + $0x350] sm:$0xff]
          %384 = vst [vmem:[%s170 + $0x350] sm:$0xff] %v383
          %v385 = vld [vmem:[%s169 + $0x358] sm:$0xff]
          %386 = vst [vmem:[%s170 + $0x358] sm:$0xff] %v385
          %v387 = vld [vmem:[%s169 + $0x360] sm:$0xff]
          %388 = vst [vmem:[%s170 + $0x360] sm:$0xff] %v387
          %v389 = vld [vmem:[%s169 + $0x368] sm:$0xff]
          %390 = vst [vmem:[%s170 + $0x368] sm:$0xff] %v389
          %v391 = vld [vmem:[%s169 + $0x370] sm:$0xff]
          %392 = vst [vmem:[%s170 + $0x370] sm:$0xff] %v391
          %v393 = vld [vmem:[%s169 + $0x378] sm:$0xff]
          %394 = vst [vmem:[%s170 + $0x378] sm:$0xff] %v393
          %v395 = vld [vmem:[%s169 + $0x380] sm:$0xff]
          %396 = vst [vmem:[%s170 + $0x380] sm:$0xff] %v395
          %v397 = vld [vmem:[%s169 + $0x388] sm:$0xff]
          %398 = vst [vmem:[%s170 + $0x388] sm:$0xff] %v397
          %v399 = vld [vmem:[%s169 + $0x390] sm:$0xff]
          %400 = vst [vmem:[%s170 + $0x390] sm:$0xff] %v399
          %v401 = vld [vmem:[%s169 + $0x398] sm:$0xff]
          %402 = vst [vmem:[%s170 + $0x398] sm:$0xff] %v401
          %v403 = vld [vmem:[%s169 + $0x3a0] sm:$0xff]
          %404 = vst [vmem:[%s170 + $0x3a0] sm:$0xff] %v403
          %v405 = vld [vmem:[%s169 + $0x3a8] sm:$0xff]
          %406 = vst [vmem:[%s170 + $0x3a8] sm:$0xff] %v405
          %v407 = vld [vmem:[%s169 + $0x3b0] sm:$0xff]
          %408 = vst [vmem:[%s170 + $0x3b0] sm:$0xff] %v407
          %v409 = vld [vmem:[%s169 + $0x3b8] sm:$0xff]
          %410 = vst [vmem:[%s170 + $0x3b8] sm:$0xff] %v409
          %v411 = vld [vmem:[%s169 + $0x3c0] sm:$0xff]
          %412 = vst [vmem:[%s170 + $0x3c0] sm:$0xff] %v411
          %v413 = vld [vmem:[%s169 + $0x3c8] sm:$0xff]
          %414 = vst [vmem:[%s170 + $0x3c8] sm:$0xff] %v413
          %v415 = vld [vmem:[%s169 + $0x3d0] sm:$0xff]
          %416 = vst [vmem:[%s170 + $0x3d0] sm:$0xff] %v415
          %v417 = vld [vmem:[%s169 + $0x3d8] sm:$0xff]
          %418 = vst [vmem:[%s170 + $0x3d8] sm:$0xff] %v417
          %v419 = vld [vmem:[%s169 + $0x3e0] sm:$0xff]
          %420 = vst [vmem:[%s170 + $0x3e0] sm:$0xff] %v419
          %v421 = vld [vmem:[%s169 + $0x3e8] sm:$0xff]
          %422 = vst [vmem:[%s170 + $0x3e8] sm:$0xff] %v421
          %v423 = vld [vmem:[%s169 + $0x3f0] sm:$0xff]
          %424 = vst [vmem:[%s170 + $0x3f0] sm:$0xff] %v423
          %v425 = vld [vmem:[%s169 + $0x3f8] sm:$0xff]
          %426 = vst [vmem:[%s170 + $0x3f8] sm:$0xff] %v425
        $region71: #{trans_tc_forward.1} parent=65 // loop_footer
          %s168 = sadd.s32 1, %s164
        $region72: #{trans_tc_forward.1} parent=65 // loop_footer_branch
          %163 = sbr.rel target = $region68
        $region73: #{trans_tc_forward.1} parent=65 // loop_exit
          _
      $region66: #{trans_tc_forward.1} parent=50 // pred_fallthru
        _
      %p427 = pneg %p159
      // Predicated region
      $region74: #{trans_tc_forward.1} parent=50 // pred_check
        _
      $region75: #{trans_tc_forward.1} parent=50 // pred_check_branch
        %429 = sbr.rel (%p159) target = $region77
      $region76: #{trans_tc_forward.1} parent=50 // pred_region
        %s430 = sand.u32 1024, 7
      $region77: #{trans_tc_forward.1} parent=50 // pred_fallthru
        _
    $region51: #{trans_tc_forward.1} parent=1 // pred_fallthru
      _
    // Predicated region
    $region52: #{trans_tc_forward.1} parent=1 // pred_check
      %p144 = pneg %p140
    $region53: #{trans_tc_forward.1} parent=1 // pred_check_branch
      %146 = sbr.rel (%p144) target = $region55
    $region54: #{trans_tc_forward.1} parent=1 // pred_region
      %s147 = sshllo.u32 0, 1024
      loop: start=0, step=1, limit=1
      $region56: #{trans_tc_forward.1} parent=54 // loop_pre_header
        _
      $region57: #{trans_tc_forward.1} parent=54 // loop_header
        %s149 = sphi 0, %s153
        %p150 = scmp.ge.s32.totalorder %s149, 1
        %s154 = sphi %s4, %s4
        %s155 = sphi [#allocation3], [#allocation3]
      $region58: #{trans_tc_forward.1} parent=54 // loop_header_branch
        %152 = sbr.rel (%p150) target = $region62
      $region59: #{trans_tc_forward.1} parent=54 // loop_body
        %v156 = vld [vmem:[%s154] sm:%s147]
        %157 = vst [vmem:[%s155] sm:%s147] %v156
      $region60: #{trans_tc_forward.1} parent=54 // loop_footer
        %s153 = sadd.s32 1, %s149
      $region61: #{trans_tc_forward.1} parent=54 // loop_footer_branch
        %148 = sbr.rel target = $region57
      $region62: #{trans_tc_forward.1} parent=54 // loop_exit
        _
    $region55: #{trans_tc_forward.1} parent=1 // pred_fallthru
      _
    // Predicated region
    $region78: #{trans_tc_forward.1} parent=1 // pred_check
      _
    $region79: #{trans_tc_forward.1} parent=1 // pred_check_branch
      %433 = sbr.rel (0) target = $region81
    $region80: #{trans_tc_forward.1} parent=1 // pred_region
      %434 = vsyncadd %s138, 16384
    $region81: #{trans_tc_forward.1} parent=1 // pred_fallthru
      _
    %v435 = vld [vmem:[%s0] sm:$0xff]
    %v436 = vld [vmem:[%s0 + $0x8] sm:$0xff]
    %v437 = vld [vmem:[%s1 + $0x20] sm:$0x3]
    %v438 = vld [vmem:[%s1 + $0x28] sm:$0x1]
    %v439 = vlaneseq
    %v440 = vshrl.u32 %v439, 7
    %v441 = vsub.s32 0, %v440
    %v442 = vrot.slane %v438, %v441
    %vm443 = vcmask 15360
    %v445 = vsel %vm443, %v435, 0
    %v448 = vsel %vm443, %v436, 0
    %vm450 = vcmask 1041408
    %v452 = vsel %vm450, %v437, 0
    %454 = vmatprep.subr.mxu0 0.0
    %455 = vmatpush1.msra.mxu0 %v452
    %456 = vmatprep.subr.mxu0 0.0
    %457 = vmatpush1.msra.mxu0 0.0
    %458 = vmatprep.subr.mxu0 0.0
    %459 = vmatpush1.msra.mxu0 0.0
    %460 = vmatprep.subr.mxu0 0.0
    %461 = vmatpush1.msra.mxu0 0.0
    %462 = vmatprep.subr.mxu0 0.0
    %463 = vmatpush1.msra.mxu0 0.0
    %464 = vmatprep.subr.mxu0 0.0
    %465 = vmatpush1.msra.mxu0 0.0
    %466 = vmatprep.subr.mxu0 0.0
    %467 = vmatpush1.msra.mxu0 0.0
    %468 = vmatprep.subr.mxu0 0.0
    %469 = vmatpush1.msra.mxu0 0.0
    %470 = vmatprep.subr.mxu0 0.0
    %471 = vmatpush1.msra.mxu0 0.0
    %472 = vmatprep.subr.mxu0 0.0
    %473 = vmatpush1.msra.mxu0 0.0
    %474 = vmatprep.subr.mxu0 0.0
    %475 = vmatpush1.msra.mxu0 0.0
    %476 = vmatprep.subr.mxu0 0.0
    %477 = vmatpush1.msra.mxu0 0.0
    %478 = vmatprep.subr.mxu0 0.0
    %479 = vmatpush1.msra.mxu0 0.0
    %480 = vmatprep.subr.mxu0 0.0
    %481 = vmatpush1.msra.mxu0 0.0
    %482 = vmatprep.subr.mxu0 0.0
    %483 = vmatpush1.msra.mxu0 0.0
    %484 = vmatprep.subr.mxu0 0.0
    %485 = vmatpush1.msra.mxu0 0.0
    %486 = vmatprep.subr.mxu0 0.0
    %487 = vmatpush1.msra.mxu0 0.0
    %488 = vmatprep.subr.mxu0 0.0
    %489 = vmatpush1.msra.mxu0 0.0
    %490 = vmatprep.subr.mxu0 0.0
    %491 = vmatpush1.msra.mxu0 0.0
    %492 = vmatprep.subr.mxu0 0.0
    %493 = vmatpush1.msra.mxu0 0.0
    %494 = vmatprep.subr.mxu0 0.0
    %495 = vmatpush1.msra.mxu0 0.0
    %496 = vmatprep.subr.mxu0 0.0
    %497 = vmatpush1.msra.mxu0 0.0
    %498 = vmatprep.subr.mxu0 0.0
    %499 = vmatpush1.msra.mxu0 0.0
    %500 = vmatprep.subr.mxu0 0.0
    %501 = vmatpush1.msra.mxu0 0.0
    %502 = vmatprep.subr.mxu0 0.0
    %503 = vmatpush1.msra.mxu0 0.0
    %504 = vmatprep.subr.mxu0 0.0
    %505 = vmatpush1.msra.mxu0 0.0
    %506 = vmatprep.subr.mxu0 0.0
    %507 = vmatpush1.msra.mxu0 0.0
    %508 = vmatprep.subr.mxu0 0.0
    %509 = vmatpush1.msra.mxu0 0.0
    %510 = vmatprep.subr.mxu0 0.0
    %511 = vmatpush1.msra.mxu0 0.0
    %512 = vmatprep.subr.mxu0 0.0
    %513 = vmatpush1.msra.mxu0 0.0
    %514 = vmatprep.subr.mxu0 0.0
    %515 = vmatpush1.msra.mxu0 0.0
    %516 = vmatprep.subr.mxu0 0.0
    %517 = vmatpush1.msra.mxu0 0.0
    %518 = vmatprep.mubr.f32.mxu0 0.0
    %519 = vmatmul.mubr.f32.gmra.mrb[0].mxu0 %v445
    %v520 = vpop.f32.mrb[0].mxu0
    %v521 = vadd.f32 %v442, %v520
    %v522 = vpop.f32.mrb[0].mxu0
    %523 = vmatprep.mubr.f32.mxu0 0.0
    %524 = vmatmul.mubr.f32.gmra.mrb[0].mxu0 %v448
    %v525 = vpop.f32.mrb[0].mxu0
    %v526 = vadd.f32 %v442, %v525
    %v527 = vpop.f32.mrb[0].mxu0
    %528 = vdwg.mxu0
    %v529 = vld [vmem:[%s1] sm:$0xff]
    %v530 = vld [vmem:[%s1 + $0x8] sm:$0xff]
    %v531 = vadd.f32 %v521, %v529
    %v532 = vadd.f32 %v526, %v530
    %v533 = vld [vmem:[%s1 + $0x30] sm:$0xff]
    %v534 = vld [vmem:[%s1 + $0x38] sm:$0xff]
    %v535 = vld [vmem:[%s1 + $0x40] sm:$0xff]
    %v536 = vld [vmem:[%s1 + $0x48] sm:$0xff]
    %v537 = vld [vmem:[%s1 + $0x50] sm:$0xff]
    %v538 = vld [vmem:[%s1 + $0x58] sm:$0x1]
    %v539 = vlaneseq
    %v540 = vshrl.u32 %v539, 7
    %v541 = vsub.s32 0, %v540
    %v542 = vrot.slane %v538, %v541
    %vm543 = vcmask 326656
    %v545 = vsel %vm543, %v531, 0
    %v548 = vsel %vm543, %v532, 0
    %550 = vmatprep.subr.mxu0 0.0
    %551 = vmatpush1.msra.mxu0 %v533
    %552 = vmatprep.subr.mxu0 0.0
    %553 = vmatpush1.msra.mxu0 %v534
    %554 = vmatprep.subr.mxu0 0.0
    %555 = vmatpush1.msra.mxu0 %v535
    %556 = vmatprep.subr.mxu0 0.0
    %557 = vmatpush1.msra.mxu0 %v536
    %558 = vmatprep.subr.mxu0 0.0
    %559 = vmatpush1.msra.mxu0 %v537
    %560 = vmatprep.subr.mxu0 0.0
    %561 = vmatpush1.msra.mxu0 0.0
    %562 = vmatprep.subr.mxu0 0.0
    %563 = vmatpush1.msra.mxu0 0.0
    %564 = vmatprep.subr.mxu0 0.0
    %565 = vmatpush1.msra.mxu0 0.0
    %566 = vmatprep.subr.mxu0 0.0
    %567 = vmatpush1.msra.mxu0 0.0
    %568 = vmatprep.subr.mxu0 0.0
    %569 = vmatpush1.msra.mxu0 0.0
    %570 = vmatprep.subr.mxu0 0.0
    %571 = vmatpush1.msra.mxu0 0.0
    %572 = vmatprep.subr.mxu0 0.0
    %573 = vmatpush1.msra.mxu0 0.0
    %574 = vmatprep.subr.mxu0 0.0
    %575 = vmatpush1.msra.mxu0 0.0
    %576 = vmatprep.subr.mxu0 0.0
    %577 = vmatpush1.msra.mxu0 0.0
    %578 = vmatprep.subr.mxu0 0.0
    %579 = vmatpush1.msra.mxu0 0.0
    %580 = vmatprep.subr.mxu0 0.0
    %581 = vmatpush1.msra.mxu0 0.0
    %582 = vmatprep.subr.mxu0 0.0
    %583 = vmatpush1.msra.mxu0 0.0
    %584 = vmatprep.subr.mxu0 0.0
    %585 = vmatpush1.msra.mxu0 0.0
    %586 = vmatprep.subr.mxu0 0.0
    %587 = vmatpush1.msra.mxu0 0.0
    %588 = vmatprep.subr.mxu0 0.0
    %589 = vmatpush1.msra.mxu0 0.0
    %590 = vmatprep.subr.mxu0 0.0
    %591 = vmatpush1.msra.mxu0 0.0
    %592 = vmatprep.subr.mxu0 0.0
    %593 = vmatpush1.msra.mxu0 0.0
    %594 = vmatprep.subr.mxu0 0.0
    %595 = vmatpush1.msra.mxu0 0.0
    %596 = vmatprep.subr.mxu0 0.0
    %597 = vmatpush1.msra.mxu0 0.0
    %598 = vmatprep.subr.mxu0 0.0
    %599 = vmatpush1.msra.mxu0 0.0
    %600 = vmatprep.subr.mxu0 0.0
    %601 = vmatpush1.msra.mxu0 0.0
    %602 = vmatprep.subr.mxu0 0.0
    %603 = vmatpush1.msra.mxu0 0.0
    %604 = vmatprep.subr.mxu0 0.0
    %605 = vmatpush1.msra.mxu0 0.0
    %606 = vmatprep.subr.mxu0 0.0
    %607 = vmatpush1.msra.mxu0 0.0
    %608 = vmatprep.subr.mxu0 0.0
    %609 = vmatpush1.msra.mxu0 0.0
    %610 = vmatprep.subr.mxu0 0.0
    %611 = vmatpush1.msra.mxu0 0.0
    %612 = vmatprep.subr.mxu0 0.0
    %613 = vmatpush1.msra.mxu0 0.0
    %614 = vmatprep.mubr.f32.mxu0 0.0
    %615 = vmatmul.mubr.f32.gmra.mrb[0].mxu0 %v545
    %v616 = vpop.f32.mrb[0].mxu0
    %v617 = vadd.f32 %v542, %v616
    %v618 = vpop.f32.mrb[0].mxu0
    %619 = vmatprep.mubr.f32.mxu0 0.0
    %620 = vmatmul.mubr.f32.gmra.mrb[0].mxu0 %v548
    %v621 = vpop.f32.mrb[0].mxu0
    %v622 = vadd.f32 %v542, %v621
    %v623 = vpop.f32.mrb[0].mxu0
    %624 = vdwg.mxu0
    %v625 = vmul.f32 %v617, 0.5
    %v626 = vmul.f32 %v622, 0.5
    %629 = vrot.lane.b32.xlu0 %v617, 88
    %v630 = vpop.permute.xlu0 %629
    %631 = vrot.lane.b32.xlu0 %v622, 88
    %v632 = vpop.permute.xlu0 %631
    %vm633 = vcmask 31744
    %v635 = vsel %vm633, %v625, 0
    %v638 = vsel %vm633, %v626, 0
    %v640 = vsel %vm633, %v630, 0
    %v642 = vsel %vm633, %v632, 0
    %644 = vmatprep.subr.mxu0 0.0
    %645 = vmatpush1.xpose.msra.mxu0 %v640
    %646 = vmatprep.subr.mxu0 0.0
    %647 = vmatpush1.xpose.msra.mxu0 %v642
    %648 = vmatprep.subr.mxu0 0.0
    %649 = vmatpush1.xpose.msra.mxu0 0.0
    %650 = vmatprep.subr.mxu0 0.0
    %651 = vmatpush1.xpose.msra.mxu0 0.0
    %652 = vmatprep.subr.mxu0 0.0
    %653 = vmatpush1.xpose.msra.mxu0 0.0
    %654 = vmatprep.subr.mxu0 0.0
    %655 = vmatpush1.xpose.msra.mxu0 0.0
    %656 = vmatprep.subr.mxu0 0.0
    %657 = vmatpush1.xpose.msra.mxu0 0.0
    %658 = vmatprep.subr.mxu0 0.0
    %659 = vmatpush1.xpose.msra.mxu0 0.0
    %660 = vmatprep.subr.mxu0 0.0
    %661 = vmatpush1.xpose.msra.mxu0 0.0
    %662 = vmatprep.subr.mxu0 0.0
    %663 = vmatpush1.xpose.msra.mxu0 0.0
    %664 = vmatprep.subr.mxu0 0.0
    %665 = vmatpush1.xpose.msra.mxu0 0.0
    %666 = vmatprep.subr.mxu0 0.0
    %667 = vmatpush1.xpose.msra.mxu0 0.0
    %668 = vmatprep.subr.mxu0 0.0
    %669 = vmatpush1.xpose.msra.mxu0 0.0
    %670 = vmatprep.subr.mxu0 0.0
    %671 = vmatpush1.xpose.msra.mxu0 0.0
    %672 = vmatprep.subr.mxu0 0.0
    %673 = vmatpush1.xpose.msra.mxu0 0.0
    %674 = vmatprep.subr.mxu0 0.0
    %675 = vmatpush1.xpose.msra.mxu0 0.0
    %676 = vmatprep.subr.mxu0 0.0
    %677 = vmatpush1.xpose.msra.mxu0 0.0
    %678 = vmatprep.subr.mxu0 0.0
    %679 = vmatpush1.xpose.msra.mxu0 0.0
    %680 = vmatprep.subr.mxu0 0.0
    %681 = vmatpush1.xpose.msra.mxu0 0.0
    %682 = vmatprep.subr.mxu0 0.0
    %683 = vmatpush1.xpose.msra.mxu0 0.0
    %684 = vmatprep.subr.mxu0 0.0
    %685 = vmatpush1.xpose.msra.mxu0 0.0
    %686 = vmatprep.subr.mxu0 0.0
    %687 = vmatpush1.xpose.msra.mxu0 0.0
    %688 = vmatprep.subr.mxu0 0.0
    %689 = vmatpush1.xpose.msra.mxu0 0.0
    %690 = vmatprep.subr.mxu0 0.0
    %691 = vmatpush1.xpose.msra.mxu0 0.0
    %692 = vmatprep.subr.mxu0 0.0
    %693 = vmatpush1.xpose.msra.mxu0 0.0
    %694 = vmatprep.subr.mxu0 0.0
    %695 = vmatpush1.xpose.msra.mxu0 0.0
    %696 = vmatprep.subr.mxu0 0.0
    %697 = vmatpush1.xpose.msra.mxu0 0.0
    %698 = vmatprep.subr.mxu0 0.0
    %699 = vmatpush1.xpose.msra.mxu0 0.0
    %700 = vmatprep.subr.mxu0 0.0
    %701 = vmatpush1.xpose.msra.mxu0 0.0
    %702 = vmatprep.subr.mxu0 0.0
    %703 = vmatpush1.xpose.msra.mxu0 0.0
    %704 = vmatprep.subr.mxu0 0.0
    %705 = vmatpush1.xpose.msra.mxu0 0.0
    %706 = vmatprep.subr.mxu0 0.0
    %707 = vmatpush1.xpose.msra.mxu0 0.0
    %708 = vmatprep.mubr.f32.mxu0 0.0
    %709 = vmatmul.mubr.f32.gmra.mrb[0].mxu0 %v635
    %v710 = vpop.f32.mrb[0].mxu0
    %v711 = vadd.f32 0.0, %v710
    %v712 = vpop.f32.mrb[0].mxu0
    %713 = vmatprep.mubr.f32.mxu0 0.0
    %714 = vmatmul.mubr.f32.gmra.mrb[0].mxu0 %v638
    %v715 = vpop.f32.mrb[0].mxu0
    %v716 = vadd.f32 0.0, %v715
    %v717 = vpop.f32.mrb[0].mxu0
    %718 = vdwg.mxu0
    %719 = vrot.lane.b32.xlu0 %v625, 124
    %v720 = vpop.permute.xlu0 %719
    %721 = vrot.lane.b32.xlu0 %v626, 124
    %v722 = vpop.permute.xlu0 %721
    %723 = vrot.lane.b32.xlu0 %v617, 84
    %v724 = vpop.permute.xlu0 %723
    %725 = vrot.lane.b32.xlu0 %v622, 84
    %v726 = vpop.permute.xlu0 %725
    %v727 = vsel %vm633, %v720, 0
    %v729 = vsel %vm633, %v722, 0
    %v731 = vsel %vm633, %v724, 0
    %v733 = vsel %vm633, %v726, 0
    %735 = vmatprep.subr.mxu0 0.0
    %736 = vmatpush1.xpose.msra.mxu0 %v731
    %737 = vmatprep.subr.mxu0 0.0
    %738 = vmatpush1.xpose.msra.mxu0 %v733
    %739 = vmatprep.subr.mxu0 0.0
    %740 = vmatpush1.xpose.msra.mxu0 0.0
    %741 = vmatprep.subr.mxu0 0.0
    %742 = vmatpush1.xpose.msra.mxu0 0.0
    %743 = vmatprep.subr.mxu0 0.0
    %744 = vmatpush1.xpose.msra.mxu0 0.0
    %745 = vmatprep.subr.mxu0 0.0
    %746 = vmatpush1.xpose.msra.mxu0 0.0
    %747 = vmatprep.subr.mxu0 0.0
    %748 = vmatpush1.xpose.msra.mxu0 0.0
    %749 = vmatprep.subr.mxu0 0.0
    %750 = vmatpush1.xpose.msra.mxu0 0.0
    %751 = vmatprep.subr.mxu0 0.0
    %752 = vmatpush1.xpose.msra.mxu0 0.0
    %753 = vmatprep.subr.mxu0 0.0
    %754 = vmatpush1.xpose.msra.mxu0 0.0
    %755 = vmatprep.subr.mxu0 0.0
    %756 = vmatpush1.xpose.msra.mxu0 0.0
    %757 = vmatprep.subr.mxu0 0.0
    %758 = vmatpush1.xpose.msra.mxu0 0.0
    %759 = vmatprep.subr.mxu0 0.0
    %760 = vmatpush1.xpose.msra.mxu0 0.0
    %761 = vmatprep.subr.mxu0 0.0
    %762 = vmatpush1.xpose.msra.mxu0 0.0
    %763 = vmatprep.subr.mxu0 0.0
    %764 = vmatpush1.xpose.msra.mxu0 0.0
    %765 = vmatprep.subr.mxu0 0.0
    %766 = vmatpush1.xpose.msra.mxu0 0.0
    %767 = vmatprep.subr.mxu0 0.0
    %768 = vmatpush1.xpose.msra.mxu0 0.0
    %769 = vmatprep.subr.mxu0 0.0
    %770 = vmatpush1.xpose.msra.mxu0 0.0
    %771 = vmatprep.subr.mxu0 0.0
    %772 = vmatpush1.xpose.msra.mxu0 0.0
    %773 = vmatprep.subr.mxu0 0.0
    %774 = vmatpush1.xpose.msra.mxu0 0.0
    %775 = vmatprep.subr.mxu0 0.0
    %776 = vmatpush1.xpose.msra.mxu0 0.0
    %777 = vmatprep.subr.mxu0 0.0
    %778 = vmatpush1.xpose.msra.mxu0 0.0
    %779 = vmatprep.subr.mxu0 0.0
    %780 = vmatpush1.xpose.msra.mxu0 0.0
    %781 = vmatprep.subr.mxu0 0.0
    %782 = vmatpush1.xpose.msra.mxu0 0.0
    %783 = vmatprep.subr.mxu0 0.0
    %784 = vmatpush1.xpose.msra.mxu0 0.0
    %785 = vmatprep.subr.mxu0 0.0
    %786 = vmatpush1.xpose.msra.mxu0 0.0
    %787 = vmatprep.subr.mxu0 0.0
    %788 = vmatpush1.xpose.msra.mxu0 0.0
    %789 = vmatprep.subr.mxu0 0.0
    %790 = vmatpush1.xpose.msra.mxu0 0.0
    %791 = vmatprep.subr.mxu0 0.0
    %792 = vmatpush1.xpose.msra.mxu0 0.0
    %793 = vmatprep.subr.mxu0 0.0
    %794 = vmatpush1.xpose.msra.mxu0 0.0
    %795 = vmatprep.subr.mxu0 0.0
    %796 = vmatpush1.xpose.msra.mxu0 0.0
    %797 = vmatprep.subr.mxu0 0.0
    %798 = vmatpush1.xpose.msra.mxu0 0.0
    %799 = vmatprep.mubr.f32.mxu0 0.0
    %800 = vmatmul.mubr.f32.gmra.mrb[0].mxu0 %v727
    %v801 = vpop.f32.mrb[0].mxu0
    %v802 = vadd.f32 0.0, %v801
    %v803 = vpop.f32.mrb[0].mxu0
    %804 = vmatprep.mubr.f32.mxu0 0.0
    %805 = vmatmul.mubr.f32.gmra.mrb[0].mxu0 %v729
    %v806 = vpop.f32.mrb[0].mxu0
    %v807 = vadd.f32 0.0, %v806
    %v808 = vpop.f32.mrb[0].mxu0
    %809 = vdwg.mxu0
    %810 = vrot.lane.b32.xlu0 %v625, 120
    %v811 = vpop.permute.xlu0 %810
    %812 = vrot.lane.b32.xlu0 %v626, 120
    %v813 = vpop.permute.xlu0 %812
    %814 = vrot.lane.b32.xlu0 %v617, 80
    %v815 = vpop.permute.xlu0 %814
    %816 = vrot.lane.b32.xlu0 %v622, 80
    %v817 = vpop.permute.xlu0 %816
    %v818 = vsel %vm633, %v811, 0
    %v820 = vsel %vm633, %v813, 0
    %v822 = vsel %vm633, %v815, 0
    %v824 = vsel %vm633, %v817, 0
    %826 = vmatprep.subr.mxu0 0.0
    %827 = vmatpush1.xpose.msra.mxu0 %v822
    %828 = vmatprep.subr.mxu0 0.0
    %829 = vmatpush1.xpose.msra.mxu0 %v824
    %830 = vmatprep.subr.mxu0 0.0
    %831 = vmatpush1.xpose.msra.mxu0 0.0
    %832 = vmatprep.subr.mxu0 0.0
    %833 = vmatpush1.xpose.msra.mxu0 0.0
    %834 = vmatprep.subr.mxu0 0.0
    %835 = vmatpush1.xpose.msra.mxu0 0.0
    %836 = vmatprep.subr.mxu0 0.0
    %837 = vmatpush1.xpose.msra.mxu0 0.0
    %838 = vmatprep.subr.mxu0 0.0
    %839 = vmatpush1.xpose.msra.mxu0 0.0
    %840 = vmatprep.subr.mxu0 0.0
    %841 = vmatpush1.xpose.msra.mxu0 0.0
    %842 = vmatprep.subr.mxu0 0.0
    %843 = vmatpush1.xpose.msra.mxu0 0.0
    %844 = vmatprep.subr.mxu0 0.0
    %845 = vmatpush1.xpose.msra.mxu0 0.0
    %846 = vmatprep.subr.mxu0 0.0
    %847 = vmatpush1.xpose.msra.mxu0 0.0
    %848 = vmatprep.subr.mxu0 0.0
    %849 = vmatpush1.xpose.msra.mxu0 0.0
    %850 = vmatprep.subr.mxu0 0.0
    %851 = vmatpush1.xpose.msra.mxu0 0.0
    %852 = vmatprep.subr.mxu0 0.0
    %853 = vmatpush1.xpose.msra.mxu0 0.0
    %854 = vmatprep.subr.mxu0 0.0
    %855 = vmatpush1.xpose.msra.mxu0 0.0
    %856 = vmatprep.subr.mxu0 0.0
    %857 = vmatpush1.xpose.msra.mxu0 0.0
    %858 = vmatprep.subr.mxu0 0.0
    %859 = vmatpush1.xpose.msra.mxu0 0.0
    %860 = vmatprep.subr.mxu0 0.0
    %861 = vmatpush1.xpose.msra.mxu0 0.0
    %862 = vmatprep.subr.mxu0 0.0
    %863 = vmatpush1.xpose.msra.mxu0 0.0
    %864 = vmatprep.subr.mxu0 0.0
    %865 = vmatpush1.xpose.msra.mxu0 0.0
    %866 = vmatprep.subr.mxu0 0.0
    %867 = vmatpush1.xpose.msra.mxu0 0.0
    %868 = vmatprep.subr.mxu0 0.0
    %869 = vmatpush1.xpose.msra.mxu0 0.0
    %870 = vmatprep.subr.mxu0 0.0
    %871 = vmatpush1.xpose.msra.mxu0 0.0
    %872 = vmatprep.subr.mxu0 0.0
    %873 = vmatpush1.xpose.msra.mxu0 0.0
    %874 = vmatprep.subr.mxu0 0.0
    %875 = vmatpush1.xpose.msra.mxu0 0.0
    %876 = vmatprep.subr.mxu0 0.0
    %877 = vmatpush1.xpose.msra.mxu0 0.0
    %878 = vmatprep.subr.mxu0 0.0
    %879 = vmatpush1.xpose.msra.mxu0 0.0
    %880 = vmatprep.subr.mxu0 0.0
    %881 = vmatpush1.xpose.msra.mxu0 0.0
    %882 = vmatprep.subr.mxu0 0.0
    %883 = vmatpush1.xpose.msra.mxu0 0.0
    %884 = vmatprep.subr.mxu0 0.0
    %885 = vmatpush1.xpose.msra.mxu0 0.0
    %886 = vmatprep.subr.mxu0 0.0
    %887 = vmatpush1.xpose.msra.mxu0 0.0
    %888 = vmatprep.subr.mxu0 0.0
    %889 = vmatpush1.xpose.msra.mxu0 0.0
    %890 = vmatprep.mubr.f32.mxu0 0.0
    %891 = vmatmul.mubr.f32.gmra.mrb[0].mxu0 %v818
    %v892 = vpop.f32.mrb[0].mxu0
    %v893 = vadd.f32 0.0, %v892
    %v894 = vpop.f32.mrb[0].mxu0
    %895 = vmatprep.mubr.f32.mxu0 0.0
    %896 = vmatmul.mubr.f32.gmra.mrb[0].mxu0 %v820
    %v897 = vpop.f32.mrb[0].mxu0
    %v898 = vadd.f32 0.0, %v897
    %v899 = vpop.f32.mrb[0].mxu0
    %900 = vdwg.mxu0
    %901 = vrot.lane.b32.xlu0 %v625, 116
    %v902 = vpop.permute.xlu0 %901
    %903 = vrot.lane.b32.xlu0 %v626, 116
    %v904 = vpop.permute.xlu0 %903
    %905 = vrot.lane.b32.xlu0 %v617, 76
    %v906 = vpop.permute.xlu0 %905
    %907 = vrot.lane.b32.xlu0 %v622, 76
    %v908 = vpop.permute.xlu0 %907
    %v909 = vsel %vm633, %v902, 0
    %v911 = vsel %vm633, %v904, 0
    %v913 = vsel %vm633, %v906, 0
    %v915 = vsel %vm633, %v908, 0
    %917 = vmatprep.subr.mxu0 0.0
    %918 = vmatpush1.xpose.msra.mxu0 %v913
    %919 = vmatprep.subr.mxu0 0.0
    %920 = vmatpush1.xpose.msra.mxu0 %v915
    %921 = vmatprep.subr.mxu0 0.0
    %922 = vmatpush1.xpose.msra.mxu0 0.0
    %923 = vmatprep.subr.mxu0 0.0
    %924 = vmatpush1.xpose.msra.mxu0 0.0
    %925 = vmatprep.subr.mxu0 0.0
    %926 = vmatpush1.xpose.msra.mxu0 0.0
    %927 = vmatprep.subr.mxu0 0.0
    %928 = vmatpush1.xpose.msra.mxu0 0.0
    %929 = vmatprep.subr.mxu0 0.0
    %930 = vmatpush1.xpose.msra.mxu0 0.0
    %931 = vmatprep.subr.mxu0 0.0
    %932 = vmatpush1.xpose.msra.mxu0 0.0
    %933 = vmatprep.subr.mxu0 0.0
    %934 = vmatpush1.xpose.msra.mxu0 0.0
    %935 = vmatprep.subr.mxu0 0.0
    %936 = vmatpush1.xpose.msra.mxu0 0.0
    %937 = vmatprep.subr.mxu0 0.0
    %938 = vmatpush1.xpose.msra.mxu0 0.0
    %939 = vmatprep.subr.mxu0 0.0
    %940 = vmatpush1.xpose.msra.mxu0 0.0
    %941 = vmatprep.subr.mxu0 0.0
    %942 = vmatpush1.xpose.msra.mxu0 0.0
    %943 = vmatprep.subr.mxu0 0.0
    %944 = vmatpush1.xpose.msra.mxu0 0.0
    %945 = vmatprep.subr.mxu0 0.0
    %946 = vmatpush1.xpose.msra.mxu0 0.0
    %947 = vmatprep.subr.mxu0 0.0
    %948 = vmatpush1.xpose.msra.mxu0 0.0
    %949 = vmatprep.subr.mxu0 0.0
    %950 = vmatpush1.xpose.msra.mxu0 0.0
    %951 = vmatprep.subr.mxu0 0.0
    %952 = vmatpush1.xpose.msra.mxu0 0.0
    %953 = vmatprep.subr.mxu0 0.0
    %954 = vmatpush1.xpose.msra.mxu0 0.0
    %955 = vmatprep.subr.mxu0 0.0
    %956 = vmatpush1.xpose.msra.mxu0 0.0
    %957 = vmatprep.subr.mxu0 0.0
    %958 = vmatpush1.xpose.msra.mxu0 0.0
    %959 = vmatprep.subr.mxu0 0.0
    %960 = vmatpush1.xpose.msra.mxu0 0.0
    %961 = vmatprep.subr.mxu0 0.0
    %962 = vmatpush1.xpose.msra.mxu0 0.0
    %963 = vmatprep.subr.mxu0 0.0
    %964 = vmatpush1.xpose.msra.mxu0 0.0
    %965 = vmatprep.subr.mxu0 0.0
    %966 = vmatpush1.xpose.msra.mxu0 0.0
    %967 = vmatprep.subr.mxu0 0.0
    %968 = vmatpush1.xpose.msra.mxu0 0.0
    %969 = vmatprep.subr.mxu0 0.0
    %970 = vmatpush1.xpose.msra.mxu0 0.0
    %971 = vmatprep.subr.mxu0 0.0
    %972 = vmatpush1.xpose.msra.mxu0 0.0
    %973 = vmatprep.subr.mxu0 0.0
    %974 = vmatpush1.xpose.msra.mxu0 0.0
    %975 = vmatprep.subr.mxu0 0.0
    %976 = vmatpush1.xpose.msra.mxu0 0.0
    %977 = vmatprep.subr.mxu0 0.0
    %978 = vmatpush1.xpose.msra.mxu0 0.0
    %979 = vmatprep.subr.mxu0 0.0
    %980 = vmatpush1.xpose.msra.mxu0 0.0
    %981 = vmatprep.mubr.f32.mxu0 0.0
    %982 = vmatmul.mubr.f32.gmra.mrb[0].mxu0 %v909
    %v983 = vpop.f32.mrb[0].mxu0
    %v984 = vadd.f32 0.0, %v983
    %v985 = vpop.f32.mrb[0].mxu0
    %986 = vmatprep.mubr.f32.mxu0 0.0
    %987 = vmatmul.mubr.f32.gmra.mrb[0].mxu0 %v911
    %v988 = vpop.f32.mrb[0].mxu0
    %v989 = vadd.f32 0.0, %v988
    %v990 = vpop.f32.mrb[0].mxu0
    %991 = vdwg.mxu0
    %992 = vrot.lane.b32.xlu0 %v625, 112
    %v993 = vpop.permute.xlu0 %992
    %994 = vrot.lane.b32.xlu0 %v626, 112
    %v995 = vpop.permute.xlu0 %994
    %996 = vrot.lane.b32.xlu0 %v617, 72
    %v997 = vpop.permute.xlu0 %996
    %998 = vrot.lane.b32.xlu0 %v622, 72
    %v999 = vpop.permute.xlu0 %998
    %v1000 = vsel %vm633, %v993, 0
    %v1002 = vsel %vm633, %v995, 0
    %v1004 = vsel %vm633, %v997, 0
    %v1006 = vsel %vm633, %v999, 0
    %1008 = vmatprep.subr.mxu0 0.0
    %1009 = vmatpush1.xpose.msra.mxu0 %v1004
    %1010 = vmatprep.subr.mxu0 0.0
    %1011 = vmatpush1.xpose.msra.mxu0 %v1006
    %1012 = vmatprep.subr.mxu0 0.0
    %1013 = vmatpush1.xpose.msra.mxu0 0.0
    %1014 = vmatprep.subr.mxu0 0.0
    %1015 = vmatpush1.xpose.msra.mxu0 0.0
    %1016 = vmatprep.subr.mxu0 0.0
    %1017 = vmatpush1.xpose.msra.mxu0 0.0
    %1018 = vmatprep.subr.mxu0 0.0
    %1019 = vmatpush1.xpose.msra.mxu0 0.0
    %1020 = vmatprep.subr.mxu0 0.0
    %1021 = vmatpush1.xpose.msra.mxu0 0.0
    %1022 = vmatprep.subr.mxu0 0.0
    %1023 = vmatpush1.xpose.msra.mxu0 0.0
    %1024 = vmatprep.subr.mxu0 0.0
    %1025 = vmatpush1.xpose.msra.mxu0 0.0
    %1026 = vmatprep.subr.mxu0 0.0
    %1027 = vmatpush1.xpose.msra.mxu0 0.0
    %1028 = vmatprep.subr.mxu0 0.0
    %1029 = vmatpush1.xpose.msra.mxu0 0.0
    %1030 = vmatprep.subr.mxu0 0.0
    %1031 = vmatpush1.xpose.msra.mxu0 0.0
    %1032 = vmatprep.subr.mxu0 0.0
    %1033 = vmatpush1.xpose.msra.mxu0 0.0
    %1034 = vmatprep.subr.mxu0 0.0
    %1035 = vmatpush1.xpose.msra.mxu0 0.0
    %1036 = vmatprep.subr.mxu0 0.0
    %1037 = vmatpush1.xpose.msra.mxu0 0.0
    %1038 = vmatprep.subr.mxu0 0.0
    %1039 = vmatpush1.xpose.msra.mxu0 0.0
    %1040 = vmatprep.subr.mxu0 0.0
    %1041 = vmatpush1.xpose.msra.mxu0 0.0
    %1042 = vmatprep.subr.mxu0 0.0
    %1043 = vmatpush1.xpose.msra.mxu0 0.0
    %1044 = vmatprep.subr.mxu0 0.0
    %1045 = vmatpush1.xpose.msra.mxu0 0.0
    %1046 = vmatprep.subr.mxu0 0.0
    %1047 = vmatpush1.xpose.msra.mxu0 0.0
    %1048 = vmatprep.subr.mxu0 0.0
    %1049 = vmatpush1.xpose.msra.mxu0 0.0
    %1050 = vmatprep.subr.mxu0 0.0
    %1051 = vmatpush1.xpose.msra.mxu0 0.0
    %1052 = vmatprep.subr.mxu0 0.0
    %1053 = vmatpush1.xpose.msra.mxu0 0.0
    %1054 = vmatprep.subr.mxu0 0.0
    %1055 = vmatpush1.xpose.msra.mxu0 0.0
    %1056 = vmatprep.subr.mxu0 0.0
    %1057 = vmatpush1.xpose.msra.mxu0 0.0
    %1058 = vmatprep.subr.mxu0 0.0
    %1059 = vmatpush1.xpose.msra.mxu0 0.0
    %1060 = vmatprep.subr.mxu0 0.0
    %1061 = vmatpush1.xpose.msra.mxu0 0.0
    %1062 = vmatprep.subr.mxu0 0.0
    %1063 = vmatpush1.xpose.msra.mxu0 0.0
    %1064 = vmatprep.subr.mxu0 0.0
    %1065 = vmatpush1.xpose.msra.mxu0 0.0
    %1066 = vmatprep.subr.mxu0 0.0
    %1067 = vmatpush1.xpose.msra.mxu0 0.0
    %1068 = vmatprep.subr.mxu0 0.0
    %1069 = vmatpush1.xpose.msra.mxu0 0.0
    %1070 = vmatprep.subr.mxu0 0.0
    %1071 = vmatpush1.xpose.msra.mxu0 0.0
    %1072 = vmatprep.mubr.f32.mxu0 0.0
    %1073 = vmatmul.mubr.f32.gmra.mrb[0].mxu0 %v1000
    %v1074 = vpop.f32.mrb[0].mxu0
    %v1075 = vadd.f32 0.0, %v1074
    %v1076 = vpop.f32.mrb[0].mxu0
    %1077 = vmatprep.mubr.f32.mxu0 0.0
    %1078 = vmatmul.mubr.f32.gmra.mrb[0].mxu0 %v1002
    %v1079 = vpop.f32.mrb[0].mxu0
    %v1080 = vadd.f32 0.0, %v1079
    %v1081 = vpop.f32.mrb[0].mxu0
    %1082 = vdwg.mxu0
    %1083 = vrot.lane.b32.xlu0 %v625, 108
    %v1084 = vpop.permute.xlu0 %1083
    %1085 = vrot.lane.b32.xlu0 %v626, 108
    %v1086 = vpop.permute.xlu0 %1085
    %1087 = vrot.lane.b32.xlu0 %v617, 68
    %v1088 = vpop.permute.xlu0 %1087
    %1089 = vrot.lane.b32.xlu0 %v622, 68
    %v1090 = vpop.permute.xlu0 %1089
    %v1091 = vsel %vm633, %v1084, 0
    %v1093 = vsel %vm633, %v1086, 0
    %v1095 = vsel %vm633, %v1088, 0
    %v1097 = vsel %vm633, %v1090, 0
    %1099 = vmatprep.subr.mxu0 0.0
    %1100 = vmatpush1.xpose.msra.mxu0 %v1095
    %1101 = vmatprep.subr.mxu0 0.0
    %1102 = vmatpush1.xpose.msra.mxu0 %v1097
    %1103 = vmatprep.subr.mxu0 0.0
    %1104 = vmatpush1.xpose.msra.mxu0 0.0
    %1105 = vmatprep.subr.mxu0 0.0
    %1106 = vmatpush1.xpose.msra.mxu0 0.0
    %1107 = vmatprep.subr.mxu0 0.0
    %1108 = vmatpush1.xpose.msra.mxu0 0.0
    %1109 = vmatprep.subr.mxu0 0.0
    %1110 = vmatpush1.xpose.msra.mxu0 0.0
    %1111 = vmatprep.subr.mxu0 0.0
    %1112 = vmatpush1.xpose.msra.mxu0 0.0
    %1113 = vmatprep.subr.mxu0 0.0
    %1114 = vmatpush1.xpose.msra.mxu0 0.0
    %1115 = vmatprep.subr.mxu0 0.0
    %1116 = vmatpush1.xpose.msra.mxu0 0.0
    %1117 = vmatprep.subr.mxu0 0.0
    %1118 = vmatpush1.xpose.msra.mxu0 0.0
    %1119 = vmatprep.subr.mxu0 0.0
    %1120 = vmatpush1.xpose.msra.mxu0 0.0
    %1121 = vmatprep.subr.mxu0 0.0
    %1122 = vmatpush1.xpose.msra.mxu0 0.0
    %1123 = vmatprep.subr.mxu0 0.0
    %1124 = vmatpush1.xpose.msra.mxu0 0.0
    %1125 = vmatprep.subr.mxu0 0.0
    %1126 = vmatpush1.xpose.msra.mxu0 0.0
    %1127 = vmatprep.subr.mxu0 0.0
    %1128 = vmatpush1.xpose.msra.mxu0 0.0
    %1129 = vmatprep.subr.mxu0 0.0
    %1130 = vmatpush1.xpose.msra.mxu0 0.0
    %1131 = vmatprep.subr.mxu0 0.0
    %1132 = vmatpush1.xpose.msra.mxu0 0.0
    %1133 = vmatprep.subr.mxu0 0.0
    %1134 = vmatpush1.xpose.msra.mxu0 0.0
    %1135 = vmatprep.subr.mxu0 0.0
    %1136 = vmatpush1.xpose.msra.mxu0 0.0
    %1137 = vmatprep.subr.mxu0 0.0
    %1138 = vmatpush1.xpose.msra.mxu0 0.0
    %1139 = vmatprep.subr.mxu0 0.0
    %1140 = vmatpush1.xpose.msra.mxu0 0.0
    %1141 = vmatprep.subr.mxu0 0.0
    %1142 = vmatpush1.xpose.msra.mxu0 0.0
    %1143 = vmatprep.subr.mxu0 0.0
    %1144 = vmatpush1.xpose.msra.mxu0 0.0
    %1145 = vmatprep.subr.mxu0 0.0
    %1146 = vmatpush1.xpose.msra.mxu0 0.0
    %1147 = vmatprep.subr.mxu0 0.0
    %1148 = vmatpush1.xpose.msra.mxu0 0.0
    %1149 = vmatprep.subr.mxu0 0.0
    %1150 = vmatpush1.xpose.msra.mxu0 0.0
    %1151 = vmatprep.subr.mxu0 0.0
    %1152 = vmatpush1.xpose.msra.mxu0 0.0
    %1153 = vmatprep.subr.mxu0 0.0
    %1154 = vmatpush1.xpose.msra.mxu0 0.0
    %1155 = vmatprep.subr.mxu0 0.0
    %1156 = vmatpush1.xpose.msra.mxu0 0.0
    %1157 = vmatprep.subr.mxu0 0.0
    %1158 = vmatpush1.xpose.msra.mxu0 0.0
    %1159 = vmatprep.subr.mxu0 0.0
    %1160 = vmatpush1.xpose.msra.mxu0 0.0
    %1161 = vmatprep.subr.mxu0 0.0
    %1162 = vmatpush1.xpose.msra.mxu0 0.0
    %1163 = vmatprep.mubr.f32.mxu0 0.0
    %1164 = vmatmul.mubr.f32.gmra.mrb[0].mxu0 %v1091
    %v1165 = vpop.f32.mrb[0].mxu0
    %v1166 = vadd.f32 0.0, %v1165
    %v1167 = vpop.f32.mrb[0].mxu0
    %1168 = vmatprep.mubr.f32.mxu0 0.0
    %1169 = vmatmul.mubr.f32.gmra.mrb[0].mxu0 %v1093
    %v1170 = vpop.f32.mrb[0].mxu0
    %v1171 = vadd.f32 0.0, %v1170
    %v1172 = vpop.f32.mrb[0].mxu0
    %1173 = vdwg.mxu0
    %1174 = vrot.lane.b32.xlu0 %v625, 104
    %v1175 = vpop.permute.xlu0 %1174
    %1176 = vrot.lane.b32.xlu0 %v626, 104
    %v1177 = vpop.permute.xlu0 %1176
    %1178 = vrot.lane.b32.xlu0 %v617, 64
    %v1179 = vpop.permute.xlu0 %1178
    %1180 = vrot.lane.b32.xlu0 %v622, 64
    %v1181 = vpop.permute.xlu0 %1180
    %v1182 = vsel %vm633, %v1175, 0
    %v1184 = vsel %vm633, %v1177, 0
    %v1186 = vsel %vm633, %v1179, 0
    %v1188 = vsel %vm633, %v1181, 0
    %1190 = vmatprep.subr.mxu0 0.0
    %1191 = vmatpush1.xpose.msra.mxu0 %v1186
    %1192 = vmatprep.subr.mxu0 0.0
    %1193 = vmatpush1.xpose.msra.mxu0 %v1188
    %1194 = vmatprep.subr.mxu0 0.0
    %1195 = vmatpush1.xpose.msra.mxu0 0.0
    %1196 = vmatprep.subr.mxu0 0.0
    %1197 = vmatpush1.xpose.msra.mxu0 0.0
    %1198 = vmatprep.subr.mxu0 0.0
    %1199 = vmatpush1.xpose.msra.mxu0 0.0
    %1200 = vmatprep.subr.mxu0 0.0
    %1201 = vmatpush1.xpose.msra.mxu0 0.0
    %1202 = vmatprep.subr.mxu0 0.0
    %1203 = vmatpush1.xpose.msra.mxu0 0.0
    %1204 = vmatprep.subr.mxu0 0.0
    %1205 = vmatpush1.xpose.msra.mxu0 0.0
    %1206 = vmatprep.subr.mxu0 0.0
    %1207 = vmatpush1.xpose.msra.mxu0 0.0
    %1208 = vmatprep.subr.mxu0 0.0
    %1209 = vmatpush1.xpose.msra.mxu0 0.0
    %1210 = vmatprep.subr.mxu0 0.0
    %1211 = vmatpush1.xpose.msra.mxu0 0.0
    %1212 = vmatprep.subr.mxu0 0.0
    %1213 = vmatpush1.xpose.msra.mxu0 0.0
    %1214 = vmatprep.subr.mxu0 0.0
    %1215 = vmatpush1.xpose.msra.mxu0 0.0
    %1216 = vmatprep.subr.mxu0 0.0
    %1217 = vmatpush1.xpose.msra.mxu0 0.0
    %1218 = vmatprep.subr.mxu0 0.0
    %1219 = vmatpush1.xpose.msra.mxu0 0.0
    %1220 = vmatprep.subr.mxu0 0.0
    %1221 = vmatpush1.xpose.msra.mxu0 0.0
    %1222 = vmatprep.subr.mxu0 0.0
    %1223 = vmatpush1.xpose.msra.mxu0 0.0
    %1224 = vmatprep.subr.mxu0 0.0
    %1225 = vmatpush1.xpose.msra.mxu0 0.0
    %1226 = vmatprep.subr.mxu0 0.0
    %1227 = vmatpush1.xpose.msra.mxu0 0.0
    %1228 = vmatprep.subr.mxu0 0.0
    %1229 = vmatpush1.xpose.msra.mxu0 0.0
    %1230 = vmatprep.subr.mxu0 0.0
    %1231 = vmatpush1.xpose.msra.mxu0 0.0
    %1232 = vmatprep.subr.mxu0 0.0
    %1233 = vmatpush1.xpose.msra.mxu0 0.0
    %1234 = vmatprep.subr.mxu0 0.0
    %1235 = vmatpush1.xpose.msra.mxu0 0.0
    %1236 = vmatprep.subr.mxu0 0.0
    %1237 = vmatpush1.xpose.msra.mxu0 0.0
    %1238 = vmatprep.subr.mxu0 0.0
    %1239 = vmatpush1.xpose.msra.mxu0 0.0
    %1240 = vmatprep.subr.mxu0 0.0
    %1241 = vmatpush1.xpose.msra.mxu0 0.0
    %1242 = vmatprep.subr.mxu0 0.0
    %1243 = vmatpush1.xpose.msra.mxu0 0.0
    %1244 = vmatprep.subr.mxu0 0.0
    %1245 = vmatpush1.xpose.msra.mxu0 0.0
    %1246 = vmatprep.subr.mxu0 0.0
    %1247 = vmatpush1.xpose.msra.mxu0 0.0
    %1248 = vmatprep.subr.mxu0 0.0
    %1249 = vmatpush1.xpose.msra.mxu0 0.0
    %1250 = vmatprep.subr.mxu0 0.0
    %1251 = vmatpush1.xpose.msra.mxu0 0.0
    %1252 = vmatprep.subr.mxu0 0.0
    %1253 = vmatpush1.xpose.msra.mxu0 0.0
    %1254 = vmatprep.mubr.f32.mxu0 0.0
    %1255 = vmatmul.mubr.f32.gmra.mrb[0].mxu0 %v1182
    %v1256 = vpop.f32.mrb[0].mxu0
    %v1257 = vadd.f32 0.0, %v1256
    %v1258 = vpop.f32.mrb[0].mxu0
    %1259 = vmatprep.mubr.f32.mxu0 0.0
    %1260 = vmatmul.mubr.f32.gmra.mrb[0].mxu0 %v1184
    %v1261 = vpop.f32.mrb[0].mxu0
    %v1262 = vadd.f32 0.0, %v1261
    %v1263 = vpop.f32.mrb[0].mxu0
    %1264 = vdwg.mxu0
    %1265 = vrot.lane.b32.xlu0 %v625, 100
    %v1266 = vpop.permute.xlu0 %1265
    %1267 = vrot.lane.b32.xlu0 %v626, 100
    %v1268 = vpop.permute.xlu0 %1267
    %1269 = vrot.lane.b32.xlu0 %v617, 60
    %v1270 = vpop.permute.xlu0 %1269
    %1271 = vrot.lane.b32.xlu0 %v622, 60
    %v1272 = vpop.permute.xlu0 %1271
    %v1273 = vsel %vm633, %v1266, 0
    %v1275 = vsel %vm633, %v1268, 0
    %v1277 = vsel %vm633, %v1270, 0
    %v1279 = vsel %vm633, %v1272, 0
    %1281 = vmatprep.subr.mxu0 0.0
    %1282 = vmatpush1.xpose.msra.mxu0 %v1277
    %1283 = vmatprep.subr.mxu0 0.0
    %1284 = vmatpush1.xpose.msra.mxu0 %v1279
    %1285 = vmatprep.subr.mxu0 0.0
    %1286 = vmatpush1.xpose.msra.mxu0 0.0
    %1287 = vmatprep.subr.mxu0 0.0
    %1288 = vmatpush1.xpose.msra.mxu0 0.0
    %1289 = vmatprep.subr.mxu0 0.0
    %1290 = vmatpush1.xpose.msra.mxu0 0.0
    %1291 = vmatprep.subr.mxu0 0.0
    %1292 = vmatpush1.xpose.msra.mxu0 0.0
    %1293 = vmatprep.subr.mxu0 0.0
    %1294 = vmatpush1.xpose.msra.mxu0 0.0
    %1295 = vmatprep.subr.mxu0 0.0
    %1296 = vmatpush1.xpose.msra.mxu0 0.0
    %1297 = vmatprep.subr.mxu0 0.0
    %1298 = vmatpush1.xpose.msra.mxu0 0.0
    %1299 = vmatprep.subr.mxu0 0.0
    %1300 = vmatpush1.xpose.msra.mxu0 0.0
    %1301 = vmatprep.subr.mxu0 0.0
    %1302 = vmatpush1.xpose.msra.mxu0 0.0
    %1303 = vmatprep.subr.mxu0 0.0
    %1304 = vmatpush1.xpose.msra.mxu0 0.0
    %1305 = vmatprep.subr.mxu0 0.0
    %1306 = vmatpush1.xpose.msra.mxu0 0.0
    %1307 = vmatprep.subr.mxu0 0.0
    %1308 = vmatpush1.xpose.msra.mxu0 0.0
    %1309 = vmatprep.subr.mxu0 0.0
    %1310 = vmatpush1.xpose.msra.mxu0 0.0
    %1311 = vmatprep.subr.mxu0 0.0
    %1312 = vmatpush1.xpose.msra.mxu0 0.0
    %1313 = vmatprep.subr.mxu0 0.0
    %1314 = vmatpush1.xpose.msra.mxu0 0.0
    %1315 = vmatprep.subr.mxu0 0.0
    %1316 = vmatpush1.xpose.msra.mxu0 0.0
    %1317 = vmatprep.subr.mxu0 0.0
    %1318 = vmatpush1.xpose.msra.mxu0 0.0
    %1319 = vmatprep.subr.mxu0 0.0
    %1320 = vmatpush1.xpose.msra.mxu0 0.0
    %1321 = vmatprep.subr.mxu0 0.0
    %1322 = vmatpush1.xpose.msra.mxu0 0.0
    %1323 = vmatprep.subr.mxu0 0.0
    %1324 = vmatpush1.xpose.msra.mxu0 0.0
    %1325 = vmatprep.subr.mxu0 0.0
    %1326 = vmatpush1.xpose.msra.mxu0 0.0
    %1327 = vmatprep.subr.mxu0 0.0
    %1328 = vmatpush1.xpose.msra.mxu0 0.0
    %1329 = vmatprep.subr.mxu0 0.0
    %1330 = vmatpush1.xpose.msra.mxu0 0.0
    %1331 = vmatprep.subr.mxu0 0.0
    %1332 = vmatpush1.xpose.msra.mxu0 0.0
    %1333 = vmatprep.subr.mxu0 0.0
    %1334 = vmatpush1.xpose.msra.mxu0 0.0
    %1335 = vmatprep.subr.mxu0 0.0
    %1336 = vmatpush1.xpose.msra.mxu0 0.0
    %1337 = vmatprep.subr.mxu0 0.0
    %1338 = vmatpush1.xpose.msra.mxu0 0.0
    %1339 = vmatprep.subr.mxu0 0.0
    %1340 = vmatpush1.xpose.msra.mxu0 0.0
    %1341 = vmatprep.subr.mxu0 0.0
    %1342 = vmatpush1.xpose.msra.mxu0 0.0
    %1343 = vmatprep.subr.mxu0 0.0
    %1344 = vmatpush1.xpose.msra.mxu0 0.0
    %1345 = vmatprep.mubr.f32.mxu0 0.0
    %1346 = vmatmul.mubr.f32.gmra.mrb[0].mxu0 %v1273
    %v1347 = vpop.f32.mrb[0].mxu0
    %v1348 = vadd.f32 0.0, %v1347
    %v1349 = vpop.f32.mrb[0].mxu0
    %1350 = vmatprep.mubr.f32.mxu0 0.0
    %1351 = vmatmul.mubr.f32.gmra.mrb[0].mxu0 %v1275
    %v1352 = vpop.f32.mrb[0].mxu0
    %v1353 = vadd.f32 0.0, %v1352
    %v1354 = vpop.f32.mrb[0].mxu0
    %1355 = vdwg.mxu0
    %1356 = vrot.lane.b32.xlu0 %v625, 96
    %v1357 = vpop.permute.xlu0 %1356
    %1358 = vrot.lane.b32.xlu0 %v626, 96
    %v1359 = vpop.permute.xlu0 %1358
    %1360 = vrot.lane.b32.xlu0 %v617, 56
    %v1361 = vpop.permute.xlu0 %1360
    %1362 = vrot.lane.b32.xlu0 %v622, 56
    %v1363 = vpop.permute.xlu0 %1362
    %v1364 = vsel %vm633, %v1357, 0
    %v1366 = vsel %vm633, %v1359, 0
    %v1368 = vsel %vm633, %v1361, 0
    %v1370 = vsel %vm633, %v1363, 0
    %1372 = vmatprep.subr.mxu0 0.0
    %1373 = vmatpush1.xpose.msra.mxu0 %v1368
    %1374 = vmatprep.subr.mxu0 0.0
    %1375 = vmatpush1.xpose.msra.mxu0 %v1370
    %1376 = vmatprep.subr.mxu0 0.0
    %1377 = vmatpush1.xpose.msra.mxu0 0.0
    %1378 = vmatprep.subr.mxu0 0.0
    %1379 = vmatpush1.xpose.msra.mxu0 0.0
    %1380 = vmatprep.subr.mxu0 0.0
    %1381 = vmatpush1.xpose.msra.mxu0 0.0
    %1382 = vmatprep.subr.mxu0 0.0
    %1383 = vmatpush1.xpose.msra.mxu0 0.0
    %1384 = vmatprep.subr.mxu0 0.0
    %1385 = vmatpush1.xpose.msra.mxu0 0.0
    %1386 = vmatprep.subr.mxu0 0.0
    %1387 = vmatpush1.xpose.msra.mxu0 0.0
    %1388 = vmatprep.subr.mxu0 0.0
    %1389 = vmatpush1.xpose.msra.mxu0 0.0
    %1390 = vmatprep.subr.mxu0 0.0
    %1391 = vmatpush1.xpose.msra.mxu0 0.0
    %1392 = vmatprep.subr.mxu0 0.0
    %1393 = vmatpush1.xpose.msra.mxu0 0.0
    %1394 = vmatprep.subr.mxu0 0.0
    %1395 = vmatpush1.xpose.msra.mxu0 0.0
    %1396 = vmatprep.subr.mxu0 0.0
    %1397 = vmatpush1.xpose.msra.mxu0 0.0
    %1398 = vmatprep.subr.mxu0 0.0
    %1399 = vmatpush1.xpose.msra.mxu0 0.0
    %1400 = vmatprep.subr.mxu0 0.0
    %1401 = vmatpush1.xpose.msra.mxu0 0.0
    %1402 = vmatprep.subr.mxu0 0.0
    %1403 = vmatpush1.xpose.msra.mxu0 0.0
    %1404 = vmatprep.subr.mxu0 0.0
    %1405 = vmatpush1.xpose.msra.mxu0 0.0
    %1406 = vmatprep.subr.mxu0 0.0
    %1407 = vmatpush1.xpose.msra.mxu0 0.0
    %1408 = vmatprep.subr.mxu0 0.0
    %1409 = vmatpush1.xpose.msra.mxu0 0.0
    %1410 = vmatprep.subr.mxu0 0.0
    %1411 = vmatpush1.xpose.msra.mxu0 0.0
    %1412 = vmatprep.subr.mxu0 0.0
    %1413 = vmatpush1.xpose.msra.mxu0 0.0
    %1414 = vmatprep.subr.mxu0 0.0
    %1415 = vmatpush1.xpose.msra.mxu0 0.0
    %1416 = vmatprep.subr.mxu0 0.0
    %1417 = vmatpush1.xpose.msra.mxu0 0.0
    %1418 = vmatprep.subr.mxu0 0.0
    %1419 = vmatpush1.xpose.msra.mxu0 0.0
    %1420 = vmatprep.subr.mxu0 0.0
    %1421 = vmatpush1.xpose.msra.mxu0 0.0
    %1422 = vmatprep.subr.mxu0 0.0
    %1423 = vmatpush1.xpose.msra.mxu0 0.0
    %1424 = vmatprep.subr.mxu0 0.0
    %1425 = vmatpush1.xpose.msra.mxu0 0.0
    %1426 = vmatprep.subr.mxu0 0.0
    %1427 = vmatpush1.xpose.msra.mxu0 0.0
    %1428 = vmatprep.subr.mxu0 0.0
    %1429 = vmatpush1.xpose.msra.mxu0 0.0
    %1430 = vmatprep.subr.mxu0 0.0
    %1431 = vmatpush1.xpose.msra.mxu0 0.0
    %1432 = vmatprep.subr.mxu0 0.0
    %1433 = vmatpush1.xpose.msra.mxu0 0.0
    %1434 = vmatprep.subr.mxu0 0.0
    %1435 = vmatpush1.xpose.msra.mxu0 0.0
    %1436 = vmatprep.mubr.f32.mxu0 0.0
    %1437 = vmatmul.mubr.f32.gmra.mrb[0].mxu0 %v1364
    %v1438 = vpop.f32.mrb[0].mxu0
    %v1439 = vadd.f32 0.0, %v1438
    %v1440 = vpop.f32.mrb[0].mxu0
    %1441 = vmatprep.mubr.f32.mxu0 0.0
    %1442 = vmatmul.mubr.f32.gmra.mrb[0].mxu0 %v1366
    %v1443 = vpop.f32.mrb[0].mxu0
    %v1444 = vadd.f32 0.0, %v1443
    %v1445 = vpop.f32.mrb[0].mxu0
    %1446 = vdwg.mxu0
    %1447 = vrot.lane.b32.xlu0 %v625, 92
    %v1448 = vpop.permute.xlu0 %1447
    %1449 = vrot.lane.b32.xlu0 %v626, 92
    %v1450 = vpop.permute.xlu0 %1449
    %1451 = vrot.lane.b32.xlu0 %v617, 52
    %v1452 = vpop.permute.xlu0 %1451
    %1453 = vrot.lane.b32.xlu0 %v622, 52
    %v1454 = vpop.permute.xlu0 %1453
    %v1455 = vsel %vm633, %v1448, 0
    %v1457 = vsel %vm633, %v1450, 0
    %v1459 = vsel %vm633, %v1452, 0
    %v1461 = vsel %vm633, %v1454, 0
    %1463 = vmatprep.subr.mxu0 0.0
    %1464 = vmatpush1.xpose.msra.mxu0 %v1459
    %1465 = vmatprep.subr.mxu0 0.0
    %1466 = vmatpush1.xpose.msra.mxu0 %v1461
    %1467 = vmatprep.subr.mxu0 0.0
    %1468 = vmatpush1.xpose.msra.mxu0 0.0
    %1469 = vmatprep.subr.mxu0 0.0
    %1470 = vmatpush1.xpose.msra.mxu0 0.0
    %1471 = vmatprep.subr.mxu0 0.0
    %1472 = vmatpush1.xpose.msra.mxu0 0.0
    %1473 = vmatprep.subr.mxu0 0.0
    %1474 = vmatpush1.xpose.msra.mxu0 0.0
    %1475 = vmatprep.subr.mxu0 0.0
    %1476 = vmatpush1.xpose.msra.mxu0 0.0
    %1477 = vmatprep.subr.mxu0 0.0
    %1478 = vmatpush1.xpose.msra.mxu0 0.0
    %1479 = vmatprep.subr.mxu0 0.0
    %1480 = vmatpush1.xpose.msra.mxu0 0.0
    %1481 = vmatprep.subr.mxu0 0.0
    %1482 = vmatpush1.xpose.msra.mxu0 0.0
    %1483 = vmatprep.subr.mxu0 0.0
    %1484 = vmatpush1.xpose.msra.mxu0 0.0
    %1485 = vmatprep.subr.mxu0 0.0
    %1486 = vmatpush1.xpose.msra.mxu0 0.0
    %1487 = vmatprep.subr.mxu0 0.0
    %1488 = vmatpush1.xpose.msra.mxu0 0.0
    %1489 = vmatprep.subr.mxu0 0.0
    %1490 = vmatpush1.xpose.msra.mxu0 0.0
    %1491 = vmatprep.subr.mxu0 0.0
    %1492 = vmatpush1.xpose.msra.mxu0 0.0
    %1493 = vmatprep.subr.mxu0 0.0
    %1494 = vmatpush1.xpose.msra.mxu0 0.0
    %1495 = vmatprep.subr.mxu0 0.0
    %1496 = vmatpush1.xpose.msra.mxu0 0.0
    %1497 = vmatprep.subr.mxu0 0.0
    %1498 = vmatpush1.xpose.msra.mxu0 0.0
    %1499 = vmatprep.subr.mxu0 0.0
    %1500 = vmatpush1.xpose.msra.mxu0 0.0
    %1501 = vmatprep.subr.mxu0 0.0
    %1502 = vmatpush1.xpose.msra.mxu0 0.0
    %1503 = vmatprep.subr.mxu0 0.0
    %1504 = vmatpush1.xpose.msra.mxu0 0.0
    %1505 = vmatprep.subr.mxu0 0.0
    %1506 = vmatpush1.xpose.msra.mxu0 0.0
    %1507 = vmatprep.subr.mxu0 0.0
    %1508 = vmatpush1.xpose.msra.mxu0 0.0
    %1509 = vmatprep.subr.mxu0 0.0
    %1510 = vmatpush1.xpose.msra.mxu0 0.0
    %1511 = vmatprep.subr.mxu0 0.0
    %1512 = vmatpush1.xpose.msra.mxu0 0.0
    %1513 = vmatprep.subr.mxu0 0.0
    %1514 = vmatpush1.xpose.msra.mxu0 0.0
    %1515 = vmatprep.subr.mxu0 0.0
    %1516 = vmatpush1.xpose.msra.mxu0 0.0
    %1517 = vmatprep.subr.mxu0 0.0
    %1518 = vmatpush1.xpose.msra.mxu0 0.0
    %1519 = vmatprep.subr.mxu0 0.0
    %1520 = vmatpush1.xpose.msra.mxu0 0.0
    %1521 = vmatprep.subr.mxu0 0.0
    %1522 = vmatpush1.xpose.msra.mxu0 0.0
    %1523 = vmatprep.subr.mxu0 0.0
    %1524 = vmatpush1.xpose.msra.mxu0 0.0
    %1525 = vmatprep.subr.mxu0 0.0
    %1526 = vmatpush1.xpose.msra.mxu0 0.0
    %1527 = vmatprep.mubr.f32.mxu0 0.0
    %1528 = vmatmul.mubr.f32.gmra.mrb[0].mxu0 %v1455
    %v1529 = vpop.f32.mrb[0].mxu0
    %v1530 = vadd.f32 0.0, %v1529
    %v1531 = vpop.f32.mrb[0].mxu0
    %1532 = vmatprep.mubr.f32.mxu0 0.0
    %1533 = vmatmul.mubr.f32.gmra.mrb[0].mxu0 %v1457
    %v1534 = vpop.f32.mrb[0].mxu0
    %v1535 = vadd.f32 0.0, %v1534
    %v1536 = vpop.f32.mrb[0].mxu0
    %1537 = vdwg.mxu0
    %v1538 = vld [vmem:[%s1 + $0x10] sm:$0xff]
    %v1539 = vld [vmem:[%s1 + $0x18] sm:$0xff]
    %v1540 = vadd.f32 %v711, %v1538
    %v1541 = vadd.f32 %v716, %v1539
    %v1542 = vadd.f32 %v802, %v1538
    %v1543 = vadd.f32 %v807, %v1539
    %v1544 = vadd.f32 %v893, %v1538
    %v1545 = vadd.f32 %v898, %v1539
    %v1546 = vadd.f32 %v984, %v1538
    %v1547 = vadd.f32 %v989, %v1539
    %v1548 = vadd.f32 %v1075, %v1538
    %v1549 = vadd.f32 %v1080, %v1539
    %v1550 = vadd.f32 %v1166, %v1538
    %v1551 = vadd.f32 %v1171, %v1539
    %v1552 = vadd.f32 %v1257, %v1538
    %v1553 = vadd.f32 %v1262, %v1539
    %v1554 = vadd.f32 %v1348, %v1538
    %v1555 = vadd.f32 %v1353, %v1539
    %v1556 = vadd.f32 %v1439, %v1538
    %v1557 = vadd.f32 %v1444, %v1539
    %v1558 = vadd.f32 %v1530, %v1538
    %v1559 = vadd.f32 %v1535, %v1539
    %vm1560 = vcmask 130048
    %v1561 = vsel %vm1560, %v1540, -inf
    %1562 = vmax.xlane.f32.xlu0 %v1561
    %v1563 = vpop.xlane.xlu0 %1562
    %v1564 = vsel %vm1560, %v1541, -inf
    %1565 = vmax.xlane.f32.xlu0 %v1564
    %v1566 = vpop.xlane.xlu0 %1565
    %v1567 = vsel %vm1560, %v1542, -inf
    %1568 = vmax.xlane.f32.xlu0 %v1567
    %v1569 = vpop.xlane.xlu0 %1568
    %v1570 = vsel %vm1560, %v1543, -inf
    %1571 = vmax.xlane.f32.xlu0 %v1570
    %v1572 = vpop.xlane.xlu0 %1571
    %v1573 = vsel %vm1560, %v1544, -inf
    %1574 = vmax.xlane.f32.xlu0 %v1573
    %v1575 = vpop.xlane.xlu0 %1574
    %v1576 = vsel %vm1560, %v1545, -inf
    %1577 = vmax.xlane.f32.xlu0 %v1576
    %v1578 = vpop.xlane.xlu0 %1577
    %v1579 = vsel %vm1560, %v1546, -inf
    %1580 = vmax.xlane.f32.xlu0 %v1579
    %v1581 = vpop.xlane.xlu0 %1580
    %v1582 = vsel %vm1560, %v1547, -inf
    %1583 = vmax.xlane.f32.xlu0 %v1582
    %v1584 = vpop.xlane.xlu0 %1583
    %v1585 = vsel %vm1560, %v1548, -inf
    %1586 = vmax.xlane.f32.xlu0 %v1585
    %v1587 = vpop.xlane.xlu0 %1586
    %v1588 = vsel %vm1560, %v1549, -inf
    %1589 = vmax.xlane.f32.xlu0 %v1588
    %v1590 = vpop.xlane.xlu0 %1589
    %v1591 = vsel %vm1560, %v1550, -inf
    %1592 = vmax.xlane.f32.xlu0 %v1591
    %v1593 = vpop.xlane.xlu0 %1592
    %v1594 = vsel %vm1560, %v1551, -inf
    %1595 = vmax.xlane.f32.xlu0 %v1594
    %v1596 = vpop.xlane.xlu0 %1595
    %v1597 = vsel %vm1560, %v1552, -inf
    %1598 = vmax.xlane.f32.xlu0 %v1597
    %v1599 = vpop.xlane.xlu0 %1598
    %v1600 = vsel %vm1560, %v1553, -inf
    %1601 = vmax.xlane.f32.xlu0 %v1600
    %v1602 = vpop.xlane.xlu0 %1601
    %v1603 = vsel %vm1560, %v1554, -inf
    %1604 = vmax.xlane.f32.xlu0 %v1603
    %v1605 = vpop.xlane.xlu0 %1604
    %v1606 = vsel %vm1560, %v1555, -inf
    %1607 = vmax.xlane.f32.xlu0 %v1606
    %v1608 = vpop.xlane.xlu0 %1607
    %v1609 = vsel %vm1560, %v1556, -inf
    %1610 = vmax.xlane.f32.xlu0 %v1609
    %v1611 = vpop.xlane.xlu0 %1610
    %v1612 = vsel %vm1560, %v1557, -inf
    %1613 = vmax.xlane.f32.xlu0 %v1612
    %v1614 = vpop.xlane.xlu0 %1613
    %v1615 = vsel %vm1560, %v1558, -inf
    %1616 = vmax.xlane.f32.xlu0 %v1615
    %v1617 = vpop.xlane.xlu0 %1616
    %v1618 = vsel %vm1560, %v1559, -inf
    %1619 = vmax.xlane.f32.xlu0 %v1618
    %v1620 = vpop.xlane.xlu0 %1619
    %v1621 = vsub.f32 %v1540, %v1563
    %v1622 = vsub.f32 %v1541, %v1566
    %v1623 = vsub.f32 %v1542, %v1569
    %v1624 = vsub.f32 %v1543, %v1572
    %v1625 = vsub.f32 %v1544, %v1575
    %v1626 = vsub.f32 %v1545, %v1578
    %v1627 = vsub.f32 %v1546, %v1581
    %v1628 = vsub.f32 %v1547, %v1584
    %v1629 = vsub.f32 %v1548, %v1587
    %v1630 = vsub.f32 %v1549, %v1590
    %v1631 = vsub.f32 %v1550, %v1593
    %v1632 = vsub.f32 %v1551, %v1596
    %v1633 = vsub.f32 %v1552, %v1599
    %v1634 = vsub.f32 %v1553, %v1602
    %v1635 = vsub.f32 %v1554, %v1605
    %v1636 = vsub.f32 %v1555, %v1608
    %v1637 = vsub.f32 %v1556, %v1611
    %v1638 = vsub.f32 %v1557, %v1614
    %v1639 = vsub.f32 %v1558, %v1617
    %v1640 = vsub.f32 %v1559, %v1620
    %v1641 = vmul.f32 %v1621, 1.442695
    %v1642 = vpow.pop %v1641
    %v1643 = vmul.f32 %v1622, 1.442695
    %v1644 = vpow.pop %v1643
    %v1645 = vmul.f32 %v1623, 1.442695
    %v1646 = vpow.pop %v1645
    %v1647 = vmul.f32 %v1624, 1.442695
    %v1648 = vpow.pop %v1647
    %v1649 = vmul.f32 %v1625, 1.442695
    %v1650 = vpow.pop %v1649
    %v1651 = vmul.f32 %v1626, 1.442695
    %v1652 = vpow.pop %v1651
    %v1653 = vmul.f32 %v1627, 1.442695
    %v1654 = vpow.pop %v1653
    %v1655 = vmul.f32 %v1628, 1.442695
    %v1656 = vpow.pop %v1655
    %v1657 = vmul.f32 %v1629, 1.442695
    %v1658 = vpow.pop %v1657
    %v1659 = vmul.f32 %v1630, 1.442695
    %v1660 = vpow.pop %v1659
    %v1661 = vmul.f32 %v1631, 1.442695
    %v1662 = vpow.pop %v1661
    %v1663 = vmul.f32 %v1632, 1.442695
    %v1664 = vpow.pop %v1663
    %v1665 = vmul.f32 %v1633, 1.442695
    %v1666 = vpow.pop %v1665
    %v1667 = vmul.f32 %v1634, 1.442695
    %v1668 = vpow.pop %v1667
    %v1669 = vmul.f32 %v1635, 1.442695
    %v1670 = vpow.pop %v1669
    %v1671 = vmul.f32 %v1636, 1.442695
    %v1672 = vpow.pop %v1671
    %v1673 = vmul.f32 %v1637, 1.442695
    %v1674 = vpow.pop %v1673
    %v1675 = vmul.f32 %v1638, 1.442695
    %v1676 = vpow.pop %v1675
    %v1677 = vmul.f32 %v1639, 1.442695
    %v1678 = vpow.pop %v1677
    %v1679 = vmul.f32 %v1640, 1.442695
    %v1680 = vpow.pop %v1679
    %v1681 = vsel %vm1560, %v1642, 0.0
    %1682 = vadd.xlane.f32.xlu0 %v1681
    %v1683 = vpop.xlane.xlu0 %1682
    %v1684 = vsel %vm1560, %v1644, 0.0
    %1685 = vadd.xlane.f32.xlu0 %v1684
    %v1686 = vpop.xlane.xlu0 %1685
    %v1687 = vsel %vm1560, %v1646, 0.0
    %1688 = vadd.xlane.f32.xlu0 %v1687
    %v1689 = vpop.xlane.xlu0 %1688
    %v1690 = vsel %vm1560, %v1648, 0.0
    %1691 = vadd.xlane.f32.xlu0 %v1690
    %v1692 = vpop.xlane.xlu0 %1691
    %v1693 = vsel %vm1560, %v1650, 0.0
    %1694 = vadd.xlane.f32.xlu0 %v1693
    %v1695 = vpop.xlane.xlu0 %1694
    %v1696 = vsel %vm1560, %v1652, 0.0
    %1697 = vadd.xlane.f32.xlu0 %v1696
    %v1698 = vpop.xlane.xlu0 %1697
    %v1699 = vsel %vm1560, %v1654, 0.0
    %1700 = vadd.xlane.f32.xlu0 %v1699
    %v1701 = vpop.xlane.xlu0 %1700
    %v1702 = vsel %vm1560, %v1656, 0.0
    %1703 = vadd.xlane.f32.xlu0 %v1702
    %v1704 = vpop.xlane.xlu0 %1703
    %v1705 = vsel %vm1560, %v1658, 0.0
    %1706 = vadd.xlane.f32.xlu0 %v1705
    %v1707 = vpop.xlane.xlu0 %1706
    %v1708 = vsel %vm1560, %v1660, 0.0
    %1709 = vadd.xlane.f32.xlu0 %v1708
    %v1710 = vpop.xlane.xlu0 %1709
    %v1711 = vsel %vm1560, %v1662, 0.0
    %1712 = vadd.xlane.f32.xlu0 %v1711
    %v1713 = vpop.xlane.xlu0 %1712
    %v1714 = vsel %vm1560, %v1664, 0.0
    %1715 = vadd.xlane.f32.xlu0 %v1714
    %v1716 = vpop.xlane.xlu0 %1715
    %v1717 = vsel %vm1560, %v1666, 0.0
    %1718 = vadd.xlane.f32.xlu0 %v1717
    %v1719 = vpop.xlane.xlu0 %1718
    %v1720 = vsel %vm1560, %v1668, 0.0
    %1721 = vadd.xlane.f32.xlu0 %v1720
    %v1722 = vpop.xlane.xlu0 %1721
    %v1723 = vsel %vm1560, %v1670, 0.0
    %1724 = vadd.xlane.f32.xlu0 %v1723
    %v1725 = vpop.xlane.xlu0 %1724
    %v1726 = vsel %vm1560, %v1672, 0.0
    %1727 = vadd.xlane.f32.xlu0 %v1726
    %v1728 = vpop.xlane.xlu0 %1727
    %v1729 = vsel %vm1560, %v1674, 0.0
    %1730 = vadd.xlane.f32.xlu0 %v1729
    %v1731 = vpop.xlane.xlu0 %1730
    %v1732 = vsel %vm1560, %v1676, 0.0
    %1733 = vadd.xlane.f32.xlu0 %v1732
    %v1734 = vpop.xlane.xlu0 %1733
    %v1735 = vsel %vm1560, %v1678, 0.0
    %1736 = vadd.xlane.f32.xlu0 %v1735
    %v1737 = vpop.xlane.xlu0 %1736
    %v1738 = vsel %vm1560, %v1680, 0.0
    %1739 = vadd.xlane.f32.xlu0 %v1738
    %v1740 = vpop.xlane.xlu0 %1739
    %v1741 = vrcp.pop %v1683
    %v1742 = vrcp.pop %v1686
    %v1743 = vrcp.pop %v1689
    %v1744 = vrcp.pop %v1692
    %v1745 = vrcp.pop %v1695
    %v1746 = vrcp.pop %v1698
    %v1747 = vrcp.pop %v1701
    %v1748 = vrcp.pop %v1704
    %v1749 = vrcp.pop %v1707
    %v1750 = vrcp.pop %v1710
    %v1751 = vrcp.pop %v1713
    %v1752 = vrcp.pop %v1716
    %v1753 = vrcp.pop %v1719
    %v1754 = vrcp.pop %v1722
    %v1755 = vrcp.pop %v1725
    %v1756 = vrcp.pop %v1728
    %v1757 = vrcp.pop %v1731
    %v1758 = vrcp.pop %v1734
    %v1759 = vrcp.pop %v1737
    %v1760 = vrcp.pop %v1740
    %v1761 = vmul.f32 %v1642, %v1741
    %v1762 = vmul.f32 %v1644, %v1742
    %v1763 = vmul.f32 %v1646, %v1743
    %v1764 = vmul.f32 %v1648, %v1744
    %v1765 = vmul.f32 %v1650, %v1745
    %v1766 = vmul.f32 %v1652, %v1746
    %v1767 = vmul.f32 %v1654, %v1747
    %v1768 = vmul.f32 %v1656, %v1748
    %v1769 = vmul.f32 %v1658, %v1749
    %v1770 = vmul.f32 %v1660, %v1750
    %v1771 = vmul.f32 %v1662, %v1751
    %v1772 = vmul.f32 %v1664, %v1752
    %v1773 = vmul.f32 %v1666, %v1753
    %v1774 = vmul.f32 %v1668, %v1754
    %v1775 = vmul.f32 %v1670, %v1755
    %v1776 = vmul.f32 %v1672, %v1756
    %v1777 = vmul.f32 %v1674, %v1757
    %v1778 = vmul.f32 %v1676, %v1758
    %v1779 = vmul.f32 %v1678, %v1759
    %v1780 = vmul.f32 %v1680, %v1760
    %1781 = vrot.lane.b32.xlu0 %v617, 48
    %v1782 = vpop.permute.xlu0 %1781
    %1783 = vrot.lane.b32.xlu0 %v622, 48
    %v1784 = vpop.permute.xlu0 %1783
    %v1788 = vsel %vm1560, %v1761, 0
    %v1791 = vsel %vm1560, %v1762, 0
    %1793 = vmatprep.subr.mxu0 0.0
    %1794 = vmatpush1.msra.mxu0 %v1782
    %1795 = vmatprep.subr.mxu0 0.0
    %1796 = vmatpush1.msra.mxu0 %v1784
    %1797 = vmatprep.subr.mxu0 0.0
    %1798 = vmatpush1.msra.mxu0 0.0
    %1799 = vmatprep.subr.mxu0 0.0
    %1800 = vmatpush1.msra.mxu0 0.0
    %1801 = vmatprep.subr.mxu0 0.0
    %1802 = vmatpush1.msra.mxu0 0.0
    %1803 = vmatprep.subr.mxu0 0.0
    %1804 = vmatpush1.msra.mxu0 0.0
    %1805 = vmatprep.subr.mxu0 0.0
    %1806 = vmatpush1.msra.mxu0 0.0
    %1807 = vmatprep.subr.mxu0 0.0
    %1808 = vmatpush1.msra.mxu0 0.0
    %1809 = vmatprep.subr.mxu0 0.0
    %1810 = vmatpush1.msra.mxu0 0.0
    %1811 = vmatprep.subr.mxu0 0.0
    %1812 = vmatpush1.msra.mxu0 0.0
    %1813 = vmatprep.subr.mxu0 0.0
    %1814 = vmatpush1.msra.mxu0 0.0
    %1815 = vmatprep.subr.mxu0 0.0
    %1816 = vmatpush1.msra.mxu0 0.0
    %1817 = vmatprep.subr.mxu0 0.0
    %1818 = vmatpush1.msra.mxu0 0.0
    %1819 = vmatprep.subr.mxu0 0.0
    %1820 = vmatpush1.msra.mxu0 0.0
    %1821 = vmatprep.subr.mxu0 0.0
    %1822 = vmatpush1.msra.mxu0 0.0
    %1823 = vmatprep.subr.mxu0 0.0
    %1824 = vmatpush1.msra.mxu0 0.0
    %1825 = vmatprep.subr.mxu0 0.0
    %1826 = vmatpush1.msra.mxu0 0.0
    %1827 = vmatprep.subr.mxu0 0.0
    %1828 = vmatpush1.msra.mxu0 0.0
    %1829 = vmatprep.subr.mxu0 0.0
    %1830 = vmatpush1.msra.mxu0 0.0
    %1831 = vmatprep.subr.mxu0 0.0
    %1832 = vmatpush1.msra.mxu0 0.0
    %1833 = vmatprep.subr.mxu0 0.0
    %1834 = vmatpush1.msra.mxu0 0.0
    %1835 = vmatprep.subr.mxu0 0.0
    %1836 = vmatpush1.msra.mxu0 0.0
    %1837 = vmatprep.subr.mxu0 0.0
    %1838 = vmatpush1.msra.mxu0 0.0
    %1839 = vmatprep.subr.mxu0 0.0
    %1840 = vmatpush1.msra.mxu0 0.0
    %1841 = vmatprep.subr.mxu0 0.0
    %1842 = vmatpush1.msra.mxu0 0.0
    %1843 = vmatprep.subr.mxu0 0.0
    %1844 = vmatpush1.msra.mxu0 0.0
    %1845 = vmatprep.subr.mxu0 0.0
    %1846 = vmatpush1.msra.mxu0 0.0
    %1847 = vmatprep.subr.mxu0 0.0
    %1848 = vmatpush1.msra.mxu0 0.0
    %1849 = vmatprep.subr.mxu0 0.0
    %1850 = vmatpush1.msra.mxu0 0.0
    %1851 = vmatprep.subr.mxu0 0.0
    %1852 = vmatpush1.msra.mxu0 0.0
    %1853 = vmatprep.subr.mxu0 0.0
    %1854 = vmatpush1.msra.mxu0 0.0
    %1855 = vmatprep.subr.mxu0 0.0
    %1856 = vmatpush1.msra.mxu0 0.0
    %1857 = vmatprep.mubr.f32.mxu0 0.0
    %1858 = vmatmul.mubr.f32.gmra.mrb[0].mxu0 %v1788
    %v1859 = vpop.f32.mrb[0].mxu0
    %v1860 = vadd.f32 0.0, %v1859
    %v1861 = vpop.f32.mrb[0].mxu0
    %1862 = vmatprep.mubr.f32.mxu0 0.0
    %1863 = vmatmul.mubr.f32.gmra.mrb[0].mxu0 %v1791
    %v1864 = vpop.f32.mrb[0].mxu0
    %v1865 = vadd.f32 0.0, %v1864
    %v1866 = vpop.f32.mrb[0].mxu0
    %1867 = vdwg.mxu0
    %1868 = vrot.lane.b32.xlu0 %v617, 44
    %v1869 = vpop.permute.xlu0 %1868
    %1870 = vrot.lane.b32.xlu0 %v622, 44
    %v1871 = vpop.permute.xlu0 %1870
    %v1875 = vsel %vm1560, %v1763, 0
    %v1878 = vsel %vm1560, %v1764, 0
    %1880 = vmatprep.subr.mxu0 0.0
    %1881 = vmatpush1.msra.mxu0 %v1869
    %1882 = vmatprep.subr.mxu0 0.0
    %1883 = vmatpush1.msra.mxu0 %v1871
    %1884 = vmatprep.subr.mxu0 0.0
    %1885 = vmatpush1.msra.mxu0 0.0
    %1886 = vmatprep.subr.mxu0 0.0
    %1887 = vmatpush1.msra.mxu0 0.0
    %1888 = vmatprep.subr.mxu0 0.0
    %1889 = vmatpush1.msra.mxu0 0.0
    %1890 = vmatprep.subr.mxu0 0.0
    %1891 = vmatpush1.msra.mxu0 0.0
    %1892 = vmatprep.subr.mxu0 0.0
    %1893 = vmatpush1.msra.mxu0 0.0
    %1894 = vmatprep.subr.mxu0 0.0
    %1895 = vmatpush1.msra.mxu0 0.0
    %1896 = vmatprep.subr.mxu0 0.0
    %1897 = vmatpush1.msra.mxu0 0.0
    %1898 = vmatprep.subr.mxu0 0.0
    %1899 = vmatpush1.msra.mxu0 0.0
    %1900 = vmatprep.subr.mxu0 0.0
    %1901 = vmatpush1.msra.mxu0 0.0
    %1902 = vmatprep.subr.mxu0 0.0
    %1903 = vmatpush1.msra.mxu0 0.0
    %1904 = vmatprep.subr.mxu0 0.0
    %1905 = vmatpush1.msra.mxu0 0.0
    %1906 = vmatprep.subr.mxu0 0.0
    %1907 = vmatpush1.msra.mxu0 0.0
    %1908 = vmatprep.subr.mxu0 0.0
    %1909 = vmatpush1.msra.mxu0 0.0
    %1910 = vmatprep.subr.mxu0 0.0
    %1911 = vmatpush1.msra.mxu0 0.0
    %1912 = vmatprep.subr.mxu0 0.0
    %1913 = vmatpush1.msra.mxu0 0.0
    %1914 = vmatprep.subr.mxu0 0.0
    %1915 = vmatpush1.msra.mxu0 0.0
    %1916 = vmatprep.subr.mxu0 0.0
    %1917 = vmatpush1.msra.mxu0 0.0
    %1918 = vmatprep.subr.mxu0 0.0
    %1919 = vmatpush1.msra.mxu0 0.0
    %1920 = vmatprep.subr.mxu0 0.0
    %1921 = vmatpush1.msra.mxu0 0.0
    %1922 = vmatprep.subr.mxu0 0.0
    %1923 = vmatpush1.msra.mxu0 0.0
    %1924 = vmatprep.subr.mxu0 0.0
    %1925 = vmatpush1.msra.mxu0 0.0
    %1926 = vmatprep.subr.mxu0 0.0
    %1927 = vmatpush1.msra.mxu0 0.0
    %1928 = vmatprep.subr.mxu0 0.0
    %1929 = vmatpush1.msra.mxu0 0.0
    %1930 = vmatprep.subr.mxu0 0.0
    %1931 = vmatpush1.msra.mxu0 0.0
    %1932 = vmatprep.subr.mxu0 0.0
    %1933 = vmatpush1.msra.mxu0 0.0
    %1934 = vmatprep.subr.mxu0 0.0
    %1935 = vmatpush1.msra.mxu0 0.0
    %1936 = vmatprep.subr.mxu0 0.0
    %1937 = vmatpush1.msra.mxu0 0.0
    %1938 = vmatprep.subr.mxu0 0.0
    %1939 = vmatpush1.msra.mxu0 0.0
    %1940 = vmatprep.subr.mxu0 0.0
    %1941 = vmatpush1.msra.mxu0 0.0
    %1942 = vmatprep.subr.mxu0 0.0
    %1943 = vmatpush1.msra.mxu0 0.0
    %1944 = vmatprep.mubr.f32.mxu0 0.0
    %1945 = vmatmul.mubr.f32.gmra.mrb[0].mxu0 %v1875
    %v1946 = vpop.f32.mrb[0].mxu0
    %v1947 = vadd.f32 0.0, %v1946
    %v1948 = vpop.f32.mrb[0].mxu0
    %1949 = vmatprep.mubr.f32.mxu0 0.0
    %1950 = vmatmul.mubr.f32.gmra.mrb[0].mxu0 %v1878
    %v1951 = vpop.f32.mrb[0].mxu0
    %v1952 = vadd.f32 0.0, %v1951
    %v1953 = vpop.f32.mrb[0].mxu0
    %1954 = vdwg.mxu0
    %1955 = vrot.lane.b32.xlu0 %v617, 40
    %v1956 = vpop.permute.xlu0 %1955
    %1957 = vrot.lane.b32.xlu0 %v622, 40
    %v1958 = vpop.permute.xlu0 %1957
    %v1962 = vsel %vm1560, %v1765, 0
    %v1965 = vsel %vm1560, %v1766, 0
    %1967 = vmatprep.subr.mxu0 0.0
    %1968 = vmatpush1.msra.mxu0 %v1956
    %1969 = vmatprep.subr.mxu0 0.0
    %1970 = vmatpush1.msra.mxu0 %v1958
    %1971 = vmatprep.subr.mxu0 0.0
    %1972 = vmatpush1.msra.mxu0 0.0
    %1973 = vmatprep.subr.mxu0 0.0
    %1974 = vmatpush1.msra.mxu0 0.0
    %1975 = vmatprep.subr.mxu0 0.0
    %1976 = vmatpush1.msra.mxu0 0.0
    %1977 = vmatprep.subr.mxu0 0.0
    %1978 = vmatpush1.msra.mxu0 0.0
    %1979 = vmatprep.subr.mxu0 0.0
    %1980 = vmatpush1.msra.mxu0 0.0
    %1981 = vmatprep.subr.mxu0 0.0
    %1982 = vmatpush1.msra.mxu0 0.0
    %1983 = vmatprep.subr.mxu0 0.0
    %1984 = vmatpush1.msra.mxu0 0.0
    %1985 = vmatprep.subr.mxu0 0.0
    %1986 = vmatpush1.msra.mxu0 0.0
    %1987 = vmatprep.subr.mxu0 0.0
    %1988 = vmatpush1.msra.mxu0 0.0
    %1989 = vmatprep.subr.mxu0 0.0
    %1990 = vmatpush1.msra.mxu0 0.0
    %1991 = vmatprep.subr.mxu0 0.0
    %1992 = vmatpush1.msra.mxu0 0.0
    %1993 = vmatprep.subr.mxu0 0.0
    %1994 = vmatpush1.msra.mxu0 0.0
    %1995 = vmatprep.subr.mxu0 0.0
    %1996 = vmatpush1.msra.mxu0 0.0
    %1997 = vmatprep.subr.mxu0 0.0
    %1998 = vmatpush1.msra.mxu0 0.0
    %1999 = vmatprep.subr.mxu0 0.0
    %2000 = vmatpush1.msra.mxu0 0.0
    %2001 = vmatprep.subr.mxu0 0.0
    %2002 = vmatpush1.msra.mxu0 0.0
    %2003 = vmatprep.subr.mxu0 0.0
    %2004 = vmatpush1.msra.mxu0 0.0
    %2005 = vmatprep.subr.mxu0 0.0
    %2006 = vmatpush1.msra.mxu0 0.0
    %2007 = vmatprep.subr.mxu0 0.0
    %2008 = vmatpush1.msra.mxu0 0.0
    %2009 = vmatprep.subr.mxu0 0.0
    %2010 = vmatpush1.msra.mxu0 0.0
    %2011 = vmatprep.subr.mxu0 0.0
    %2012 = vmatpush1.msra.mxu0 0.0
    %2013 = vmatprep.subr.mxu0 0.0
    %2014 = vmatpush1.msra.mxu0 0.0
    %2015 = vmatprep.subr.mxu0 0.0
    %2016 = vmatpush1.msra.mxu0 0.0
    %2017 = vmatprep.subr.mxu0 0.0
    %2018 = vmatpush1.msra.mxu0 0.0
    %2019 = vmatprep.subr.mxu0 0.0
    %2020 = vmatpush1.msra.mxu0 0.0
    %2021 = vmatprep.subr.mxu0 0.0
    %2022 = vmatpush1.msra.mxu0 0.0
    %2023 = vmatprep.subr.mxu0 0.0
    %2024 = vmatpush1.msra.mxu0 0.0
    %2025 = vmatprep.subr.mxu0 0.0
    %2026 = vmatpush1.msra.mxu0 0.0
    %2027 = vmatprep.subr.mxu0 0.0
    %2028 = vmatpush1.msra.mxu0 0.0
    %2029 = vmatprep.subr.mxu0 0.0
    %2030 = vmatpush1.msra.mxu0 0.0
    %2031 = vmatprep.mubr.f32.mxu0 0.0
    %2032 = vmatmul.mubr.f32.gmra.mrb[0].mxu0 %v1962
    %v2033 = vpop.f32.mrb[0].mxu0
    %v2034 = vadd.f32 0.0, %v2033
    %v2035 = vpop.f32.mrb[0].mxu0
    %2036 = vmatprep.mubr.f32.mxu0 0.0
    %2037 = vmatmul.mubr.f32.gmra.mrb[0].mxu0 %v1965
    %v2038 = vpop.f32.mrb[0].mxu0
    %v2039 = vadd.f32 0.0, %v2038
    %v2040 = vpop.f32.mrb[0].mxu0
    %2041 = vdwg.mxu0
    %2042 = vrot.lane.b32.xlu0 %v617, 36
    %v2043 = vpop.permute.xlu0 %2042
    %2044 = vrot.lane.b32.xlu0 %v622, 36
    %v2045 = vpop.permute.xlu0 %2044
    %v2049 = vsel %vm1560, %v1767, 0
    %v2052 = vsel %vm1560, %v1768, 0
    %2054 = vmatprep.subr.mxu0 0.0
    %2055 = vmatpush1.msra.mxu0 %v2043
    %2056 = vmatprep.subr.mxu0 0.0
    %2057 = vmatpush1.msra.mxu0 %v2045
    %2058 = vmatprep.subr.mxu0 0.0
    %2059 = vmatpush1.msra.mxu0 0.0
    %2060 = vmatprep.subr.mxu0 0.0
    %2061 = vmatpush1.msra.mxu0 0.0
    %2062 = vmatprep.subr.mxu0 0.0
    %2063 = vmatpush1.msra.mxu0 0.0
    %2064 = vmatprep.subr.mxu0 0.0
    %2065 = vmatpush1.msra.mxu0 0.0
    %2066 = vmatprep.subr.mxu0 0.0
    %2067 = vmatpush1.msra.mxu0 0.0
    %2068 = vmatprep.subr.mxu0 0.0
    %2069 = vmatpush1.msra.mxu0 0.0
    %2070 = vmatprep.subr.mxu0 0.0
    %2071 = vmatpush1.msra.mxu0 0.0
    %2072 = vmatprep.subr.mxu0 0.0
    %2073 = vmatpush1.msra.mxu0 0.0
    %2074 = vmatprep.subr.mxu0 0.0
    %2075 = vmatpush1.msra.mxu0 0.0
    %2076 = vmatprep.subr.mxu0 0.0
    %2077 = vmatpush1.msra.mxu0 0.0
    %2078 = vmatprep.subr.mxu0 0.0
    %2079 = vmatpush1.msra.mxu0 0.0
    %2080 = vmatprep.subr.mxu0 0.0
    %2081 = vmatpush1.msra.mxu0 0.0
    %2082 = vmatprep.subr.mxu0 0.0
    %2083 = vmatpush1.msra.mxu0 0.0
    %2084 = vmatprep.subr.mxu0 0.0
    %2085 = vmatpush1.msra.mxu0 0.0
    %2086 = vmatprep.subr.mxu0 0.0
    %2087 = vmatpush1.msra.mxu0 0.0
    %2088 = vmatprep.subr.mxu0 0.0
    %2089 = vmatpush1.msra.mxu0 0.0
    %2090 = vmatprep.subr.mxu0 0.0
    %2091 = vmatpush1.msra.mxu0 0.0
    %2092 = vmatprep.subr.mxu0 0.0
    %2093 = vmatpush1.msra.mxu0 0.0
    %2094 = vmatprep.subr.mxu0 0.0
    %2095 = vmatpush1.msra.mxu0 0.0
    %2096 = vmatprep.subr.mxu0 0.0
    %2097 = vmatpush1.msra.mxu0 0.0
    %2098 = vmatprep.subr.mxu0 0.0
    %2099 = vmatpush1.msra.mxu0 0.0
    %2100 = vmatprep.subr.mxu0 0.0
    %2101 = vmatpush1.msra.mxu0 0.0
    %2102 = vmatprep.subr.mxu0 0.0
    %2103 = vmatpush1.msra.mxu0 0.0
    %2104 = vmatprep.subr.mxu0 0.0
    %2105 = vmatpush1.msra.mxu0 0.0
    %2106 = vmatprep.subr.mxu0 0.0
    %2107 = vmatpush1.msra.mxu0 0.0
    %2108 = vmatprep.subr.mxu0 0.0
    %2109 = vmatpush1.msra.mxu0 0.0
    %2110 = vmatprep.subr.mxu0 0.0
    %2111 = vmatpush1.msra.mxu0 0.0
    %2112 = vmatprep.subr.mxu0 0.0
    %2113 = vmatpush1.msra.mxu0 0.0
    %2114 = vmatprep.subr.mxu0 0.0
    %2115 = vmatpush1.msra.mxu0 0.0
    %2116 = vmatprep.subr.mxu0 0.0
    %2117 = vmatpush1.msra.mxu0 0.0
    %2118 = vmatprep.mubr.f32.mxu0 0.0
    %2119 = vmatmul.mubr.f32.gmra.mrb[0].mxu0 %v2049
    %v2120 = vpop.f32.mrb[0].mxu0
    %v2121 = vadd.f32 0.0, %v2120
    %v2122 = vpop.f32.mrb[0].mxu0
    %2123 = vmatprep.mubr.f32.mxu0 0.0
    %2124 = vmatmul.mubr.f32.gmra.mrb[0].mxu0 %v2052
    %v2125 = vpop.f32.mrb[0].mxu0
    %v2126 = vadd.f32 0.0, %v2125
    %v2127 = vpop.f32.mrb[0].mxu0
    %2128 = vdwg.mxu0
    %2129 = vrot.lane.b32.xlu0 %v617, 32
    %v2130 = vpop.permute.xlu0 %2129
    %2131 = vrot.lane.b32.xlu0 %v622, 32
    %v2132 = vpop.permute.xlu0 %2131
    %v2136 = vsel %vm1560, %v1769, 0
    %v2139 = vsel %vm1560, %v1770, 0
    %2141 = vmatprep.subr.mxu0 0.0
    %2142 = vmatpush1.msra.mxu0 %v2130
    %2143 = vmatprep.subr.mxu0 0.0
    %2144 = vmatpush1.msra.mxu0 %v2132
    %2145 = vmatprep.subr.mxu0 0.0
    %2146 = vmatpush1.msra.mxu0 0.0
    %2147 = vmatprep.subr.mxu0 0.0
    %2148 = vmatpush1.msra.mxu0 0.0
    %2149 = vmatprep.subr.mxu0 0.0
    %2150 = vmatpush1.msra.mxu0 0.0
    %2151 = vmatprep.subr.mxu0 0.0
    %2152 = vmatpush1.msra.mxu0 0.0
    %2153 = vmatprep.subr.mxu0 0.0
    %2154 = vmatpush1.msra.mxu0 0.0
    %2155 = vmatprep.subr.mxu0 0.0
    %2156 = vmatpush1.msra.mxu0 0.0
    %2157 = vmatprep.subr.mxu0 0.0
    %2158 = vmatpush1.msra.mxu0 0.0
    %2159 = vmatprep.subr.mxu0 0.0
    %2160 = vmatpush1.msra.mxu0 0.0
    %2161 = vmatprep.subr.mxu0 0.0
    %2162 = vmatpush1.msra.mxu0 0.0
    %2163 = vmatprep.subr.mxu0 0.0
    %2164 = vmatpush1.msra.mxu0 0.0
    %2165 = vmatprep.subr.mxu0 0.0
    %2166 = vmatpush1.msra.mxu0 0.0
    %2167 = vmatprep.subr.mxu0 0.0
    %2168 = vmatpush1.msra.mxu0 0.0
    %2169 = vmatprep.subr.mxu0 0.0
    %2170 = vmatpush1.msra.mxu0 0.0
    %2171 = vmatprep.subr.mxu0 0.0
    %2172 = vmatpush1.msra.mxu0 0.0
    %2173 = vmatprep.subr.mxu0 0.0
    %2174 = vmatpush1.msra.mxu0 0.0
    %2175 = vmatprep.subr.mxu0 0.0
    %2176 = vmatpush1.msra.mxu0 0.0
    %2177 = vmatprep.subr.mxu0 0.0
    %2178 = vmatpush1.msra.mxu0 0.0
    %2179 = vmatprep.subr.mxu0 0.0
    %2180 = vmatpush1.msra.mxu0 0.0
    %2181 = vmatprep.subr.mxu0 0.0
    %2182 = vmatpush1.msra.mxu0 0.0
    %2183 = vmatprep.subr.mxu0 0.0
    %2184 = vmatpush1.msra.mxu0 0.0
    %2185 = vmatprep.subr.mxu0 0.0
    %2186 = vmatpush1.msra.mxu0 0.0
    %2187 = vmatprep.subr.mxu0 0.0
    %2188 = vmatpush1.msra.mxu0 0.0
    %2189 = vmatprep.subr.mxu0 0.0
    %2190 = vmatpush1.msra.mxu0 0.0
    %2191 = vmatprep.subr.mxu0 0.0
    %2192 = vmatpush1.msra.mxu0 0.0
    %2193 = vmatprep.subr.mxu0 0.0
    %2194 = vmatpush1.msra.mxu0 0.0
    %2195 = vmatprep.subr.mxu0 0.0
    %2196 = vmatpush1.msra.mxu0 0.0
    %2197 = vmatprep.subr.mxu0 0.0
    %2198 = vmatpush1.msra.mxu0 0.0
    %2199 = vmatprep.subr.mxu0 0.0
    %2200 = vmatpush1.msra.mxu0 0.0
    %2201 = vmatprep.subr.mxu0 0.0
    %2202 = vmatpush1.msra.mxu0 0.0
    %2203 = vmatprep.subr.mxu0 0.0
    %2204 = vmatpush1.msra.mxu0 0.0
    %2205 = vmatprep.mubr.f32.mxu0 0.0
    %2206 = vmatmul.mubr.f32.gmra.mrb[0].mxu0 %v2136
    %v2207 = vpop.f32.mrb[0].mxu0
    %v2208 = vadd.f32 0.0, %v2207
    %v2209 = vpop.f32.mrb[0].mxu0
    %2210 = vmatprep.mubr.f32.mxu0 0.0
    %2211 = vmatmul.mubr.f32.gmra.mrb[0].mxu0 %v2139
    %v2212 = vpop.f32.mrb[0].mxu0
    %v2213 = vadd.f32 0.0, %v2212
    %v2214 = vpop.f32.mrb[0].mxu0
    %2215 = vdwg.mxu0
    %2216 = vrot.lane.b32.xlu0 %v617, 28
    %v2217 = vpop.permute.xlu0 %2216
    %2218 = vrot.lane.b32.xlu0 %v622, 28
    %v2219 = vpop.permute.xlu0 %2218
    %v2223 = vsel %vm1560, %v1771, 0
    %v2226 = vsel %vm1560, %v1772, 0
    %2228 = vmatprep.subr.mxu0 0.0
    %2229 = vmatpush1.msra.mxu0 %v2217
    %2230 = vmatprep.subr.mxu0 0.0
    %2231 = vmatpush1.msra.mxu0 %v2219
    %2232 = vmatprep.subr.mxu0 0.0
    %2233 = vmatpush1.msra.mxu0 0.0
    %2234 = vmatprep.subr.mxu0 0.0
    %2235 = vmatpush1.msra.mxu0 0.0
    %2236 = vmatprep.subr.mxu0 0.0
    %2237 = vmatpush1.msra.mxu0 0.0
    %2238 = vmatprep.subr.mxu0 0.0
    %2239 = vmatpush1.msra.mxu0 0.0
    %2240 = vmatprep.subr.mxu0 0.0
    %2241 = vmatpush1.msra.mxu0 0.0
    %2242 = vmatprep.subr.mxu0 0.0
    %2243 = vmatpush1.msra.mxu0 0.0
    %2244 = vmatprep.subr.mxu0 0.0
    %2245 = vmatpush1.msra.mxu0 0.0
    %2246 = vmatprep.subr.mxu0 0.0
    %2247 = vmatpush1.msra.mxu0 0.0
    %2248 = vmatprep.subr.mxu0 0.0
    %2249 = vmatpush1.msra.mxu0 0.0
    %2250 = vmatprep.subr.mxu0 0.0
    %2251 = vmatpush1.msra.mxu0 0.0
    %2252 = vmatprep.subr.mxu0 0.0
    %2253 = vmatpush1.msra.mxu0 0.0
    %2254 = vmatprep.subr.mxu0 0.0
    %2255 = vmatpush1.msra.mxu0 0.0
    %2256 = vmatprep.subr.mxu0 0.0
    %2257 = vmatpush1.msra.mxu0 0.0
    %2258 = vmatprep.subr.mxu0 0.0
    %2259 = vmatpush1.msra.mxu0 0.0
    %2260 = vmatprep.subr.mxu0 0.0
    %2261 = vmatpush1.msra.mxu0 0.0
    %2262 = vmatprep.subr.mxu0 0.0
    %2263 = vmatpush1.msra.mxu0 0.0
    %2264 = vmatprep.subr.mxu0 0.0
    %2265 = vmatpush1.msra.mxu0 0.0
    %2266 = vmatprep.subr.mxu0 0.0
    %2267 = vmatpush1.msra.mxu0 0.0
    %2268 = vmatprep.subr.mxu0 0.0
    %2269 = vmatpush1.msra.mxu0 0.0
    %2270 = vmatprep.subr.mxu0 0.0
    %2271 = vmatpush1.msra.mxu0 0.0
    %2272 = vmatprep.subr.mxu0 0.0
    %2273 = vmatpush1.msra.mxu0 0.0
    %2274 = vmatprep.subr.mxu0 0.0
    %2275 = vmatpush1.msra.mxu0 0.0
    %2276 = vmatprep.subr.mxu0 0.0
    %2277 = vmatpush1.msra.mxu0 0.0
    %2278 = vmatprep.subr.mxu0 0.0
    %2279 = vmatpush1.msra.mxu0 0.0
    %2280 = vmatprep.subr.mxu0 0.0
    %2281 = vmatpush1.msra.mxu0 0.0
    %2282 = vmatprep.subr.mxu0 0.0
    %2283 = vmatpush1.msra.mxu0 0.0
    %2284 = vmatprep.subr.mxu0 0.0
    %2285 = vmatpush1.msra.mxu0 0.0
    %2286 = vmatprep.subr.mxu0 0.0
    %2287 = vmatpush1.msra.mxu0 0.0
    %2288 = vmatprep.subr.mxu0 0.0
    %2289 = vmatpush1.msra.mxu0 0.0
    %2290 = vmatprep.subr.mxu0 0.0
    %2291 = vmatpush1.msra.mxu0 0.0
    %2292 = vmatprep.mubr.f32.mxu0 0.0
    %2293 = vmatmul.mubr.f32.gmra.mrb[0].mxu0 %v2223
    %v2294 = vpop.f32.mrb[0].mxu0
    %v2295 = vadd.f32 0.0, %v2294
    %v2296 = vpop.f32.mrb[0].mxu0
    %2297 = vmatprep.mubr.f32.mxu0 0.0
    %2298 = vmatmul.mubr.f32.gmra.mrb[0].mxu0 %v2226
    %v2299 = vpop.f32.mrb[0].mxu0
    %v2300 = vadd.f32 0.0, %v2299
    %v2301 = vpop.f32.mrb[0].mxu0
    %2302 = vdwg.mxu0
    %2303 = vrot.lane.b32.xlu0 %v617, 24
    %v2304 = vpop.permute.xlu0 %2303
    %2305 = vrot.lane.b32.xlu0 %v622, 24
    %v2306 = vpop.permute.xlu0 %2305
    %v2310 = vsel %vm1560, %v1773, 0
    %v2313 = vsel %vm1560, %v1774, 0
    %2315 = vmatprep.subr.mxu0 0.0
    %2316 = vmatpush1.msra.mxu0 %v2304
    %2317 = vmatprep.subr.mxu0 0.0
    %2318 = vmatpush1.msra.mxu0 %v2306
    %2319 = vmatprep.subr.mxu0 0.0
    %2320 = vmatpush1.msra.mxu0 0.0
    %2321 = vmatprep.subr.mxu0 0.0
    %2322 = vmatpush1.msra.mxu0 0.0
    %2323 = vmatprep.subr.mxu0 0.0
    %2324 = vmatpush1.msra.mxu0 0.0
    %2325 = vmatprep.subr.mxu0 0.0
    %2326 = vmatpush1.msra.mxu0 0.0
    %2327 = vmatprep.subr.mxu0 0.0
    %2328 = vmatpush1.msra.mxu0 0.0
    %2329 = vmatprep.subr.mxu0 0.0
    %2330 = vmatpush1.msra.mxu0 0.0
    %2331 = vmatprep.subr.mxu0 0.0
    %2332 = vmatpush1.msra.mxu0 0.0
    %2333 = vmatprep.subr.mxu0 0.0
    %2334 = vmatpush1.msra.mxu0 0.0
    %2335 = vmatprep.subr.mxu0 0.0
    %2336 = vmatpush1.msra.mxu0 0.0
    %2337 = vmatprep.subr.mxu0 0.0
    %2338 = vmatpush1.msra.mxu0 0.0
    %2339 = vmatprep.subr.mxu0 0.0
    %2340 = vmatpush1.msra.mxu0 0.0
    %2341 = vmatprep.subr.mxu0 0.0
    %2342 = vmatpush1.msra.mxu0 0.0
    %2343 = vmatprep.subr.mxu0 0.0
    %2344 = vmatpush1.msra.mxu0 0.0
    %2345 = vmatprep.subr.mxu0 0.0
    %2346 = vmatpush1.msra.mxu0 0.0
    %2347 = vmatprep.subr.mxu0 0.0
    %2348 = vmatpush1.msra.mxu0 0.0
    %2349 = vmatprep.subr.mxu0 0.0
    %2350 = vmatpush1.msra.mxu0 0.0
    %2351 = vmatprep.subr.mxu0 0.0
    %2352 = vmatpush1.msra.mxu0 0.0
    %2353 = vmatprep.subr.mxu0 0.0
    %2354 = vmatpush1.msra.mxu0 0.0
    %2355 = vmatprep.subr.mxu0 0.0
    %2356 = vmatpush1.msra.mxu0 0.0
    %2357 = vmatprep.subr.mxu0 0.0
    %2358 = vmatpush1.msra.mxu0 0.0
    %2359 = vmatprep.subr.mxu0 0.0
    %2360 = vmatpush1.msra.mxu0 0.0
    %2361 = vmatprep.subr.mxu0 0.0
    %2362 = vmatpush1.msra.mxu0 0.0
    %2363 = vmatprep.subr.mxu0 0.0
    %2364 = vmatpush1.msra.mxu0 0.0
    %2365 = vmatprep.subr.mxu0 0.0
    %2366 = vmatpush1.msra.mxu0 0.0
    %2367 = vmatprep.subr.mxu0 0.0
    %2368 = vmatpush1.msra.mxu0 0.0
    %2369 = vmatprep.subr.mxu0 0.0
    %2370 = vmatpush1.msra.mxu0 0.0
    %2371 = vmatprep.subr.mxu0 0.0
    %2372 = vmatpush1.msra.mxu0 0.0
    %2373 = vmatprep.subr.mxu0 0.0
    %2374 = vmatpush1.msra.mxu0 0.0
    %2375 = vmatprep.subr.mxu0 0.0
    %2376 = vmatpush1.msra.mxu0 0.0
    %2377 = vmatprep.subr.mxu0 0.0
    %2378 = vmatpush1.msra.mxu0 0.0
    %2379 = vmatprep.mubr.f32.mxu0 0.0
    %2380 = vmatmul.mubr.f32.gmra.mrb[0].mxu0 %v2310
    %v2381 = vpop.f32.mrb[0].mxu0
    %v2382 = vadd.f32 0.0, %v2381
    %v2383 = vpop.f32.mrb[0].mxu0
    %2384 = vmatprep.mubr.f32.mxu0 0.0
    %2385 = vmatmul.mubr.f32.gmra.mrb[0].mxu0 %v2313
    %v2386 = vpop.f32.mrb[0].mxu0
    %v2387 = vadd.f32 0.0, %v2386
    %v2388 = vpop.f32.mrb[0].mxu0
    %2389 = vdwg.mxu0
    %2390 = vrot.lane.b32.xlu0 %v617, 20
    %v2391 = vpop.permute.xlu0 %2390
    %2392 = vrot.lane.b32.xlu0 %v622, 20
    %v2393 = vpop.permute.xlu0 %2392
    %v2397 = vsel %vm1560, %v1775, 0
    %v2400 = vsel %vm1560, %v1776, 0
    %2402 = vmatprep.subr.mxu0 0.0
    %2403 = vmatpush1.msra.mxu0 %v2391
    %2404 = vmatprep.subr.mxu0 0.0
    %2405 = vmatpush1.msra.mxu0 %v2393
    %2406 = vmatprep.subr.mxu0 0.0
    %2407 = vmatpush1.msra.mxu0 0.0
    %2408 = vmatprep.subr.mxu0 0.0
    %2409 = vmatpush1.msra.mxu0 0.0
    %2410 = vmatprep.subr.mxu0 0.0
    %2411 = vmatpush1.msra.mxu0 0.0
    %2412 = vmatprep.subr.mxu0 0.0
    %2413 = vmatpush1.msra.mxu0 0.0
    %2414 = vmatprep.subr.mxu0 0.0
    %2415 = vmatpush1.msra.mxu0 0.0
    %2416 = vmatprep.subr.mxu0 0.0
    %2417 = vmatpush1.msra.mxu0 0.0
    %2418 = vmatprep.subr.mxu0 0.0
    %2419 = vmatpush1.msra.mxu0 0.0
    %2420 = vmatprep.subr.mxu0 0.0
    %2421 = vmatpush1.msra.mxu0 0.0
    %2422 = vmatprep.subr.mxu0 0.0
    %2423 = vmatpush1.msra.mxu0 0.0
    %2424 = vmatprep.subr.mxu0 0.0
    %2425 = vmatpush1.msra.mxu0 0.0
    %2426 = vmatprep.subr.mxu0 0.0
    %2427 = vmatpush1.msra.mxu0 0.0
    %2428 = vmatprep.subr.mxu0 0.0
    %2429 = vmatpush1.msra.mxu0 0.0
    %2430 = vmatprep.subr.mxu0 0.0
    %2431 = vmatpush1.msra.mxu0 0.0
    %2432 = vmatprep.subr.mxu0 0.0
    %2433 = vmatpush1.msra.mxu0 0.0
    %2434 = vmatprep.subr.mxu0 0.0
    %2435 = vmatpush1.msra.mxu0 0.0
    %2436 = vmatprep.subr.mxu0 0.0
    %2437 = vmatpush1.msra.mxu0 0.0
    %2438 = vmatprep.subr.mxu0 0.0
    %2439 = vmatpush1.msra.mxu0 0.0
    %2440 = vmatprep.subr.mxu0 0.0
    %2441 = vmatpush1.msra.mxu0 0.0
    %2442 = vmatprep.subr.mxu0 0.0
    %2443 = vmatpush1.msra.mxu0 0.0
    %2444 = vmatprep.subr.mxu0 0.0
    %2445 = vmatpush1.msra.mxu0 0.0
    %2446 = vmatprep.subr.mxu0 0.0
    %2447 = vmatpush1.msra.mxu0 0.0
    %2448 = vmatprep.subr.mxu0 0.0
    %2449 = vmatpush1.msra.mxu0 0.0
    %2450 = vmatprep.subr.mxu0 0.0
    %2451 = vmatpush1.msra.mxu0 0.0
    %2452 = vmatprep.subr.mxu0 0.0
    %2453 = vmatpush1.msra.mxu0 0.0
    %2454 = vmatprep.subr.mxu0 0.0
    %2455 = vmatpush1.msra.mxu0 0.0
    %2456 = vmatprep.subr.mxu0 0.0
    %2457 = vmatpush1.msra.mxu0 0.0
    %2458 = vmatprep.subr.mxu0 0.0
    %2459 = vmatpush1.msra.mxu0 0.0
    %2460 = vmatprep.subr.mxu0 0.0
    %2461 = vmatpush1.msra.mxu0 0.0
    %2462 = vmatprep.subr.mxu0 0.0
    %2463 = vmatpush1.msra.mxu0 0.0
    %2464 = vmatprep.subr.mxu0 0.0
    %2465 = vmatpush1.msra.mxu0 0.0
    %2466 = vmatprep.mubr.f32.mxu0 0.0
    %2467 = vmatmul.mubr.f32.gmra.mrb[0].mxu0 %v2397
    %v2468 = vpop.f32.mrb[0].mxu0
    %v2469 = vadd.f32 0.0, %v2468
    %v2470 = vpop.f32.mrb[0].mxu0
    %2471 = vmatprep.mubr.f32.mxu0 0.0
    %2472 = vmatmul.mubr.f32.gmra.mrb[0].mxu0 %v2400
    %v2473 = vpop.f32.mrb[0].mxu0
    %v2474 = vadd.f32 0.0, %v2473
    %v2475 = vpop.f32.mrb[0].mxu0
    %2476 = vdwg.mxu0
    %2477 = vrot.lane.b32.xlu0 %v617, 16
    %v2478 = vpop.permute.xlu0 %2477
    %2479 = vrot.lane.b32.xlu0 %v622, 16
    %v2480 = vpop.permute.xlu0 %2479
    %v2484 = vsel %vm1560, %v1777, 0
    %v2487 = vsel %vm1560, %v1778, 0
    %2489 = vmatprep.subr.mxu0 0.0
    %2490 = vmatpush1.msra.mxu0 %v2478
    %2491 = vmatprep.subr.mxu0 0.0
    %2492 = vmatpush1.msra.mxu0 %v2480
    %2493 = vmatprep.subr.mxu0 0.0
    %2494 = vmatpush1.msra.mxu0 0.0
    %2495 = vmatprep.subr.mxu0 0.0
    %2496 = vmatpush1.msra.mxu0 0.0
    %2497 = vmatprep.subr.mxu0 0.0
    %2498 = vmatpush1.msra.mxu0 0.0
    %2499 = vmatprep.subr.mxu0 0.0
    %2500 = vmatpush1.msra.mxu0 0.0
    %2501 = vmatprep.subr.mxu0 0.0
    %2502 = vmatpush1.msra.mxu0 0.0
    %2503 = vmatprep.subr.mxu0 0.0
    %2504 = vmatpush1.msra.mxu0 0.0
    %2505 = vmatprep.subr.mxu0 0.0
    %2506 = vmatpush1.msra.mxu0 0.0
    %2507 = vmatprep.subr.mxu0 0.0
    %2508 = vmatpush1.msra.mxu0 0.0
    %2509 = vmatprep.subr.mxu0 0.0
    %2510 = vmatpush1.msra.mxu0 0.0
    %2511 = vmatprep.subr.mxu0 0.0
    %2512 = vmatpush1.msra.mxu0 0.0
    %2513 = vmatprep.subr.mxu0 0.0
    %2514 = vmatpush1.msra.mxu0 0.0
    %2515 = vmatprep.subr.mxu0 0.0
    %2516 = vmatpush1.msra.mxu0 0.0
    %2517 = vmatprep.subr.mxu0 0.0
    %2518 = vmatpush1.msra.mxu0 0.0
    %2519 = vmatprep.subr.mxu0 0.0
    %2520 = vmatpush1.msra.mxu0 0.0
    %2521 = vmatprep.subr.mxu0 0.0
    %2522 = vmatpush1.msra.mxu0 0.0
    %2523 = vmatprep.subr.mxu0 0.0
    %2524 = vmatpush1.msra.mxu0 0.0
    %2525 = vmatprep.subr.mxu0 0.0
    %2526 = vmatpush1.msra.mxu0 0.0
    %2527 = vmatprep.subr.mxu0 0.0
    %2528 = vmatpush1.msra.mxu0 0.0
    %2529 = vmatprep.subr.mxu0 0.0
    %2530 = vmatpush1.msra.mxu0 0.0
    %2531 = vmatprep.subr.mxu0 0.0
    %2532 = vmatpush1.msra.mxu0 0.0
    %2533 = vmatprep.subr.mxu0 0.0
    %2534 = vmatpush1.msra.mxu0 0.0
    %2535 = vmatprep.subr.mxu0 0.0
    %2536 = vmatpush1.msra.mxu0 0.0
    %2537 = vmatprep.subr.mxu0 0.0
    %2538 = vmatpush1.msra.mxu0 0.0
    %2539 = vmatprep.subr.mxu0 0.0
    %2540 = vmatpush1.msra.mxu0 0.0
    %2541 = vmatprep.subr.mxu0 0.0
    %2542 = vmatpush1.msra.mxu0 0.0
    %2543 = vmatprep.subr.mxu0 0.0
    %2544 = vmatpush1.msra.mxu0 0.0
    %2545 = vmatprep.subr.mxu0 0.0
    %2546 = vmatpush1.msra.mxu0 0.0
    %2547 = vmatprep.subr.mxu0 0.0
    %2548 = vmatpush1.msra.mxu0 0.0
    %2549 = vmatprep.subr.mxu0 0.0
    %2550 = vmatpush1.msra.mxu0 0.0
    %2551 = vmatprep.subr.mxu0 0.0
    %2552 = vmatpush1.msra.mxu0 0.0
    %2553 = vmatprep.mubr.f32.mxu0 0.0
    %2554 = vmatmul.mubr.f32.gmra.mrb[0].mxu0 %v2484
    %v2555 = vpop.f32.mrb[0].mxu0
    %v2556 = vadd.f32 0.0, %v2555
    %v2557 = vpop.f32.mrb[0].mxu0
    %2558 = vmatprep.mubr.f32.mxu0 0.0
    %2559 = vmatmul.mubr.f32.gmra.mrb[0].mxu0 %v2487
    %v2560 = vpop.f32.mrb[0].mxu0
    %v2561 = vadd.f32 0.0, %v2560
    %v2562 = vpop.f32.mrb[0].mxu0
    %2563 = vdwg.mxu0
    %2564 = vrot.lane.b32.xlu0 %v617, 12
    %v2565 = vpop.permute.xlu0 %2564
    %2566 = vrot.lane.b32.xlu0 %v622, 12
    %v2567 = vpop.permute.xlu0 %2566
    %v2571 = vsel %vm1560, %v1779, 0
    %v2574 = vsel %vm1560, %v1780, 0
    %2576 = vmatprep.subr.mxu0 0.0
    %2577 = vmatpush1.msra.mxu0 %v2565
    %2578 = vmatprep.subr.mxu0 0.0
    %2579 = vmatpush1.msra.mxu0 %v2567
    %2580 = vmatprep.subr.mxu0 0.0
    %2581 = vmatpush1.msra.mxu0 0.0
    %2582 = vmatprep.subr.mxu0 0.0
    %2583 = vmatpush1.msra.mxu0 0.0
    %2584 = vmatprep.subr.mxu0 0.0
    %2585 = vmatpush1.msra.mxu0 0.0
    %2586 = vmatprep.subr.mxu0 0.0
    %2587 = vmatpush1.msra.mxu0 0.0
    %2588 = vmatprep.subr.mxu0 0.0
    %2589 = vmatpush1.msra.mxu0 0.0
    %2590 = vmatprep.subr.mxu0 0.0
    %2591 = vmatpush1.msra.mxu0 0.0
    %2592 = vmatprep.subr.mxu0 0.0
    %2593 = vmatpush1.msra.mxu0 0.0
    %2594 = vmatprep.subr.mxu0 0.0
    %2595 = vmatpush1.msra.mxu0 0.0
    %2596 = vmatprep.subr.mxu0 0.0
    %2597 = vmatpush1.msra.mxu0 0.0
    %2598 = vmatprep.subr.mxu0 0.0
    %2599 = vmatpush1.msra.mxu0 0.0
    %2600 = vmatprep.subr.mxu0 0.0
    %2601 = vmatpush1.msra.mxu0 0.0
    %2602 = vmatprep.subr.mxu0 0.0
    %2603 = vmatpush1.msra.mxu0 0.0
    %2604 = vmatprep.subr.mxu0 0.0
    %2605 = vmatpush1.msra.mxu0 0.0
    %2606 = vmatprep.subr.mxu0 0.0
    %2607 = vmatpush1.msra.mxu0 0.0
    %2608 = vmatprep.subr.mxu0 0.0
    %2609 = vmatpush1.msra.mxu0 0.0
    %2610 = vmatprep.subr.mxu0 0.0
    %2611 = vmatpush1.msra.mxu0 0.0
    %2612 = vmatprep.subr.mxu0 0.0
    %2613 = vmatpush1.msra.mxu0 0.0
    %2614 = vmatprep.subr.mxu0 0.0
    %2615 = vmatpush1.msra.mxu0 0.0
    %2616 = vmatprep.subr.mxu0 0.0
    %2617 = vmatpush1.msra.mxu0 0.0
    %2618 = vmatprep.subr.mxu0 0.0
    %2619 = vmatpush1.msra.mxu0 0.0
    %2620 = vmatprep.subr.mxu0 0.0
    %2621 = vmatpush1.msra.mxu0 0.0
    %2622 = vmatprep.subr.mxu0 0.0
    %2623 = vmatpush1.msra.mxu0 0.0
    %2624 = vmatprep.subr.mxu0 0.0
    %2625 = vmatpush1.msra.mxu0 0.0
    %2626 = vmatprep.subr.mxu0 0.0
    %2627 = vmatpush1.msra.mxu0 0.0
    %2628 = vmatprep.subr.mxu0 0.0
    %2629 = vmatpush1.msra.mxu0 0.0
    %2630 = vmatprep.subr.mxu0 0.0
    %2631 = vmatpush1.msra.mxu0 0.0
    %2632 = vmatprep.subr.mxu0 0.0
    %2633 = vmatpush1.msra.mxu0 0.0
    %2634 = vmatprep.subr.mxu0 0.0
    %2635 = vmatpush1.msra.mxu0 0.0
    %2636 = vmatprep.subr.mxu0 0.0
    %2637 = vmatpush1.msra.mxu0 0.0
    %2638 = vmatprep.subr.mxu0 0.0
    %2639 = vmatpush1.msra.mxu0 0.0
    %2640 = vmatprep.mubr.f32.mxu0 0.0
    %2641 = vmatmul.mubr.f32.gmra.mrb[0].mxu0 %v2571
    %v2642 = vpop.f32.mrb[0].mxu0
    %v2643 = vadd.f32 0.0, %v2642
    %v2644 = vpop.f32.mrb[0].mxu0
    %2645 = vmatprep.mubr.f32.mxu0 0.0
    %2646 = vmatmul.mubr.f32.gmra.mrb[0].mxu0 %v2574
    %v2647 = vpop.f32.mrb[0].mxu0
    %v2648 = vadd.f32 0.0, %v2647
    %v2649 = vpop.f32.mrb[0].mxu0
    %2650 = vdwg.mxu0
    %2653 = vrot.lane.b32.xlu0 %v1947, 4
    %v2654 = vpop.permute.xlu0 %2653
    %2655 = vrot.lane.b32.xlu0 %v1952, 4
    %v2656 = vpop.permute.xlu0 %2655
    %2661 = vrot.lane.b32.xlu0 %v2034, 8
    %v2662 = vpop.permute.xlu0 %2661
    %2663 = vrot.lane.b32.xlu0 %v2039, 8
    %v2664 = vpop.permute.xlu0 %2663
    %2669 = vrot.lane.b32.xlu0 %v2121, 12
    %v2670 = vpop.permute.xlu0 %2669
    %2671 = vrot.lane.b32.xlu0 %v2126, 12
    %v2672 = vpop.permute.xlu0 %2671
    %2677 = vrot.lane.b32.xlu0 %v2208, 16
    %v2678 = vpop.permute.xlu0 %2677
    %2679 = vrot.lane.b32.xlu0 %v2213, 16
    %v2680 = vpop.permute.xlu0 %2679
    %2685 = vrot.lane.b32.xlu0 %v2295, 20
    %v2686 = vpop.permute.xlu0 %2685
    %2687 = vrot.lane.b32.xlu0 %v2300, 20
    %v2688 = vpop.permute.xlu0 %2687
    %2693 = vrot.lane.b32.xlu0 %v2382, 24
    %v2694 = vpop.permute.xlu0 %2693
    %2695 = vrot.lane.b32.xlu0 %v2387, 24
    %v2696 = vpop.permute.xlu0 %2695
    %2701 = vrot.lane.b32.xlu0 %v2469, 28
    %v2702 = vpop.permute.xlu0 %2701
    %2703 = vrot.lane.b32.xlu0 %v2474, 28
    %v2704 = vpop.permute.xlu0 %2703
    %2709 = vrot.lane.b32.xlu0 %v2556, 32
    %v2710 = vpop.permute.xlu0 %2709
    %2711 = vrot.lane.b32.xlu0 %v2561, 32
    %v2712 = vpop.permute.xlu0 %2711
    %2717 = vrot.lane.b32.xlu0 %v2643, 36
    %v2718 = vpop.permute.xlu0 %2717
    %2719 = vrot.lane.b32.xlu0 %v2648, 36
    %v2720 = vpop.permute.xlu0 %2719
    %v2723 = vsel %vm633, %v1860, %v2654
    %v2724 = vsel %vm633, %v1865, %v2656
    %vm2725 = vcmask 64512
    %v2726 = vsel %vm2725, %v2723, %v2662
    %v2727 = vsel %vm2725, %v2724, %v2664
    %vm2728 = vcmask 97280
    %v2729 = vsel %vm2728, %v2726, %v2670
    %v2730 = vsel %vm2728, %v2727, %v2672
    %v2731 = vsel %vm1560, %v2729, %v2678
    %v2732 = vsel %vm1560, %v2730, %v2680
    %vm2733 = vcmask 162816
    %v2734 = vsel %vm2733, %v2731, %v2686
    %v2735 = vsel %vm2733, %v2732, %v2688
    %vm2736 = vcmask 195584
    %v2737 = vsel %vm2736, %v2734, %v2694
    %v2738 = vsel %vm2736, %v2735, %v2696
    %vm2739 = vcmask 228352
    %v2740 = vsel %vm2739, %v2737, %v2702
    %v2741 = vsel %vm2739, %v2738, %v2704
    %vm2742 = vcmask 261120
    %v2743 = vsel %vm2742, %v2740, %v2710
    %v2744 = vsel %vm2742, %v2741, %v2712
    %vm2745 = vcmask 293888
    %v2746 = vsel %vm2745, %v2743, %v2718
    %v2747 = vsel %vm2745, %v2744, %v2720
    %v2748 = vld [vmem:[%s1 + $0x60] sm:$0xff]
    %v2749 = vld [vmem:[%s1 + $0x68] sm:$0xff]
    %v2750 = vld [vmem:[%s1 + $0x70] sm:$0xff]
    %v2751 = vld [vmem:[%s1 + $0x78] sm:$0xff]
    %v2752 = vld [vmem:[%s1 + $0x80] sm:$0xff]
    %v2753 = vld [vmem:[%s1 + $0x88] sm:$0x1]
    %v2754 = vlaneseq
    %v2755 = vshrl.u32 %v2754, 7
    %v2756 = vsub.s32 0, %v2755
    %v2757 = vrot.slane %v2753, %v2756
    %v2759 = vsel %vm543, %v2746, 0
    %v2762 = vsel %vm543, %v2747, 0
    %2764 = vmatprep.subr.mxu0 0.0
    %2765 = vmatpush1.msra.mxu0 %v2748
    %2766 = vmatprep.subr.mxu0 0.0
    %2767 = vmatpush1.msra.mxu0 %v2749
    %2768 = vmatprep.subr.mxu0 0.0
    %2769 = vmatpush1.msra.mxu0 %v2750
    %2770 = vmatprep.subr.mxu0 0.0
    %2771 = vmatpush1.msra.mxu0 %v2751
    %2772 = vmatprep.subr.mxu0 0.0
    %2773 = vmatpush1.msra.mxu0 %v2752
    %2774 = vmatprep.subr.mxu0 0.0
    %2775 = vmatpush1.msra.mxu0 0.0
    %2776 = vmatprep.subr.mxu0 0.0
    %2777 = vmatpush1.msra.mxu0 0.0
    %2778 = vmatprep.subr.mxu0 0.0
    %2779 = vmatpush1.msra.mxu0 0.0
    %2780 = vmatprep.subr.mxu0 0.0
    %2781 = vmatpush1.msra.mxu0 0.0
    %2782 = vmatprep.subr.mxu0 0.0
    %2783 = vmatpush1.msra.mxu0 0.0
    %2784 = vmatprep.subr.mxu0 0.0
    %2785 = vmatpush1.msra.mxu0 0.0
    %2786 = vmatprep.subr.mxu0 0.0
    %2787 = vmatpush1.msra.mxu0 0.0
    %2788 = vmatprep.subr.mxu0 0.0
    %2789 = vmatpush1.msra.mxu0 0.0
    %2790 = vmatprep.subr.mxu0 0.0
    %2791 = vmatpush1.msra.mxu0 0.0
    %2792 = vmatprep.subr.mxu0 0.0
    %2793 = vmatpush1.msra.mxu0 0.0
    %2794 = vmatprep.subr.mxu0 0.0
    %2795 = vmatpush1.msra.mxu0 0.0
    %2796 = vmatprep.subr.mxu0 0.0
    %2797 = vmatpush1.msra.mxu0 0.0
    %2798 = vmatprep.subr.mxu0 0.0
    %2799 = vmatpush1.msra.mxu0 0.0
    %2800 = vmatprep.subr.mxu0 0.0
    %2801 = vmatpush1.msra.mxu0 0.0
    %2802 = vmatprep.subr.mxu0 0.0
    %2803 = vmatpush1.msra.mxu0 0.0
    %2804 = vmatprep.subr.mxu0 0.0
    %2805 = vmatpush1.msra.mxu0 0.0
    %2806 = vmatprep.subr.mxu0 0.0
    %2807 = vmatpush1.msra.mxu0 0.0
    %2808 = vmatprep.subr.mxu0 0.0
    %2809 = vmatpush1.msra.mxu0 0.0
    %2810 = vmatprep.subr.mxu0 0.0
    %2811 = vmatpush1.msra.mxu0 0.0
    %2812 = vmatprep.subr.mxu0 0.0
    %2813 = vmatpush1.msra.mxu0 0.0
    %2814 = vmatprep.subr.mxu0 0.0
    %2815 = vmatpush1.msra.mxu0 0.0
    %2816 = vmatprep.subr.mxu0 0.0
    %2817 = vmatpush1.msra.mxu0 0.0
    %2818 = vmatprep.subr.mxu0 0.0
    %2819 = vmatpush1.msra.mxu0 0.0
    %2820 = vmatprep.subr.mxu0 0.0
    %2821 = vmatpush1.msra.mxu0 0.0
    %2822 = vmatprep.subr.mxu0 0.0
    %2823 = vmatpush1.msra.mxu0 0.0
    %2824 = vmatprep.subr.mxu0 0.0
    %2825 = vmatpush1.msra.mxu0 0.0
    %2826 = vmatprep.subr.mxu0 0.0
    %2827 = vmatpush1.msra.mxu0 0.0
    %2828 = vmatprep.mubr.f32.mxu0 0.0
    %2829 = vmatmul.mubr.f32.gmra.mrb[0].mxu0 %v2759
    %v2830 = vpop.f32.mrb[0].mxu0
    %v2831 = vadd.f32 %v2757, %v2830
    %v2832 = vpop.f32.mrb[0].mxu0
    %2833 = vmatprep.mubr.f32.mxu0 0.0
    %2834 = vmatmul.mubr.f32.gmra.mrb[0].mxu0 %v2762
    %v2835 = vpop.f32.mrb[0].mxu0
    %v2836 = vadd.f32 %v2757, %v2835
    %v2837 = vpop.f32.mrb[0].mxu0
    %2838 = vdwg.mxu0
    %v2839 = vadd.f32 %v531, %v2831
    %v2840 = vadd.f32 %v532, %v2836
    %v2841 = vld [vmem:[%s1 + $0x90] sm:$0x1]
    %v2842 = vld [vmem:[%s1 + $0x98] sm:$0x1]
    %v2843 = vsel %vm543, %v2839, 0.0
    %2844 = vadd.xlane.f32.xlu0 %v2843
    %v2845 = vpop.xlane.xlu0 %2844
    %v2846 = vsel %vm543, %v2840, 0.0
    %2847 = vadd.xlane.f32.xlu0 %v2846
    %v2848 = vpop.xlane.xlu0 %2847
    %v2849 = vrcp.pop 40.0
    %v2850 = vmul.f32 %v2845, %v2849
    %v2851 = vmul.f32 %v2848, %v2849
    %v2852 = vsub.f32 %v2839, %v2850
    %v2853 = vsub.f32 %v2840, %v2851
    %v2854 = vmul.f32 %v2852, %v2852
    %v2855 = vmul.f32 %v2853, %v2853
    %v2856 = vsel %vm543, %v2854, 0.0
    %2857 = vadd.xlane.f32.xlu0 %v2856
    %v2858 = vpop.xlane.xlu0 %2857
    %v2859 = vsel %vm543, %v2855, 0.0
    %2860 = vadd.xlane.f32.xlu0 %v2859
    %v2861 = vpop.xlane.xlu0 %2860
    %v2862 = vmul.f32 %v2858, %v2849
    %v2863 = vmul.f32 %v2861, %v2849
    %v2864 = vadd.f32 %v2862, 1e-05
    %v2865 = vadd.f32 %v2863, 1e-05
    %v2866 = vrsqrt.pop %v2864
    %v2867 = vrsqrt.pop %v2865
    %v2868 = vmul.f32 %v2852, %v2866
    %v2869 = vmul.f32 %v2853, %v2867
    %v2870 = vlaneseq
    %v2871 = vshrl.u32 %v2870, 7
    %v2872 = vsub.s32 0, %v2871
    %v2873 = vrot.slane %v2841, %v2872
    %v2874 = vmul.f32 %v2868, %v2873
    %v2875 = vmul.f32 %v2869, %v2873
    %v2876 = vlaneseq
    %v2877 = vshrl.u32 %v2876, 7
    %v2878 = vsub.s32 0, %v2877
    %v2879 = vrot.slane %v2842, %v2878
    %v2880 = vadd.f32 %v2874, %v2879
    %v2881 = vadd.f32 %v2875, %v2879
    %s2882 = smul.u32 4, 5
    %s2883 = smul.u32 %s2882, 16
    %s2884 = sshll.u32 %s2883, 4
    %2885 = dma.done [#allocation4], %s2884
    %v2886 = vpack.c.bf16 %v2881, %v2880
    %v2887 = vld [vmem:[#allocation2] sm:$0xff]
    %v2888 = vld [vmem:[#allocation2 + $0x8] sm:$0xff]
    %v2889 = vld [vmem:[#allocation2 + $0x10] sm:$0xff]
    %v2890 = vld [vmem:[#allocation2 + $0x18] sm:$0xff]
    %v2891 = vld [vmem:[#allocation2 + $0x20] sm:$0xff]
    %v2892 = vld [vmem:[#allocation2 + $0x28] sm:$0xff]
    %v2893 = vld [vmem:[#allocation2 + $0x30] sm:$0xff]
    %v2894 = vld [vmem:[#allocation2 + $0x38] sm:$0xff]
    %v2895 = vld [vmem:[#allocation2 + $0x40] sm:$0xff]
    %v2896 = vld [vmem:[#allocation2 + $0x48] sm:$0xff]
    %v2897 = vld [vmem:[#allocation2 + $0x50] sm:$0xff]
    %v2898 = vld [vmem:[#allocation2 + $0x58] sm:$0xff]
    %v2899 = vld [vmem:[#allocation2 + $0x60] sm:$0xff]
    %v2900 = vld [vmem:[#allocation2 + $0x68] sm:$0xff]
    %v2901 = vld [vmem:[#allocation2 + $0x70] sm:$0xff]
    %v2902 = vld [vmem:[#allocation2 + $0x78] sm:$0xff]
    %v2903 = vld [vmem:[#allocation2 + $0x80] sm:$0xff]
    %v2904 = vld [vmem:[#allocation2 + $0x88] sm:$0xff]
    %v2905 = vld [vmem:[#allocation2 + $0x90] sm:$0xff]
    %v2906 = vld [vmem:[#allocation2 + $0x98] sm:$0xff]
    %v2907 = vld [vmem:[#allocation2 + $0xa0] sm:$0xff]
    %v2908 = vld [vmem:[#allocation2 + $0xa8] sm:$0xff]
    %v2909 = vld [vmem:[#allocation2 + $0xb0] sm:$0xff]
    %v2910 = vld [vmem:[#allocation2 + $0xb8] sm:$0xff]
    %v2911 = vld [vmem:[#allocation2 + $0xc0] sm:$0xff]
    %v2912 = vld [vmem:[#allocation2 + $0xc8] sm:$0xff]
    %v2913 = vld [vmem:[#allocation2 + $0xd0] sm:$0xff]
    %v2914 = vld [vmem:[#allocation2 + $0xd8] sm:$0xff]
    %v2915 = vld [vmem:[#allocation2 + $0xe0] sm:$0xff]
    %v2916 = vld [vmem:[#allocation2 + $0xe8] sm:$0xff]
    %v2917 = vld [vmem:[#allocation2 + $0xf0] sm:$0xff]
    %v2918 = vld [vmem:[#allocation2 + $0xf8] sm:$0xff]
    %v2919 = vld [vmem:[#allocation2 + $0x100] sm:$0xff]
    %v2920 = vld [vmem:[#allocation2 + $0x108] sm:$0xff]
    %v2921 = vld [vmem:[#allocation2 + $0x110] sm:$0xff]
    %v2922 = vld [vmem:[#allocation2 + $0x118] sm:$0xff]
    %v2923 = vld [vmem:[#allocation2 + $0x120] sm:$0xff]
    %v2924 = vld [vmem:[#allocation2 + $0x128] sm:$0xff]
    %v2925 = vld [vmem:[#allocation2 + $0x130] sm:$0xff]
    %v2926 = vld [vmem:[#allocation2 + $0x138] sm:$0xff]
    %v2927 = vld [vmem:[%s2] sm:$0xff]
    %v2928 = vld [vmem:[%s2 + $0x8] sm:$0xff]
    %v2931 = vlaneseq
    %v2932 = vshrl.u32 %v2931, 7
    %v2933 = vsub.s32 0, %v2932
    %v2934 = vrot.slane %v2927, %v2933
    %v2935 = vlaneseq
    %v2936 = vshrl.u32 %v2935, 7
    %v2937 = vsub.s32 1, %v2936
    %v2938 = vrot.slane %v2927, %v2937
    %v2939 = vlaneseq
    %v2940 = vshrl.u32 %v2939, 7
    %v2941 = vsub.s32 2, %v2940
    %v2942 = vrot.slane %v2927, %v2941
    %v2943 = vlaneseq
    %v2944 = vshrl.u32 %v2943, 7
    %v2945 = vsub.s32 3, %v2944
    %v2946 = vrot.slane %v2927, %v2945
    %v2947 = vlaneseq
    %v2948 = vshrl.u32 %v2947, 7
    %v2949 = vsub.s32 4, %v2948
    %v2950 = vrot.slane %v2927, %v2949
    %v2951 = vlaneseq
    %v2952 = vshrl.u32 %v2951, 7
    %v2953 = vsub.s32 5, %v2952
    %v2954 = vrot.slane %v2927, %v2953
    %v2955 = vlaneseq
    %v2956 = vshrl.u32 %v2955, 7
    %v2957 = vsub.s32 6, %v2956
    %v2958 = vrot.slane %v2927, %v2957
    %v2959 = vlaneseq
    %v2960 = vshrl.u32 %v2959, 7
    %v2961 = vsub.s32 7, %v2960
    %v2962 = vrot.slane %v2927, %v2961
    %v2963 = vlaneseq
    %v2964 = vshrl.u32 %v2963, 7
    %v2965 = vsub.s32 0, %v2964
    %v2966 = vrot.slane %v2928, %v2965
    %v2967 = vlaneseq
    %v2968 = vshrl.u32 %v2967, 7
    %v2969 = vsub.s32 1, %v2968
    %v2970 = vrot.slane %v2928, %v2969
    %v2971 = vlaneseq
    %v2972 = vshrl.u32 %v2971, 7
    %v2973 = vsub.s32 2, %v2972
    %v2974 = vrot.slane %v2928, %v2973
    %v2975 = vlaneseq
    %v2976 = vshrl.u32 %v2975, 7
    %v2977 = vsub.s32 3, %v2976
    %v2978 = vrot.slane %v2928, %v2977
    %v2979 = vlaneseq
    %v2980 = vshrl.u32 %v2979, 7
    %v2981 = vsub.s32 4, %v2980
    %v2982 = vrot.slane %v2928, %v2981
    %v2983 = vlaneseq
    %v2984 = vshrl.u32 %v2983, 7
    %v2985 = vsub.s32 5, %v2984
    %v2986 = vrot.slane %v2928, %v2985
    %v2987 = vlaneseq
    %v2988 = vshrl.u32 %v2987, 7
    %v2989 = vsub.s32 6, %v2988
    %v2990 = vrot.slane %v2928, %v2989
    %v2991 = vlaneseq
    %v2992 = vshrl.u32 %v2991, 7
    %v2993 = vsub.s32 7, %v2992
    %v2994 = vrot.slane %v2928, %v2993
    %v3051 = vunpack.c.l.b16 %v2887
    %v3052 = vunpack.c.h.b16 %v2887
    %v3053 = vunpack.c.l.b16 %v2888
    %v3054 = vunpack.c.h.b16 %v2888
    %v3055 = vunpack.c.l.b16 %v2889
    %v3056 = vunpack.c.h.b16 %v2889
    %v3057 = vunpack.c.l.b16 %v2890
    %v3058 = vunpack.c.h.b16 %v2890
    %v3059 = vunpack.c.l.b16 %v2891
    %v3060 = vunpack.c.h.b16 %v2891
    %v3061 = vunpack.c.l.b16 %v2892
    %v3062 = vunpack.c.h.b16 %v2892
    %v3063 = vunpack.c.l.b16 %v2893
    %v3064 = vunpack.c.h.b16 %v2893
    %v3065 = vunpack.c.l.b16 %v2894
    %v3066 = vunpack.c.h.b16 %v2894
    %v3067 = vunpack.c.l.b16 %v2895
    %v3068 = vunpack.c.h.b16 %v2895
    %v3069 = vunpack.c.l.b16 %v2896
    %v3070 = vunpack.c.h.b16 %v2896
    %v3071 = vunpack.c.l.b16 %v2897
    %v3072 = vunpack.c.h.b16 %v2897
    %v3073 = vunpack.c.l.b16 %v2898
    %v3074 = vunpack.c.h.b16 %v2898
    %v3075 = vunpack.c.l.b16 %v2899
    %v3076 = vunpack.c.h.b16 %v2899
    %v3077 = vunpack.c.l.b16 %v2900
    %v3078 = vunpack.c.h.b16 %v2900
    %v3079 = vunpack.c.l.b16 %v2901
    %v3080 = vunpack.c.h.b16 %v2901
    %v3081 = vunpack.c.l.b16 %v2902
    %v3082 = vunpack.c.h.b16 %v2902
    %v3083 = vunpack.c.l.b16 %v2903
    %v3084 = vunpack.c.h.b16 %v2903
    %v3085 = vunpack.c.l.b16 %v2904
    %v3086 = vunpack.c.h.b16 %v2904
    %v3087 = vunpack.c.l.b16 %v2905
    %v3088 = vunpack.c.h.b16 %v2905
    %v3089 = vunpack.c.l.b16 %v2906
    %v3090 = vunpack.c.h.b16 %v2906
    %v3091 = vunpack.c.l.b16 %v2907
    %v3092 = vunpack.c.h.b16 %v2907
    %v3093 = vunpack.c.l.b16 %v2908
    %v3094 = vunpack.c.h.b16 %v2908
    %v3095 = vunpack.c.l.b16 %v2909
    %v3096 = vunpack.c.h.b16 %v2909
    %v3097 = vunpack.c.l.b16 %v2910
    %v3098 = vunpack.c.h.b16 %v2910
    %v3099 = vunpack.c.l.b16 %v2911
    %v3100 = vunpack.c.h.b16 %v2911
    %v3101 = vunpack.c.l.b16 %v2912
    %v3102 = vunpack.c.h.b16 %v2912
    %v3103 = vunpack.c.l.b16 %v2913
    %v3104 = vunpack.c.h.b16 %v2913
    %v3105 = vunpack.c.l.b16 %v2914
    %v3106 = vunpack.c.h.b16 %v2914
    %v3107 = vunpack.c.l.b16 %v2915
    %v3108 = vunpack.c.h.b16 %v2915
    %v3109 = vunpack.c.l.b16 %v2916
    %v3110 = vunpack.c.h.b16 %v2916
    %v3111 = vunpack.c.l.b16 %v2917
    %v3112 = vunpack.c.h.b16 %v2917
    %v3113 = vunpack.c.l.b16 %v2918
    %v3114 = vunpack.c.h.b16 %v2918
    %v3115 = vunpack.c.l.b16 %v2919
    %v3116 = vunpack.c.h.b16 %v2919
    %v3117 = vunpack.c.l.b16 %v2920
    %v3118 = vunpack.c.h.b16 %v2920
    %v3119 = vunpack.c.l.b16 %v2921
    %v3120 = vunpack.c.h.b16 %v2921
    %v3121 = vunpack.c.l.b16 %v2922
    %v3122 = vunpack.c.h.b16 %v2922
    %v3123 = vunpack.c.l.b16 %v2923
    %v3124 = vunpack.c.h.b16 %v2923
    %v3125 = vunpack.c.l.b16 %v2924
    %v3126 = vunpack.c.h.b16 %v2924
    %v3127 = vunpack.c.l.b16 %v2925
    %v3128 = vunpack.c.h.b16 %v2925
    %v3129 = vunpack.c.l.b16 %v2926
    %v3130 = vunpack.c.h.b16 %v2926
    %v3131 = vpack.c.b16 %v3067, %v3051
    %v3132 = vpack.c.b16 %v3068, %v3052
    %v3133 = vpack.c.b16 %v3069, %v3053
    %v3134 = vpack.c.b16 %v3070, %v3054
    %v3135 = vpack.c.b16 %v3071, %v3055
    %v3136 = vpack.c.b16 %v3072, %v3056
    %v3137 = vpack.c.b16 %v3073, %v3057
    %v3138 = vpack.c.b16 %v3074, %v3058
    %v3139 = vpack.c.b16 %v3075, %v3059
    %v3140 = vpack.c.b16 %v3076, %v3060
    %v3141 = vpack.c.b16 %v3077, %v3061
    %v3142 = vpack.c.b16 %v3078, %v3062
    %v3143 = vpack.c.b16 %v3079, %v3063
    %v3144 = vpack.c.b16 %v3080, %v3064
    %v3145 = vpack.c.b16 %v3081, %v3065
    %v3146 = vpack.c.b16 %v3082, %v3066
    %v3147 = vpack.c.b16 %v3099, %v3083
    %v3148 = vpack.c.b16 %v3100, %v3084
    %v3149 = vpack.c.b16 %v3101, %v3085
    %v3150 = vpack.c.b16 %v3102, %v3086
    %v3151 = vpack.c.b16 %v3103, %v3087
    %v3152 = vpack.c.b16 %v3104, %v3088
    %v3153 = vpack.c.b16 %v3105, %v3089
    %v3154 = vpack.c.b16 %v3106, %v3090
    %v3155 = vpack.c.b16 %v3107, %v3091
    %v3156 = vpack.c.b16 %v3108, %v3092
    %v3157 = vpack.c.b16 %v3109, %v3093
    %v3158 = vpack.c.b16 %v3110, %v3094
    %v3159 = vpack.c.b16 %v3111, %v3095
    %v3160 = vpack.c.b16 %v3112, %v3096
    %v3161 = vpack.c.b16 %v3113, %v3097
    %v3162 = vpack.c.b16 %v3114, %v3098
    %v3163 = vpack.c.b16 %v3115, %v3115
    %v3164 = vpack.c.b16 %v3116, %v3116
    %v3165 = vpack.c.b16 %v3117, %v3117
    %v3166 = vpack.c.b16 %v3118, %v3118
    %v3167 = vpack.c.b16 %v3119, %v3119
    %v3168 = vpack.c.b16 %v3120, %v3120
    %v3169 = vpack.c.b16 %v3121, %v3121
    %v3170 = vpack.c.b16 %v3122, %v3122
    %v3171 = vpack.c.b16 %v3123, %v3123
    %v3172 = vpack.c.b16 %v3124, %v3124
    %v3173 = vpack.c.b16 %v3125, %v3125
    %v3174 = vpack.c.b16 %v3126, %v3126
    %v3175 = vpack.c.b16 %v3127, %v3127
    %v3176 = vpack.c.b16 %v3128, %v3128
    %v3177 = vpack.c.b16 %v3129, %v3129
    %v3178 = vpack.c.b16 %v3130, %v3130
    %v3212 = vsel %vm543, %v2886, 0
    %vm3214 = vcmask 1043456
    %v3216 = vsel %vm3214, %v3163, 0
    %v3219 = vsel %vm3214, %v3164, 0
    %v3222 = vsel %vm3214, %v3165, 0
    %v3225 = vsel %vm3214, %v3166, 0
    %v3228 = vsel %vm3214, %v3167, 0
    %v3231 = vsel %vm3214, %v3168, 0
    %v3234 = vsel %vm3214, %v3169, 0
    %v3237 = vsel %vm3214, %v3170, 0
    %v3240 = vsel %vm3214, %v3171, 0
    %v3243 = vsel %vm3214, %v3172, 0
    %v3246 = vsel %vm3214, %v3173, 0
    %v3249 = vsel %vm3214, %v3174, 0
    %v3252 = vsel %vm3214, %v3175, 0
    %v3255 = vsel %vm3214, %v3176, 0
    %v3258 = vsel %vm3214, %v3177, 0
    %v3261 = vsel %vm3214, %v3178, 0
    %3263 = vmatprep.subr.bf16.mxu0 %v3132
    %3264 = vmatpush1.bf16.msra.mxu0 %v3131
    %3265 = vmatprep.subr.bf16.mxu0 %v3148
    %3266 = vmatpush1.bf16.msra.mxu0 %v3147
    %3267 = vmatprep.subr.bf16.mxu0 %v3219
    %3268 = vmatpush1.bf16.msra.mxu0 %v3216
    %3269 = vmatprep.subr.bf16.mxu0 0
    %3270 = vmatpush1.bf16.msra.mxu0 0
    %3271 = vmatprep.subr.bf16.mxu0 0
    %3272 = vmatpush1.bf16.msra.mxu0 0
    %3273 = vmatprep.subr.bf16.mxu0 0
    %3274 = vmatpush1.bf16.msra.mxu0 0
    %3275 = vmatprep.subr.bf16.mxu0 0
    %3276 = vmatpush1.bf16.msra.mxu0 0
    %3277 = vmatprep.subr.bf16.mxu0 0
    %3278 = vmatpush1.bf16.msra.mxu0 0
    %3279 = vmatprep.subr.bf16.mxu0 0
    %3280 = vmatpush1.bf16.msra.mxu0 0
    %3281 = vmatprep.subr.bf16.mxu0 0
    %3282 = vmatpush1.bf16.msra.mxu0 0
    %3283 = vmatprep.subr.bf16.mxu0 0
    %3284 = vmatpush1.bf16.msra.mxu0 0
    %3285 = vmatprep.subr.bf16.mxu0 0
    %3286 = vmatpush1.bf16.msra.mxu0 0
    %3287 = vmatprep.subr.bf16.mxu0 0
    %3288 = vmatpush1.bf16.msra.mxu0 0
    %3289 = vmatprep.subr.bf16.mxu0 0
    %3290 = vmatpush1.bf16.msra.mxu0 0
    %3291 = vmatprep.subr.bf16.mxu0 0
    %3292 = vmatpush1.bf16.msra.mxu0 0
    %3293 = vmatprep.subr.bf16.mxu0 0
    %3294 = vmatpush1.bf16.msra.mxu0 0
    %3295 = vmatprep.mubr.bf16.mxu0 0
    %3296 = vmatmul.mubr.bf16.gmra.mrb[0].mxu0 %v3212
    %v3297 = vpop.f32.mrb[0].mxu0
    %v3298 = vadd.f32 %v2934, %v3297
    %v3299 = vpop.f32.mrb[0].mxu0
    %v3300 = vadd.f32 %v2938, %v3299
    %v3301 = vpop.f32.mrb[0].mxu0
    %v3302 = vadd.f32 %v2934, %v3301
    %v3303 = vpop.f32.mrb[0].mxu0
    %v3304 = vadd.f32 %v2938, %v3303
    %3305 = vdwg.mxu0
    %3306 = vmatprep.subr.bf16.mxu0 %v3134
    %3307 = vmatpush1.bf16.msra.mxu0 %v3133
    %3308 = vmatprep.subr.bf16.mxu0 %v3150
    %3309 = vmatpush1.bf16.msra.mxu0 %v3149
    %3310 = vmatprep.subr.bf16.mxu0 %v3225
    %3311 = vmatpush1.bf16.msra.mxu0 %v3222
    %3312 = vmatprep.subr.bf16.mxu0 0
    %3313 = vmatpush1.bf16.msra.mxu0 0
    %3314 = vmatprep.subr.bf16.mxu0 0
    %3315 = vmatpush1.bf16.msra.mxu0 0
    %3316 = vmatprep.subr.bf16.mxu0 0
    %3317 = vmatpush1.bf16.msra.mxu0 0
    %3318 = vmatprep.subr.bf16.mxu0 0
    %3319 = vmatpush1.bf16.msra.mxu0 0
    %3320 = vmatprep.subr.bf16.mxu0 0
    %3321 = vmatpush1.bf16.msra.mxu0 0
    %3322 = vmatprep.subr.bf16.mxu0 0
    %3323 = vmatpush1.bf16.msra.mxu0 0
    %3324 = vmatprep.subr.bf16.mxu0 0
    %3325 = vmatpush1.bf16.msra.mxu0 0
    %3326 = vmatprep.subr.bf16.mxu0 0
    %3327 = vmatpush1.bf16.msra.mxu0 0
    %3328 = vmatprep.subr.bf16.mxu0 0
    %3329 = vmatpush1.bf16.msra.mxu0 0
    %3330 = vmatprep.subr.bf16.mxu0 0
    %3331 = vmatpush1.bf16.msra.mxu0 0
    %3332 = vmatprep.subr.bf16.mxu0 0
    %3333 = vmatpush1.bf16.msra.mxu0 0
    %3334 = vmatprep.subr.bf16.mxu0 0
    %3335 = vmatpush1.bf16.msra.mxu0 0
    %3336 = vmatprep.subr.bf16.mxu0 0
    %3337 = vmatpush1.bf16.msra.mxu0 0
    %3338 = vmatprep.mubr.bf16.mxu0 0
    %3339 = vmatmul.mubr.bf16.gmra.mrb[0].mxu0 %v3212
    %v3340 = vpop.f32.mrb[0].mxu0
    %v3341 = vadd.f32 %v2942, %v3340
    %v3342 = vpop.f32.mrb[0].mxu0
    %v3343 = vadd.f32 %v2946, %v3342
    %v3344 = vpop.f32.mrb[0].mxu0
    %v3345 = vadd.f32 %v2942, %v3344
    %v3346 = vpop.f32.mrb[0].mxu0
    %v3347 = vadd.f32 %v2946, %v3346
    %3348 = vdwg.mxu0
    %3349 = vmatprep.subr.bf16.mxu0 %v3136
    %3350 = vmatpush1.bf16.msra.mxu0 %v3135
    %3351 = vmatprep.subr.bf16.mxu0 %v3152
    %3352 = vmatpush1.bf16.msra.mxu0 %v3151
    %3353 = vmatprep.subr.bf16.mxu0 %v3231
    %3354 = vmatpush1.bf16.msra.mxu0 %v3228
    %3355 = vmatprep.subr.bf16.mxu0 0
    %3356 = vmatpush1.bf16.msra.mxu0 0
    %3357 = vmatprep.subr.bf16.mxu0 0
    %3358 = vmatpush1.bf16.msra.mxu0 0
    %3359 = vmatprep.subr.bf16.mxu0 0
    %3360 = vmatpush1.bf16.msra.mxu0 0
    %3361 = vmatprep.subr.bf16.mxu0 0
    %3362 = vmatpush1.bf16.msra.mxu0 0
    %3363 = vmatprep.subr.bf16.mxu0 0
    %3364 = vmatpush1.bf16.msra.mxu0 0
    %3365 = vmatprep.subr.bf16.mxu0 0
    %3366 = vmatpush1.bf16.msra.mxu0 0
    %3367 = vmatprep.subr.bf16.mxu0 0
    %3368 = vmatpush1.bf16.msra.mxu0 0
    %3369 = vmatprep.subr.bf16.mxu0 0
    %3370 = vmatpush1.bf16.msra.mxu0 0
    %3371 = vmatprep.subr.bf16.mxu0 0
    %3372 = vmatpush1.bf16.msra.mxu0 0
    %3373 = vmatprep.subr.bf16.mxu0 0
    %3374 = vmatpush1.bf16.msra.mxu0 0
    %3375 = vmatprep.subr.bf16.mxu0 0
    %3376 = vmatpush1.bf16.msra.mxu0 0
    %3377 = vmatprep.subr.bf16.mxu0 0
    %3378 = vmatpush1.bf16.msra.mxu0 0
    %3379 = vmatprep.subr.bf16.mxu0 0
    %3380 = vmatpush1.bf16.msra.mxu0 0
    %3381 = vmatprep.mubr.bf16.mxu0 0
    %3382 = vmatmul.mubr.bf16.gmra.mrb[0].mxu0 %v3212
    %v3383 = vpop.f32.mrb[0].mxu0
    %v3384 = vadd.f32 %v2950, %v3383
    %v3385 = vpop.f32.mrb[0].mxu0
    %v3386 = vadd.f32 %v2954, %v3385
    %v3387 = vpop.f32.mrb[0].mxu0
    %v3388 = vadd.f32 %v2950, %v3387
    %v3389 = vpop.f32.mrb[0].mxu0
    %v3390 = vadd.f32 %v2954, %v3389
    %3391 = vdwg.mxu0
    %3392 = vmatprep.subr.bf16.mxu0 %v3138
    %3393 = vmatpush1.bf16.msra.mxu0 %v3137
    %3394 = vmatprep.subr.bf16.mxu0 %v3154
    %3395 = vmatpush1.bf16.msra.mxu0 %v3153
    %3396 = vmatprep.subr.bf16.mxu0 %v3237
    %3397 = vmatpush1.bf16.msra.mxu0 %v3234
    %3398 = vmatprep.subr.bf16.mxu0 0
    %3399 = vmatpush1.bf16.msra.mxu0 0
    %3400 = vmatprep.subr.bf16.mxu0 0
    %3401 = vmatpush1.bf16.msra.mxu0 0
    %3402 = vmatprep.subr.bf16.mxu0 0
    %3403 = vmatpush1.bf16.msra.mxu0 0
    %3404 = vmatprep.subr.bf16.mxu0 0
    %3405 = vmatpush1.bf16.msra.mxu0 0
    %3406 = vmatprep.subr.bf16.mxu0 0
    %3407 = vmatpush1.bf16.msra.mxu0 0
    %3408 = vmatprep.subr.bf16.mxu0 0
    %3409 = vmatpush1.bf16.msra.mxu0 0
    %3410 = vmatprep.subr.bf16.mxu0 0
    %3411 = vmatpush1.bf16.msra.mxu0 0
    %3412 = vmatprep.subr.bf16.mxu0 0
    %3413 = vmatpush1.bf16.msra.mxu0 0
    %3414 = vmatprep.subr.bf16.mxu0 0
    %3415 = vmatpush1.bf16.msra.mxu0 0
    %3416 = vmatprep.subr.bf16.mxu0 0
    %3417 = vmatpush1.bf16.msra.mxu0 0
    %3418 = vmatprep.subr.bf16.mxu0 0
    %3419 = vmatpush1.bf16.msra.mxu0 0
    %3420 = vmatprep.subr.bf16.mxu0 0
    %3421 = vmatpush1.bf16.msra.mxu0 0
    %3422 = vmatprep.subr.bf16.mxu0 0
    %3423 = vmatpush1.bf16.msra.mxu0 0
    %3424 = vmatprep.mubr.bf16.mxu0 0
    %3425 = vmatmul.mubr.bf16.gmra.mrb[0].mxu0 %v3212
    %v3426 = vpop.f32.mrb[0].mxu0
    %v3427 = vadd.f32 %v2958, %v3426
    %v3428 = vpop.f32.mrb[0].mxu0
    %v3429 = vadd.f32 %v2962, %v3428
    %v3430 = vpop.f32.mrb[0].mxu0
    %v3431 = vadd.f32 %v2958, %v3430
    %v3432 = vpop.f32.mrb[0].mxu0
    %v3433 = vadd.f32 %v2962, %v3432
    %3434 = vdwg.mxu0
    %3435 = vmatprep.subr.bf16.mxu0 %v3140
    %3436 = vmatpush1.bf16.msra.mxu0 %v3139
    %3437 = vmatprep.subr.bf16.mxu0 %v3156
    %3438 = vmatpush1.bf16.msra.mxu0 %v3155
    %3439 = vmatprep.subr.bf16.mxu0 %v3243
    %3440 = vmatpush1.bf16.msra.mxu0 %v3240
    %3441 = vmatprep.subr.bf16.mxu0 0
    %3442 = vmatpush1.bf16.msra.mxu0 0
    %3443 = vmatprep.subr.bf16.mxu0 0
    %3444 = vmatpush1.bf16.msra.mxu0 0
    %3445 = vmatprep.subr.bf16.mxu0 0
    %3446 = vmatpush1.bf16.msra.mxu0 0
    %3447 = vmatprep.subr.bf16.mxu0 0
    %3448 = vmatpush1.bf16.msra.mxu0 0
    %3449 = vmatprep.subr.bf16.mxu0 0
    %3450 = vmatpush1.bf16.msra.mxu0 0
    %3451 = vmatprep.subr.bf16.mxu0 0
    %3452 = vmatpush1.bf16.msra.mxu0 0
    %3453 = vmatprep.subr.bf16.mxu0 0
    %3454 = vmatpush1.bf16.msra.mxu0 0
    %3455 = vmatprep.subr.bf16.mxu0 0
    %3456 = vmatpush1.bf16.msra.mxu0 0
    %3457 = vmatprep.subr.bf16.mxu0 0
    %3458 = vmatpush1.bf16.msra.mxu0 0
    %3459 = vmatprep.subr.bf16.mxu0 0
    %3460 = vmatpush1.bf16.msra.mxu0 0
    %3461 = vmatprep.subr.bf16.mxu0 0
    %3462 = vmatpush1.bf16.msra.mxu0 0
    %3463 = vmatprep.subr.bf16.mxu0 0
    %3464 = vmatpush1.bf16.msra.mxu0 0
    %3465 = vmatprep.subr.bf16.mxu0 0
    %3466 = vmatpush1.bf16.msra.mxu0 0
    %3467 = vmatprep.mubr.bf16.mxu0 0
    %3468 = vmatmul.mubr.bf16.gmra.mrb[0].mxu0 %v3212
    %v3469 = vpop.f32.mrb[0].mxu0
    %v3470 = vadd.f32 %v2966, %v3469
    %v3471 = vpop.f32.mrb[0].mxu0
    %v3472 = vadd.f32 %v2970, %v3471
    %v3473 = vpop.f32.mrb[0].mxu0
    %v3474 = vadd.f32 %v2966, %v3473
    %v3475 = vpop.f32.mrb[0].mxu0
    %v3476 = vadd.f32 %v2970, %v3475
    %3477 = vdwg.mxu0
    %3478 = vmatprep.subr.bf16.mxu0 %v3142
    %3479 = vmatpush1.bf16.msra.mxu0 %v3141
    %3480 = vmatprep.subr.bf16.mxu0 %v3158
    %3481 = vmatpush1.bf16.msra.mxu0 %v3157
    %3482 = vmatprep.subr.bf16.mxu0 %v3249
    %3483 = vmatpush1.bf16.msra.mxu0 %v3246
    %3484 = vmatprep.subr.bf16.mxu0 0
    %3485 = vmatpush1.bf16.msra.mxu0 0
    %3486 = vmatprep.subr.bf16.mxu0 0
    %3487 = vmatpush1.bf16.msra.mxu0 0
    %3488 = vmatprep.subr.bf16.mxu0 0
    %3489 = vmatpush1.bf16.msra.mxu0 0
    %3490 = vmatprep.subr.bf16.mxu0 0
    %3491 = vmatpush1.bf16.msra.mxu0 0
    %3492 = vmatprep.subr.bf16.mxu0 0
    %3493 = vmatpush1.bf16.msra.mxu0 0
    %3494 = vmatprep.subr.bf16.mxu0 0
    %3495 = vmatpush1.bf16.msra.mxu0 0
    %3496 = vmatprep.subr.bf16.mxu0 0
    %3497 = vmatpush1.bf16.msra.mxu0 0
    %3498 = vmatprep.subr.bf16.mxu0 0
    %3499 = vmatpush1.bf16.msra.mxu0 0
    %3500 = vmatprep.subr.bf16.mxu0 0
    %3501 = vmatpush1.bf16.msra.mxu0 0
    %3502 = vmatprep.subr.bf16.mxu0 0
    %3503 = vmatpush1.bf16.msra.mxu0 0
    %3504 = vmatprep.subr.bf16.mxu0 0
    %3505 = vmatpush1.bf16.msra.mxu0 0
    %3506 = vmatprep.subr.bf16.mxu0 0
    %3507 = vmatpush1.bf16.msra.mxu0 0
    %3508 = vmatprep.subr.bf16.mxu0 0
    %3509 = vmatpush1.bf16.msra.mxu0 0
    %3510 = vmatprep.mubr.bf16.mxu0 0
    %3511 = vmatmul.mubr.bf16.gmra.mrb[0].mxu0 %v3212
    %v3512 = vpop.f32.mrb[0].mxu0
    %v3513 = vadd.f32 %v2974, %v3512
    %v3514 = vpop.f32.mrb[0].mxu0
    %v3515 = vadd.f32 %v2978, %v3514
    %v3516 = vpop.f32.mrb[0].mxu0
    %v3517 = vadd.f32 %v2974, %v3516
    %v3518 = vpop.f32.mrb[0].mxu0
    %v3519 = vadd.f32 %v2978, %v3518
    %3520 = vdwg.mxu0
    %3521 = vmatprep.subr.bf16.mxu0 %v3144
    %3522 = vmatpush1.bf16.msra.mxu0 %v3143
    %3523 = vmatprep.subr.bf16.mxu0 %v3160
    %3524 = vmatpush1.bf16.msra.mxu0 %v3159
    %3525 = vmatprep.subr.bf16.mxu0 %v3255
    %3526 = vmatpush1.bf16.msra.mxu0 %v3252
    %3527 = vmatprep.subr.bf16.mxu0 0
    %3528 = vmatpush1.bf16.msra.mxu0 0
    %3529 = vmatprep.subr.bf16.mxu0 0
    %3530 = vmatpush1.bf16.msra.mxu0 0
    %3531 = vmatprep.subr.bf16.mxu0 0
    %3532 = vmatpush1.bf16.msra.mxu0 0
    %3533 = vmatprep.subr.bf16.mxu0 0
    %3534 = vmatpush1.bf16.msra.mxu0 0
    %3535 = vmatprep.subr.bf16.mxu0 0
    %3536 = vmatpush1.bf16.msra.mxu0 0
    %3537 = vmatprep.subr.bf16.mxu0 0
    %3538 = vmatpush1.bf16.msra.mxu0 0
    %3539 = vmatprep.subr.bf16.mxu0 0
    %3540 = vmatpush1.bf16.msra.mxu0 0
    %3541 = vmatprep.subr.bf16.mxu0 0
    %3542 = vmatpush1.bf16.msra.mxu0 0
    %3543 = vmatprep.subr.bf16.mxu0 0
    %3544 = vmatpush1.bf16.msra.mxu0 0
    %3545 = vmatprep.subr.bf16.mxu0 0
    %3546 = vmatpush1.bf16.msra.mxu0 0
    %3547 = vmatprep.subr.bf16.mxu0 0
    %3548 = vmatpush1.bf16.msra.mxu0 0
    %3549 = vmatprep.subr.bf16.mxu0 0
    %3550 = vmatpush1.bf16.msra.mxu0 0
    %3551 = vmatprep.subr.bf16.mxu0 0
    %3552 = vmatpush1.bf16.msra.mxu0 0
    %3553 = vmatprep.mubr.bf16.mxu0 0
    %3554 = vmatmul.mubr.bf16.gmra.mrb[0].mxu0 %v3212
    %v3555 = vpop.f32.mrb[0].mxu0
    %v3556 = vadd.f32 %v2982, %v3555
    %v3557 = vpop.f32.mrb[0].mxu0
    %v3558 = vadd.f32 %v2986, %v3557
    %v3559 = vpop.f32.mrb[0].mxu0
    %v3560 = vadd.f32 %v2982, %v3559
    %v3561 = vpop.f32.mrb[0].mxu0
    %v3562 = vadd.f32 %v2986, %v3561
    %3563 = vdwg.mxu0
    %3564 = vmatprep.subr.bf16.mxu0 %v3146
    %3565 = vmatpush1.bf16.msra.mxu0 %v3145
    %3566 = vmatprep.subr.bf16.mxu0 %v3162
    %3567 = vmatpush1.bf16.msra.mxu0 %v3161
    %3568 = vmatprep.subr.bf16.mxu0 %v3261
    %3569 = vmatpush1.bf16.msra.mxu0 %v3258
    %3570 = vmatprep.subr.bf16.mxu0 0
    %3571 = vmatpush1.bf16.msra.mxu0 0
    %3572 = vmatprep.subr.bf16.mxu0 0
    %3573 = vmatpush1.bf16.msra.mxu0 0
    %3574 = vmatprep.subr.bf16.mxu0 0
    %3575 = vmatpush1.bf16.msra.mxu0 0
    %3576 = vmatprep.subr.bf16.mxu0 0
    %3577 = vmatpush1.bf16.msra.mxu0 0
    %3578 = vmatprep.subr.bf16.mxu0 0
    %3579 = vmatpush1.bf16.msra.mxu0 0
    %3580 = vmatprep.subr.bf16.mxu0 0
    %3581 = vmatpush1.bf16.msra.mxu0 0
    %3582 = vmatprep.subr.bf16.mxu0 0
    %3583 = vmatpush1.bf16.msra.mxu0 0
    %3584 = vmatprep.subr.bf16.mxu0 0
    %3585 = vmatpush1.bf16.msra.mxu0 0
    %3586 = vmatprep.subr.bf16.mxu0 0
    %3587 = vmatpush1.bf16.msra.mxu0 0
    %3588 = vmatprep.subr.bf16.mxu0 0
    %3589 = vmatpush1.bf16.msra.mxu0 0
    %3590 = vmatprep.subr.bf16.mxu0 0
    %3591 = vmatpush1.bf16.msra.mxu0 0
    %3592 = vmatprep.subr.bf16.mxu0 0
    %3593 = vmatpush1.bf16.msra.mxu0 0
    %3594 = vmatprep.subr.bf16.mxu0 0
    %3595 = vmatpush1.bf16.msra.mxu0 0
    %3596 = vmatprep.mubr.bf16.mxu0 0
    %3597 = vmatmul.mubr.bf16.gmra.mrb[0].mxu0 %v3212
    %v3598 = vpop.f32.mrb[0].mxu0
    %v3599 = vadd.f32 %v2990, %v3598
    %v3600 = vpop.f32.mrb[0].mxu0
    %v3601 = vadd.f32 %v2994, %v3600
    %v3602 = vpop.f32.mrb[0].mxu0
    %v3603 = vadd.f32 %v2990, %v3602
    %v3604 = vpop.f32.mrb[0].mxu0
    %v3605 = vadd.f32 %v2994, %v3604
    %3606 = vdwg.mxu0
    %v3607 = vmax.f32 %v3298, 0.0
    %v3608 = vmax.f32 %v3300, 0.0
    %v3609 = vmax.f32 %v3341, 0.0
    %v3610 = vmax.f32 %v3343, 0.0
    %v3611 = vmax.f32 %v3384, 0.0
    %v3612 = vmax.f32 %v3386, 0.0
    %v3613 = vmax.f32 %v3427, 0.0
    %v3614 = vmax.f32 %v3429, 0.0
    %v3615 = vmax.f32 %v3470, 0.0
    %v3616 = vmax.f32 %v3472, 0.0
    %v3617 = vmax.f32 %v3513, 0.0
    %v3618 = vmax.f32 %v3515, 0.0
    %v3619 = vmax.f32 %v3556, 0.0
    %v3620 = vmax.f32 %v3558, 0.0
    %v3621 = vmax.f32 %v3599, 0.0
    %v3622 = vmax.f32 %v3601, 0.0
    %v3623 = vmax.f32 %v3302, 0.0
    %v3624 = vmax.f32 %v3304, 0.0
    %v3625 = vmax.f32 %v3345, 0.0
    %v3626 = vmax.f32 %v3347, 0.0
    %v3627 = vmax.f32 %v3388, 0.0
    %v3628 = vmax.f32 %v3390, 0.0
    %v3629 = vmax.f32 %v3431, 0.0
    %v3630 = vmax.f32 %v3433, 0.0
    %v3631 = vmax.f32 %v3474, 0.0
    %v3632 = vmax.f32 %v3476, 0.0
    %v3633 = vmax.f32 %v3517, 0.0
    %v3634 = vmax.f32 %v3519, 0.0
    %v3635 = vmax.f32 %v3560, 0.0
    %v3636 = vmax.f32 %v3562, 0.0
    %v3637 = vmax.f32 %v3603, 0.0
    %v3638 = vmax.f32 %v3605, 0.0
    %s3639 = smul.u32 4, 256
    %s3640 = smul.u32 %s3639, 1
    %s3641 = sshll.u32 %s3640, 4
    %3642 = dma.done %s138, %s3641
    %v3643 = vpack.c.bf16 %v3623, %v3607
    %v3644 = vpack.c.bf16 %v3624, %v3608
    %v3645 = vpack.c.bf16 %v3625, %v3609
    %v3646 = vpack.c.bf16 %v3626, %v3610
    %v3647 = vpack.c.bf16 %v3627, %v3611
    %v3648 = vpack.c.bf16 %v3628, %v3612
    %v3649 = vpack.c.bf16 %v3629, %v3613
    %v3650 = vpack.c.bf16 %v3630, %v3614
    %v3651 = vpack.c.bf16 %v3631, %v3615
    %v3652 = vpack.c.bf16 %v3632, %v3616
    %v3653 = vpack.c.bf16 %v3633, %v3617
    %v3654 = vpack.c.bf16 %v3634, %v3618
    %v3655 = vpack.c.bf16 %v3635, %v3619
    %v3656 = vpack.c.bf16 %v3636, %v3620
    %v3657 = vpack.c.bf16 %v3637, %v3621
    %v3658 = vpack.c.bf16 %v3638, %v3622
    %v3659 = vld [vmem:[#allocation3] sm:$0xff]
    %v3660 = vld [vmem:[#allocation3 + $0x8] sm:$0xff]
    %v3661 = vld [vmem:[#allocation3 + $0x10] sm:$0xff]
    %v3662 = vld [vmem:[#allocation3 + $0x18] sm:$0xff]
    %v3663 = vld [vmem:[#allocation3 + $0x20] sm:$0xff]
    %v3664 = vld [vmem:[#allocation3 + $0x28] sm:$0xff]
    %v3665 = vld [vmem:[#allocation3 + $0x30] sm:$0xff]
    %v3666 = vld [vmem:[#allocation3 + $0x38] sm:$0xff]
    %v3667 = vld [vmem:[#allocation3 + $0x40] sm:$0xff]
    %v3668 = vld [vmem:[#allocation3 + $0x48] sm:$0xff]
    %v3669 = vld [vmem:[#allocation3 + $0x50] sm:$0xff]
    %v3670 = vld [vmem:[#allocation3 + $0x58] sm:$0xff]
    %v3671 = vld [vmem:[#allocation3 + $0x60] sm:$0xff]
    %v3672 = vld [vmem:[#allocation3 + $0x68] sm:$0xff]
    %v3673 = vld [vmem:[#allocation3 + $0x70] sm:$0xff]
    %v3674 = vld [vmem:[#allocation3 + $0x78] sm:$0xff]
    %v3675 = vld [vmem:[#allocation3 + $0x80] sm:$0xff]
    %v3676 = vld [vmem:[#allocation3 + $0x88] sm:$0xff]
    %v3677 = vld [vmem:[#allocation3 + $0x90] sm:$0xff]
    %v3678 = vld [vmem:[#allocation3 + $0x98] sm:$0xff]
    %v3679 = vld [vmem:[#allocation3 + $0xa0] sm:$0xff]
    %v3680 = vld [vmem:[#allocation3 + $0xa8] sm:$0xff]
    %v3681 = vld [vmem:[#allocation3 + $0xb0] sm:$0xff]
    %v3682 = vld [vmem:[#allocation3 + $0xb8] sm:$0xff]
    %v3683 = vld [vmem:[#allocation3 + $0xc0] sm:$0xff]
    %v3684 = vld [vmem:[#allocation3 + $0xc8] sm:$0xff]
    %v3685 = vld [vmem:[#allocation3 + $0xd0] sm:$0xff]
    %v3686 = vld [vmem:[#allocation3 + $0xd8] sm:$0xff]
    %v3687 = vld [vmem:[#allocation3 + $0xe0] sm:$0xff]
    %v3688 = vld [vmem:[#allocation3 + $0xe8] sm:$0xff]
    %v3689 = vld [vmem:[#allocation3 + $0xf0] sm:$0xff]
    %v3690 = vld [vmem:[#allocation3 + $0xf8] sm:$0xff]
    %v3691 = vld [vmem:[#allocation3 + $0x100] sm:$0xff]
    %v3692 = vld [vmem:[#allocation3 + $0x108] sm:$0xff]
    %v3693 = vld [vmem:[#allocation3 + $0x110] sm:$0xff]
    %v3694 = vld [vmem:[#allocation3 + $0x118] sm:$0xff]
    %v3695 = vld [vmem:[#allocation3 + $0x120] sm:$0xff]
    %v3696 = vld [vmem:[#allocation3 + $0x128] sm:$0xff]
    %v3697 = vld [vmem:[#allocation3 + $0x130] sm:$0xff]
    %v3698 = vld [vmem:[#allocation3 + $0x138] sm:$0xff]
    %v3699 = vld [vmem:[#allocation3 + $0x140] sm:$0xff]
    %v3700 = vld [vmem:[#allocation3 + $0x148] sm:$0xff]
    %v3701 = vld [vmem:[#allocation3 + $0x150] sm:$0xff]
    %v3702 = vld [vmem:[#allocation3 + $0x158] sm:$0xff]
    %v3703 = vld [vmem:[#allocation3 + $0x160] sm:$0xff]
    %v3704 = vld [vmem:[#allocation3 + $0x168] sm:$0xff]
    %v3705 = vld [vmem:[#allocation3 + $0x170] sm:$0xff]
    %v3706 = vld [vmem:[#allocation3 + $0x178] sm:$0xff]
    %v3707 = vld [vmem:[#allocation3 + $0x180] sm:$0xff]
    %v3708 = vld [vmem:[#allocation3 + $0x188] sm:$0xff]
    %v3709 = vld [vmem:[#allocation3 + $0x190] sm:$0xff]
    %v3710 = vld [vmem:[#allocation3 + $0x198] sm:$0xff]
    %v3711 = vld [vmem:[#allocation3 + $0x1a0] sm:$0xff]
    %v3712 = vld [vmem:[#allocation3 + $0x1a8] sm:$0xff]
    %v3713 = vld [vmem:[#allocation3 + $0x1b0] sm:$0xff]
    %v3714 = vld [vmem:[#allocation3 + $0x1b8] sm:$0xff]
    %v3715 = vld [vmem:[#allocation3 + $0x1c0] sm:$0xff]
    %v3716 = vld [vmem:[#allocation3 + $0x1c8] sm:$0xff]
    %v3717 = vld [vmem:[#allocation3 + $0x1d0] sm:$0xff]
    %v3718 = vld [vmem:[#allocation3 + $0x1d8] sm:$0xff]
    %v3719 = vld [vmem:[#allocation3 + $0x1e0] sm:$0xff]
    %v3720 = vld [vmem:[#allocation3 + $0x1e8] sm:$0xff]
    %v3721 = vld [vmem:[#allocation3 + $0x1f0] sm:$0xff]
    %v3722 = vld [vmem:[#allocation3 + $0x1f8] sm:$0xff]
    %v3723 = vld [vmem:[#allocation3 + $0x200] sm:$0xff]
    %v3724 = vld [vmem:[#allocation3 + $0x208] sm:$0xff]
    %v3725 = vld [vmem:[#allocation3 + $0x210] sm:$0xff]
    %v3726 = vld [vmem:[#allocation3 + $0x218] sm:$0xff]
    %v3727 = vld [vmem:[#allocation3 + $0x220] sm:$0xff]
    %v3728 = vld [vmem:[#allocation3 + $0x228] sm:$0xff]
    %v3729 = vld [vmem:[#allocation3 + $0x230] sm:$0xff]
    %v3730 = vld [vmem:[#allocation3 + $0x238] sm:$0xff]
    %v3731 = vld [vmem:[#allocation3 + $0x240] sm:$0xff]
    %v3732 = vld [vmem:[#allocation3 + $0x248] sm:$0xff]
    %v3733 = vld [vmem:[#allocation3 + $0x250] sm:$0xff]
    %v3734 = vld [vmem:[#allocation3 + $0x258] sm:$0xff]
    %v3735 = vld [vmem:[#allocation3 + $0x260] sm:$0xff]
    %v3736 = vld [vmem:[#allocation3 + $0x268] sm:$0xff]
    %v3737 = vld [vmem:[#allocation3 + $0x270] sm:$0xff]
    %v3738 = vld [vmem:[#allocation3 + $0x278] sm:$0xff]
    %v3739 = vld [vmem:[#allocation3 + $0x280] sm:$0xff]
    %v3740 = vld [vmem:[#allocation3 + $0x288] sm:$0xff]
    %v3741 = vld [vmem:[#allocation3 + $0x290] sm:$0xff]
    %v3742 = vld [vmem:[#allocation3 + $0x298] sm:$0xff]
    %v3743 = vld [vmem:[#allocation3 + $0x2a0] sm:$0xff]
    %v3744 = vld [vmem:[#allocation3 + $0x2a8] sm:$0xff]
    %v3745 = vld [vmem:[#allocation3 + $0x2b0] sm:$0xff]
    %v3746 = vld [vmem:[#allocation3 + $0x2b8] sm:$0xff]
    %v3747 = vld [vmem:[#allocation3 + $0x2c0] sm:$0xff]
    %v3748 = vld [vmem:[#allocation3 + $0x2c8] sm:$0xff]
    %v3749 = vld [vmem:[#allocation3 + $0x2d0] sm:$0xff]
    %v3750 = vld [vmem:[#allocation3 + $0x2d8] sm:$0xff]
    %v3751 = vld [vmem:[#allocation3 + $0x2e0] sm:$0xff]
    %v3752 = vld [vmem:[#allocation3 + $0x2e8] sm:$0xff]
    %v3753 = vld [vmem:[#allocation3 + $0x2f0] sm:$0xff]
    %v3754 = vld [vmem:[#allocation3 + $0x2f8] sm:$0xff]
    %v3755 = vld [vmem:[#allocation3 + $0x300] sm:$0xff]
    %v3756 = vld [vmem:[#allocation3 + $0x308] sm:$0xff]
    %v3757 = vld [vmem:[#allocation3 + $0x310] sm:$0xff]
    %v3758 = vld [vmem:[#allocation3 + $0x318] sm:$0xff]
    %v3759 = vld [vmem:[#allocation3 + $0x320] sm:$0xff]
    %v3760 = vld [vmem:[#allocation3 + $0x328] sm:$0xff]
    %v3761 = vld [vmem:[#allocation3 + $0x330] sm:$0xff]
    %v3762 = vld [vmem:[#allocation3 + $0x338] sm:$0xff]
    %v3763 = vld [vmem:[#allocation3 + $0x340] sm:$0xff]
    %v3764 = vld [vmem:[#allocation3 + $0x348] sm:$0xff]
    %v3765 = vld [vmem:[#allocation3 + $0x350] sm:$0xff]
    %v3766 = vld [vmem:[#allocation3 + $0x358] sm:$0xff]
    %v3767 = vld [vmem:[#allocation3 + $0x360] sm:$0xff]
    %v3768 = vld [vmem:[#allocation3 + $0x368] sm:$0xff]
    %v3769 = vld [vmem:[#allocation3 + $0x370] sm:$0xff]
    %v3770 = vld [vmem:[#allocation3 + $0x378] sm:$0xff]
    %v3771 = vld [vmem:[#allocation3 + $0x380] sm:$0xff]
    %v3772 = vld [vmem:[#allocation3 + $0x388] sm:$0xff]
    %v3773 = vld [vmem:[#allocation3 + $0x390] sm:$0xff]
    %v3774 = vld [vmem:[#allocation3 + $0x398] sm:$0xff]
    %v3775 = vld [vmem:[#allocation3 + $0x3a0] sm:$0xff]
    %v3776 = vld [vmem:[#allocation3 + $0x3a8] sm:$0xff]
    %v3777 = vld [vmem:[#allocation3 + $0x3b0] sm:$0xff]
    %v3778 = vld [vmem:[#allocation3 + $0x3b8] sm:$0xff]
    %v3779 = vld [vmem:[#allocation3 + $0x3c0] sm:$0xff]
    %v3780 = vld [vmem:[#allocation3 + $0x3c8] sm:$0xff]
    %v3781 = vld [vmem:[#allocation3 + $0x3d0] sm:$0xff]
    %v3782 = vld [vmem:[#allocation3 + $0x3d8] sm:$0xff]
    %v3783 = vld [vmem:[#allocation3 + $0x3e0] sm:$0xff]
    %v3784 = vld [vmem:[#allocation3 + $0x3e8] sm:$0xff]
    %v3785 = vld [vmem:[#allocation3 + $0x3f0] sm:$0xff]
    %v3786 = vld [vmem:[#allocation3 + $0x3f8] sm:$0xff]
    %v3787 = vld [vmem:[%s1 + $0xa0] sm:$0x1]
    %v3788 = vlaneseq
    %v3789 = vshrl.u32 %v3788, 7
    %v3790 = vsub.s32 0, %v3789
    %v3791 = vrot.slane %v3787, %v3790
    %3792 = vmatprep.subr.bf16.mxu0 0
    %3793 = vmatpush1.bf16.msra.mxu0 %v3659
    %3794 = vmatprep.subr.bf16.mxu0 0
    %3795 = vmatpush1.bf16.msra.mxu0 %v3660
    %3796 = vmatprep.subr.bf16.mxu0 0
    %3797 = vmatpush1.bf16.msra.mxu0 %v3661
    %3798 = vmatprep.subr.bf16.mxu0 0
    %3799 = vmatpush1.bf16.msra.mxu0 %v3662
    %3800 = vmatprep.subr.bf16.mxu0 0
    %3801 = vmatpush1.bf16.msra.mxu0 %v3663
    %3802 = vmatprep.subr.bf16.mxu0 0
    %3803 = vmatpush1.bf16.msra.mxu0 %v3664
    %3804 = vmatprep.subr.bf16.mxu0 0
    %3805 = vmatpush1.bf16.msra.mxu0 %v3665
    %3806 = vmatprep.subr.bf16.mxu0 0
    %3807 = vmatpush1.bf16.msra.mxu0 %v3666
    %3808 = vmatprep.subr.bf16.mxu0 0
    %3809 = vmatpush1.bf16.msra.mxu0 %v3667
    %3810 = vmatprep.subr.bf16.mxu0 0
    %3811 = vmatpush1.bf16.msra.mxu0 %v3668
    %3812 = vmatprep.subr.bf16.mxu0 0
    %3813 = vmatpush1.bf16.msra.mxu0 %v3669
    %3814 = vmatprep.subr.bf16.mxu0 0
    %3815 = vmatpush1.bf16.msra.mxu0 %v3670
    %3816 = vmatprep.subr.bf16.mxu0 0
    %3817 = vmatpush1.bf16.msra.mxu0 %v3671
    %3818 = vmatprep.subr.bf16.mxu0 0
    %3819 = vmatpush1.bf16.msra.mxu0 %v3672
    %3820 = vmatprep.subr.bf16.mxu0 0
    %3821 = vmatpush1.bf16.msra.mxu0 %v3673
    %3822 = vmatprep.subr.bf16.mxu0 0
    %3823 = vmatpush1.bf16.msra.mxu0 %v3674
    %3824 = vmatprep.mubr.bf16.mxu0 %v3644
    %3825 = vmatmul.mubr.bf16.gmra.mrb[0].mxu0 %v3643
    %v3826 = vpop.f32.mrb[0].mxu0
    %v3827 = vadd.f32 %v3791, %v3826
    %v3828 = vpop.f32.mrb[0].mxu0
    %v3829 = vpop.f32.mrb[0].mxu0
    %v3830 = vadd.f32 %v3791, %v3829
    %v3831 = vpop.f32.mrb[0].mxu0
    %3832 = vdwg.mxu0
    %3833 = vmatprep.subr.bf16.mxu0 0
    %3834 = vmatpush1.bf16.msra.mxu0 %v3675
    %3835 = vmatprep.subr.bf16.mxu0 0
    %3836 = vmatpush1.bf16.msra.mxu0 %v3676
    %3837 = vmatprep.subr.bf16.mxu0 0
    %3838 = vmatpush1.bf16.msra.mxu0 %v3677
    %3839 = vmatprep.subr.bf16.mxu0 0
    %3840 = vmatpush1.bf16.msra.mxu0 %v3678
    %3841 = vmatprep.subr.bf16.mxu0 0
    %3842 = vmatpush1.bf16.msra.mxu0 %v3679
    %3843 = vmatprep.subr.bf16.mxu0 0
    %3844 = vmatpush1.bf16.msra.mxu0 %v3680
    %3845 = vmatprep.subr.bf16.mxu0 0
    %3846 = vmatpush1.bf16.msra.mxu0 %v3681
    %3847 = vmatprep.subr.bf16.mxu0 0
    %3848 = vmatpush1.bf16.msra.mxu0 %v3682
    %3849 = vmatprep.subr.bf16.mxu0 0
    %3850 = vmatpush1.bf16.msra.mxu0 %v3683
    %3851 = vmatprep.subr.bf16.mxu0 0
    %3852 = vmatpush1.bf16.msra.mxu0 %v3684
    %3853 = vmatprep.subr.bf16.mxu0 0
    %3854 = vmatpush1.bf16.msra.mxu0 %v3685
    %3855 = vmatprep.subr.bf16.mxu0 0
    %3856 = vmatpush1.bf16.msra.mxu0 %v3686
    %3857 = vmatprep.subr.bf16.mxu0 0
    %3858 = vmatpush1.bf16.msra.mxu0 %v3687
    %3859 = vmatprep.subr.bf16.mxu0 0
    %3860 = vmatpush1.bf16.msra.mxu0 %v3688
    %3861 = vmatprep.subr.bf16.mxu0 0
    %3862 = vmatpush1.bf16.msra.mxu0 %v3689
    %3863 = vmatprep.subr.bf16.mxu0 0
    %3864 = vmatpush1.bf16.msra.mxu0 %v3690
    %3865 = vmatprep.mubr.bf16.mxu0 %v3646
    %3866 = vmatmul.mubr.bf16.gmra.mrb[0].mxu0 %v3645
    %v3867 = vpop.f32.mrb[0].mxu0
    %v3868 = vadd.f32 %v3827, %v3867
    %v3869 = vpop.f32.mrb[0].mxu0
    %v3870 = vpop.f32.mrb[0].mxu0
    %v3871 = vadd.f32 %v3830, %v3870
    %v3872 = vpop.f32.mrb[0].mxu0
    %3873 = vdwg.mxu0
    %3874 = vmatprep.subr.bf16.mxu0 0
    %3875 = vmatpush1.bf16.msra.mxu0 %v3691
    %3876 = vmatprep.subr.bf16.mxu0 0
    %3877 = vmatpush1.bf16.msra.mxu0 %v3692
    %3878 = vmatprep.subr.bf16.mxu0 0
    %3879 = vmatpush1.bf16.msra.mxu0 %v3693
    %3880 = vmatprep.subr.bf16.mxu0 0
    %3881 = vmatpush1.bf16.msra.mxu0 %v3694
    %3882 = vmatprep.subr.bf16.mxu0 0
    %3883 = vmatpush1.bf16.msra.mxu0 %v3695
    %3884 = vmatprep.subr.bf16.mxu0 0
    %3885 = vmatpush1.bf16.msra.mxu0 %v3696
    %3886 = vmatprep.subr.bf16.mxu0 0
    %3887 = vmatpush1.bf16.msra.mxu0 %v3697
    %3888 = vmatprep.subr.bf16.mxu0 0
    %3889 = vmatpush1.bf16.msra.mxu0 %v3698
    %3890 = vmatprep.subr.bf16.mxu0 0
    %3891 = vmatpush1.bf16.msra.mxu0 %v3699
    %3892 = vmatprep.subr.bf16.mxu0 0
    %3893 = vmatpush1.bf16.msra.mxu0 %v3700
    %3894 = vmatprep.subr.bf16.mxu0 0
    %3895 = vmatpush1.bf16.msra.mxu0 %v3701
    %3896 = vmatprep.subr.bf16.mxu0 0
    %3897 = vmatpush1.bf16.msra.mxu0 %v3702
    %3898 = vmatprep.subr.bf16.mxu0 0
    %3899 = vmatpush1.bf16.msra.mxu0 %v3703
    %3900 = vmatprep.subr.bf16.mxu0 0
    %3901 = vmatpush1.bf16.msra.mxu0 %v3704
    %3902 = vmatprep.subr.bf16.mxu0 0
    %3903 = vmatpush1.bf16.msra.mxu0 %v3705
    %3904 = vmatprep.subr.bf16.mxu0 0
    %3905 = vmatpush1.bf16.msra.mxu0 %v3706
    %3906 = vmatprep.mubr.bf16.mxu0 %v3648
    %3907 = vmatmul.mubr.bf16.gmra.mrb[0].mxu0 %v3647
    %v3908 = vpop.f32.mrb[0].mxu0
    %v3909 = vadd.f32 %v3868, %v3908
    %v3910 = vpop.f32.mrb[0].mxu0
    %v3911 = vpop.f32.mrb[0].mxu0
    %v3912 = vadd.f32 %v3871, %v3911
    %v3913 = vpop.f32.mrb[0].mxu0
    %3914 = vdwg.mxu0
    %3915 = vmatprep.subr.bf16.mxu0 0
    %3916 = vmatpush1.bf16.msra.mxu0 %v3707
    %3917 = vmatprep.subr.bf16.mxu0 0
    %3918 = vmatpush1.bf16.msra.mxu0 %v3708
    %3919 = vmatprep.subr.bf16.mxu0 0
    %3920 = vmatpush1.bf16.msra.mxu0 %v3709
    %3921 = vmatprep.subr.bf16.mxu0 0
    %3922 = vmatpush1.bf16.msra.mxu0 %v3710
    %3923 = vmatprep.subr.bf16.mxu0 0
    %3924 = vmatpush1.bf16.msra.mxu0 %v3711
    %3925 = vmatprep.subr.bf16.mxu0 0
    %3926 = vmatpush1.bf16.msra.mxu0 %v3712
    %3927 = vmatprep.subr.bf16.mxu0 0
    %3928 = vmatpush1.bf16.msra.mxu0 %v3713
    %3929 = vmatprep.subr.bf16.mxu0 0
    %3930 = vmatpush1.bf16.msra.mxu0 %v3714
    %3931 = vmatprep.subr.bf16.mxu0 0
    %3932 = vmatpush1.bf16.msra.mxu0 %v3715
    %3933 = vmatprep.subr.bf16.mxu0 0
    %3934 = vmatpush1.bf16.msra.mxu0 %v3716
    %3935 = vmatprep.subr.bf16.mxu0 0
    %3936 = vmatpush1.bf16.msra.mxu0 %v3717
    %3937 = vmatprep.subr.bf16.mxu0 0
    %3938 = vmatpush1.bf16.msra.mxu0 %v3718
    %3939 = vmatprep.subr.bf16.mxu0 0
    %3940 = vmatpush1.bf16.msra.mxu0 %v3719
    %3941 = vmatprep.subr.bf16.mxu0 0
    %3942 = vmatpush1.bf16.msra.mxu0 %v3720
    %3943 = vmatprep.subr.bf16.mxu0 0
    %3944 = vmatpush1.bf16.msra.mxu0 %v3721
    %3945 = vmatprep.subr.bf16.mxu0 0
    %3946 = vmatpush1.bf16.msra.mxu0 %v3722
    %3947 = vmatprep.mubr.bf16.mxu0 %v3650
    %3948 = vmatmul.mubr.bf16.gmra.mrb[0].mxu0 %v3649
    %v3949 = vpop.f32.mrb[0].mxu0
    %v3950 = vadd.f32 %v3909, %v3949
    %v3951 = vpop.f32.mrb[0].mxu0
    %v3952 = vpop.f32.mrb[0].mxu0
    %v3953 = vadd.f32 %v3912, %v3952
    %v3954 = vpop.f32.mrb[0].mxu0
    %3955 = vdwg.mxu0
    %3956 = vmatprep.subr.bf16.mxu0 0
    %3957 = vmatpush1.bf16.msra.mxu0 %v3723
    %3958 = vmatprep.subr.bf16.mxu0 0
    %3959 = vmatpush1.bf16.msra.mxu0 %v3724
    %3960 = vmatprep.subr.bf16.mxu0 0
    %3961 = vmatpush1.bf16.msra.mxu0 %v3725
    %3962 = vmatprep.subr.bf16.mxu0 0
    %3963 = vmatpush1.bf16.msra.mxu0 %v3726
    %3964 = vmatprep.subr.bf16.mxu0 0
    %3965 = vmatpush1.bf16.msra.mxu0 %v3727
    %3966 = vmatprep.subr.bf16.mxu0 0
    %3967 = vmatpush1.bf16.msra.mxu0 %v3728
    %3968 = vmatprep.subr.bf16.mxu0 0
    %3969 = vmatpush1.bf16.msra.mxu0 %v3729
    %3970 = vmatprep.subr.bf16.mxu0 0
    %3971 = vmatpush1.bf16.msra.mxu0 %v3730
    %3972 = vmatprep.subr.bf16.mxu0 0
    %3973 = vmatpush1.bf16.msra.mxu0 %v3731
    %3974 = vmatprep.subr.bf16.mxu0 0
    %3975 = vmatpush1.bf16.msra.mxu0 %v3732
    %3976 = vmatprep.subr.bf16.mxu0 0
    %3977 = vmatpush1.bf16.msra.mxu0 %v3733
    %3978 = vmatprep.subr.bf16.mxu0 0
    %3979 = vmatpush1.bf16.msra.mxu0 %v3734
    %3980 = vmatprep.subr.bf16.mxu0 0
    %3981 = vmatpush1.bf16.msra.mxu0 %v3735
    %3982 = vmatprep.subr.bf16.mxu0 0
    %3983 = vmatpush1.bf16.msra.mxu0 %v3736
    %3984 = vmatprep.subr.bf16.mxu0 0
    %3985 = vmatpush1.bf16.msra.mxu0 %v3737
    %3986 = vmatprep.subr.bf16.mxu0 0
    %3987 = vmatpush1.bf16.msra.mxu0 %v3738
    %3988 = vmatprep.mubr.bf16.mxu0 %v3652
    %3989 = vmatmul.mubr.bf16.gmra.mrb[0].mxu0 %v3651
    %v3990 = vpop.f32.mrb[0].mxu0
    %v3991 = vadd.f32 %v3950, %v3990
    %v3992 = vpop.f32.mrb[0].mxu0
    %v3993 = vpop.f32.mrb[0].mxu0
    %v3994 = vadd.f32 %v3953, %v3993
    %v3995 = vpop.f32.mrb[0].mxu0
    %3996 = vdwg.mxu0
    %3997 = vmatprep.subr.bf16.mxu0 0
    %3998 = vmatpush1.bf16.msra.mxu0 %v3739
    %3999 = vmatprep.subr.bf16.mxu0 0
    %4000 = vmatpush1.bf16.msra.mxu0 %v3740
    %4001 = vmatprep.subr.bf16.mxu0 0
    %4002 = vmatpush1.bf16.msra.mxu0 %v3741
    %4003 = vmatprep.subr.bf16.mxu0 0
    %4004 = vmatpush1.bf16.msra.mxu0 %v3742
    %4005 = vmatprep.subr.bf16.mxu0 0
    %4006 = vmatpush1.bf16.msra.mxu0 %v3743
    %4007 = vmatprep.subr.bf16.mxu0 0
    %4008 = vmatpush1.bf16.msra.mxu0 %v3744
    %4009 = vmatprep.subr.bf16.mxu0 0
    %4010 = vmatpush1.bf16.msra.mxu0 %v3745
    %4011 = vmatprep.subr.bf16.mxu0 0
    %4012 = vmatpush1.bf16.msra.mxu0 %v3746
    %4013 = vmatprep.subr.bf16.mxu0 0
    %4014 = vmatpush1.bf16.msra.mxu0 %v3747
    %4015 = vmatprep.subr.bf16.mxu0 0
    %4016 = vmatpush1.bf16.msra.mxu0 %v3748
    %4017 = vmatprep.subr.bf16.mxu0 0
    %4018 = vmatpush1.bf16.msra.mxu0 %v3749
    %4019 = vmatprep.subr.bf16.mxu0 0
    %4020 = vmatpush1.bf16.msra.mxu0 %v3750
    %4021 = vmatprep.subr.bf16.mxu0 0
    %4022 = vmatpush1.bf16.msra.mxu0 %v3751
    %4023 = vmatprep.subr.bf16.mxu0 0
    %4024 = vmatpush1.bf16.msra.mxu0 %v3752
    %4025 = vmatprep.subr.bf16.mxu0 0
    %4026 = vmatpush1.bf16.msra.mxu0 %v3753
    %4027 = vmatprep.subr.bf16.mxu0 0
    %4028 = vmatpush1.bf16.msra.mxu0 %v3754
    %4029 = vmatprep.mubr.bf16.mxu0 %v3654
    %4030 = vmatmul.mubr.bf16.gmra.mrb[0].mxu0 %v3653
    %v4031 = vpop.f32.mrb[0].mxu0
    %v4032 = vadd.f32 %v3991, %v4031
    %v4033 = vpop.f32.mrb[0].mxu0
    %v4034 = vpop.f32.mrb[0].mxu0
    %v4035 = vadd.f32 %v3994, %v4034
    %v4036 = vpop.f32.mrb[0].mxu0
    %4037 = vdwg.mxu0
    %4038 = vmatprep.subr.bf16.mxu0 0
    %4039 = vmatpush1.bf16.msra.mxu0 %v3755
    %4040 = vmatprep.subr.bf16.mxu0 0
    %4041 = vmatpush1.bf16.msra.mxu0 %v3756
    %4042 = vmatprep.subr.bf16.mxu0 0
    %4043 = vmatpush1.bf16.msra.mxu0 %v3757
    %4044 = vmatprep.subr.bf16.mxu0 0
    %4045 = vmatpush1.bf16.msra.mxu0 %v3758
    %4046 = vmatprep.subr.bf16.mxu0 0
    %4047 = vmatpush1.bf16.msra.mxu0 %v3759
    %4048 = vmatprep.subr.bf16.mxu0 0
    %4049 = vmatpush1.bf16.msra.mxu0 %v3760
    %4050 = vmatprep.subr.bf16.mxu0 0
    %4051 = vmatpush1.bf16.msra.mxu0 %v3761
    %4052 = vmatprep.subr.bf16.mxu0 0
    %4053 = vmatpush1.bf16.msra.mxu0 %v3762
    %4054 = vmatprep.subr.bf16.mxu0 0
    %4055 = vmatpush1.bf16.msra.mxu0 %v3763
    %4056 = vmatprep.subr.bf16.mxu0 0
    %4057 = vmatpush1.bf16.msra.mxu0 %v3764
    %4058 = vmatprep.subr.bf16.mxu0 0
    %4059 = vmatpush1.bf16.msra.mxu0 %v3765
    %4060 = vmatprep.subr.bf16.mxu0 0
    %4061 = vmatpush1.bf16.msra.mxu0 %v3766
    %4062 = vmatprep.subr.bf16.mxu0 0
    %4063 = vmatpush1.bf16.msra.mxu0 %v3767
    %4064 = vmatprep.subr.bf16.mxu0 0
    %4065 = vmatpush1.bf16.msra.mxu0 %v3768
    %4066 = vmatprep.subr.bf16.mxu0 0
    %4067 = vmatpush1.bf16.msra.mxu0 %v3769
    %4068 = vmatprep.subr.bf16.mxu0 0
    %4069 = vmatpush1.bf16.msra.mxu0 %v3770
    %4070 = vmatprep.mubr.bf16.mxu0 %v3656
    %4071 = vmatmul.mubr.bf16.gmra.mrb[0].mxu0 %v3655
    %v4072 = vpop.f32.mrb[0].mxu0
    %v4073 = vadd.f32 %v4032, %v4072
    %v4074 = vpop.f32.mrb[0].mxu0
    %v4075 = vpop.f32.mrb[0].mxu0
    %v4076 = vadd.f32 %v4035, %v4075
    %v4077 = vpop.f32.mrb[0].mxu0
    %4078 = vdwg.mxu0
    %4079 = vmatprep.subr.bf16.mxu0 0
    %4080 = vmatpush1.bf16.msra.mxu0 %v3771
    %4081 = vmatprep.subr.bf16.mxu0 0
    %4082 = vmatpush1.bf16.msra.mxu0 %v3772
    %4083 = vmatprep.subr.bf16.mxu0 0
    %4084 = vmatpush1.bf16.msra.mxu0 %v3773
    %4085 = vmatprep.subr.bf16.mxu0 0
    %4086 = vmatpush1.bf16.msra.mxu0 %v3774
    %4087 = vmatprep.subr.bf16.mxu0 0
    %4088 = vmatpush1.bf16.msra.mxu0 %v3775
    %4089 = vmatprep.subr.bf16.mxu0 0
    %4090 = vmatpush1.bf16.msra.mxu0 %v3776
    %4091 = vmatprep.subr.bf16.mxu0 0
    %4092 = vmatpush1.bf16.msra.mxu0 %v3777
    %4093 = vmatprep.subr.bf16.mxu0 0
    %4094 = vmatpush1.bf16.msra.mxu0 %v3778
    %4095 = vmatprep.subr.bf16.mxu0 0
    %4096 = vmatpush1.bf16.msra.mxu0 %v3779
    %4097 = vmatprep.subr.bf16.mxu0 0
    %4098 = vmatpush1.bf16.msra.mxu0 %v3780
    %4099 = vmatprep.subr.bf16.mxu0 0
    %4100 = vmatpush1.bf16.msra.mxu0 %v3781
    %4101 = vmatprep.subr.bf16.mxu0 0
    %4102 = vmatpush1.bf16.msra.mxu0 %v3782
    %4103 = vmatprep.subr.bf16.mxu0 0
    %4104 = vmatpush1.bf16.msra.mxu0 %v3783
    %4105 = vmatprep.subr.bf16.mxu0 0
    %4106 = vmatpush1.bf16.msra.mxu0 %v3784
    %4107 = vmatprep.subr.bf16.mxu0 0
    %4108 = vmatpush1.bf16.msra.mxu0 %v3785
    %4109 = vmatprep.subr.bf16.mxu0 0
    %4110 = vmatpush1.bf16.msra.mxu0 %v3786
    %4111 = vmatprep.mubr.bf16.mxu0 %v3658
    %4112 = vmatmul.mubr.bf16.gmra.mrb[0].mxu0 %v3657
    %v4113 = vpop.f32.mrb[0].mxu0
    %v4114 = vadd.f32 %v4073, %v4113
    %v4115 = vpop.f32.mrb[0].mxu0
    %v4116 = vpop.f32.mrb[0].mxu0
    %v4117 = vadd.f32 %v4076, %v4116
    %v4118 = vpop.f32.mrb[0].mxu0
    %4119 = vdwg.mxu0
    %v4120 = vadd.f32 %v2880, %v4114
    %v4121 = vadd.f32 %v2881, %v4117
    %v4122 = vld [vmem:[%s1 + $0xa8] sm:$0x1]
    %v4123 = vld [vmem:[%s1 + $0xb0] sm:$0x1]
    %v4124 = vsel %vm543, %v4120, 0.0
    %4125 = vadd.xlane.f32.xlu0 %v4124
    %v4126 = vpop.xlane.xlu0 %4125
    %v4127 = vsel %vm543, %v4121, 0.0
    %4128 = vadd.xlane.f32.xlu0 %v4127
    %v4129 = vpop.xlane.xlu0 %4128
    %v4130 = vmul.f32 %v4126, %v2849
    %v4131 = vmul.f32 %v4129, %v2849
    %v4132 = vsub.f32 %v4120, %v4130
    %v4133 = vsub.f32 %v4121, %v4131
    %v4134 = vmul.f32 %v4132, %v4132
    %v4135 = vmul.f32 %v4133, %v4133
    %v4136 = vsel %vm543, %v4134, 0.0
    %4137 = vadd.xlane.f32.xlu0 %v4136
    %v4138 = vpop.xlane.xlu0 %4137
    %v4139 = vsel %vm543, %v4135, 0.0
    %4140 = vadd.xlane.f32.xlu0 %v4139
    %v4141 = vpop.xlane.xlu0 %4140
    %v4142 = vmul.f32 %v4138, %v2849
    %v4143 = vmul.f32 %v4141, %v2849
    %v4144 = vadd.f32 %v4142, 1e-05
    %v4145 = vadd.f32 %v4143, 1e-05
    %v4146 = vrsqrt.pop %v4144
    %v4147 = vrsqrt.pop %v4145
    %v4148 = vmul.f32 %v4132, %v4146
    %v4149 = vmul.f32 %v4133, %v4147
    %v4150 = vlaneseq
    %v4151 = vshrl.u32 %v4150, 7
    %v4152 = vsub.s32 0, %v4151
    %v4153 = vrot.slane %v4122, %v4152
    %v4154 = vmul.f32 %v4148, %v4153
    %v4155 = vmul.f32 %v4149, %v4153
    %v4156 = vlaneseq
    %v4157 = vshrl.u32 %v4156, 7
    %v4158 = vsub.s32 0, %v4157
    %v4159 = vrot.slane %v4123, %v4158
    %v4160 = vadd.f32 %v4154, %v4159
    %v4161 = vadd.f32 %v4155, %v4159
    %v4162 = vsel %vm543, %v4160, 0.0
    %v4163 = vrot.slane %v4162, 4
    %v4164 = vadd.f32 %v4162, %v4163
    %v4165 = vrot.slane %v4164, 2
    %v4166 = vadd.f32 %v4164, %v4165
    %v4167 = vrot.slane %v4166, 1
    %v4168 = vadd.f32 %v4166, %v4167
    %v4169 = vrcp.pop 8.0
    %v4170 = vmul.f32 %v4168, %v4169
    %v4171 = vsel %vm543, %v4161, 0.0
    %v4172 = vrot.slane %v4171, 4
    %v4173 = vadd.f32 %v4171, %v4172
    %v4174 = vrot.slane %v4173, 2
    %v4175 = vadd.f32 %v4173, %v4174
    %v4176 = vrot.slane %v4175, 1
    %v4177 = vadd.f32 %v4175, %v4176
    %v4178 = vmul.f32 %v4177, %v4169
    %vm4179 = vcmask 1040384
    %v4180 = vsel %vm4179, %v4170, %v4178
    %v4181 = vld [vmem:[%s1 + $0xb8] sm:$0xff]
    %v4182 = vld [vmem:[%s1 + $0xc0] sm:$0xff]
    %v4183 = vld [vmem:[%s1 + $0xc8] sm:$0xff]
    %v4184 = vld [vmem:[%s1 + $0xd0] sm:$0xff]
    %v4185 = vld [vmem:[%s1 + $0xd8] sm:$0xff]
    %v4186 = vld [vmem:[%s1 + $0xe0] sm:$0x1]
    %v4187 = vlaneseq
    %v4188 = vshrl.u32 %v4187, 7
    %v4189 = vsub.s32 0, %v4188
    %v4190 = vrot.slane %v4186, %v4189
    %v4192 = vsel %vm543, %v4180, 0
    %4194 = vmatprep.subr.mxu0 0.0
    %4195 = vmatpush1.msra.mxu0 %v4181
    %4196 = vmatprep.subr.mxu0 0.0
    %4197 = vmatpush1.msra.mxu0 %v4182
    %4198 = vmatprep.subr.mxu0 0.0
    %4199 = vmatpush1.msra.mxu0 %v4183
    %4200 = vmatprep.subr.mxu0 0.0
    %4201 = vmatpush1.msra.mxu0 %v4184
    %4202 = vmatprep.subr.mxu0 0.0
    %4203 = vmatpush1.msra.mxu0 %v4185
    %4204 = vmatprep.subr.mxu0 0.0
    %4205 = vmatpush1.msra.mxu0 0.0
    %4206 = vmatprep.subr.mxu0 0.0
    %4207 = vmatpush1.msra.mxu0 0.0
    %4208 = vmatprep.subr.mxu0 0.0
    %4209 = vmatpush1.msra.mxu0 0.0
    %4210 = vmatprep.subr.mxu0 0.0
    %4211 = vmatpush1.msra.mxu0 0.0
    %4212 = vmatprep.subr.mxu0 0.0
    %4213 = vmatpush1.msra.mxu0 0.0
    %4214 = vmatprep.subr.mxu0 0.0
    %4215 = vmatpush1.msra.mxu0 0.0
    %4216 = vmatprep.subr.mxu0 0.0
    %4217 = vmatpush1.msra.mxu0 0.0
    %4218 = vmatprep.subr.mxu0 0.0
    %4219 = vmatpush1.msra.mxu0 0.0
    %4220 = vmatprep.subr.mxu0 0.0
    %4221 = vmatpush1.msra.mxu0 0.0
    %4222 = vmatprep.subr.mxu0 0.0
    %4223 = vmatpush1.msra.mxu0 0.0
    %4224 = vmatprep.subr.mxu0 0.0
    %4225 = vmatpush1.msra.mxu0 0.0
    %4226 = vmatprep.subr.mxu0 0.0
    %4227 = vmatpush1.msra.mxu0 0.0
    %4228 = vmatprep.subr.mxu0 0.0
    %4229 = vmatpush1.msra.mxu0 0.0
    %4230 = vmatprep.subr.mxu0 0.0
    %4231 = vmatpush1.msra.mxu0 0.0
    %4232 = vmatprep.subr.mxu0 0.0
    %4233 = vmatpush1.msra.mxu0 0.0
    %4234 = vmatprep.subr.mxu0 0.0
    %4235 = vmatpush1.msra.mxu0 0.0
    %4236 = vmatprep.subr.mxu0 0.0
    %4237 = vmatpush1.msra.mxu0 0.0
    %4238 = vmatprep.subr.mxu0 0.0
    %4239 = vmatpush1.msra.mxu0 0.0
    %4240 = vmatprep.subr.mxu0 0.0
    %4241 = vmatpush1.msra.mxu0 0.0
    %4242 = vmatprep.subr.mxu0 0.0
    %4243 = vmatpush1.msra.mxu0 0.0
    %4244 = vmatprep.subr.mxu0 0.0
    %4245 = vmatpush1.msra.mxu0 0.0
    %4246 = vmatprep.subr.mxu0 0.0
    %4247 = vmatpush1.msra.mxu0 0.0
    %4248 = vmatprep.subr.mxu0 0.0
    %4249 = vmatpush1.msra.mxu0 0.0
    %4250 = vmatprep.subr.mxu0 0.0
    %4251 = vmatpush1.msra.mxu0 0.0
    %4252 = vmatprep.subr.mxu0 0.0
    %4253 = vmatpush1.msra.mxu0 0.0
    %4254 = vmatprep.subr.mxu0 0.0
    %4255 = vmatpush1.msra.mxu0 0.0
    %4256 = vmatprep.subr.mxu0 0.0
    %4257 = vmatpush1.msra.mxu0 0.0
    %4258 = vmatprep.mubr.f32.mxu0 0.0
    %4259 = vmatmul.mubr.f32.gmra.mrb[0].mxu0 %v4192
    %v4260 = vpop.f32.mrb[0].mxu0
    %v4261 = vadd.f32 %v4190, %v4260
    %v4262 = vpop.f32.mrb[0].mxu0
    %4263 = vdwg.mxu0
    %v4264 = vmax.f32 %v4261, 0.0
    %v4265 = vld [vmem:[%s1 + $0xe8] sm:$0xff]
    %v4266 = vld [vmem:[%s1 + $0xf0] sm:$0xff]
    %v4267 = vld [vmem:[%s1 + $0xf8] sm:$0xff]
    %v4268 = vld [vmem:[%s1 + $0x100] sm:$0xff]
    %v4269 = vld [vmem:[%s1 + $0x108] sm:$0x1]
    %v4270 = vlaneseq
    %v4271 = vshrl.u32 %v4270, 7
    %v4272 = vsub.s32 0, %v4271
    %v4273 = vrot.slane %v4269, %v4272
    %v4275 = vsel %vm2742, %v4264, 0
    %4277 = vmatprep.subr.mxu0 0.0
    %4278 = vmatpush1.msra.mxu0 %v4265
    %4279 = vmatprep.subr.mxu0 0.0
    %4280 = vmatpush1.msra.mxu0 %v4266
    %4281 = vmatprep.subr.mxu0 0.0
    %4282 = vmatpush1.msra.mxu0 %v4267
    %4283 = vmatprep.subr.mxu0 0.0
    %4284 = vmatpush1.msra.mxu0 %v4268
    %4285 = vmatprep.subr.mxu0 0.0
    %4286 = vmatpush1.msra.mxu0 0.0
    %4287 = vmatprep.subr.mxu0 0.0
    %4288 = vmatpush1.msra.mxu0 0.0
    %4289 = vmatprep.subr.mxu0 0.0
    %4290 = vmatpush1.msra.mxu0 0.0
    %4291 = vmatprep.subr.mxu0 0.0
    %4292 = vmatpush1.msra.mxu0 0.0
    %4293 = vmatprep.subr.mxu0 0.0
    %4294 = vmatpush1.msra.mxu0 0.0
    %4295 = vmatprep.subr.mxu0 0.0
    %4296 = vmatpush1.msra.mxu0 0.0
    %4297 = vmatprep.subr.mxu0 0.0
    %4298 = vmatpush1.msra.mxu0 0.0
    %4299 = vmatprep.subr.mxu0 0.0
    %4300 = vmatpush1.msra.mxu0 0.0
    %4301 = vmatprep.subr.mxu0 0.0
    %4302 = vmatpush1.msra.mxu0 0.0
    %4303 = vmatprep.subr.mxu0 0.0
    %4304 = vmatpush1.msra.mxu0 0.0
    %4305 = vmatprep.subr.mxu0 0.0
    %4306 = vmatpush1.msra.mxu0 0.0
    %4307 = vmatprep.subr.mxu0 0.0
    %4308 = vmatpush1.msra.mxu0 0.0
    %4309 = vmatprep.subr.mxu0 0.0
    %4310 = vmatpush1.msra.mxu0 0.0
    %4311 = vmatprep.subr.mxu0 0.0
    %4312 = vmatpush1.msra.mxu0 0.0
    %4313 = vmatprep.subr.mxu0 0.0
    %4314 = vmatpush1.msra.mxu0 0.0
    %4315 = vmatprep.subr.mxu0 0.0
    %4316 = vmatpush1.msra.mxu0 0.0
    %4317 = vmatprep.subr.mxu0 0.0
    %4318 = vmatpush1.msra.mxu0 0.0
    %4319 = vmatprep.subr.mxu0 0.0
    %4320 = vmatpush1.msra.mxu0 0.0
    %4321 = vmatprep.subr.mxu0 0.0
    %4322 = vmatpush1.msra.mxu0 0.0
    %4323 = vmatprep.subr.mxu0 0.0
    %4324 = vmatpush1.msra.mxu0 0.0
    %4325 = vmatprep.subr.mxu0 0.0
    %4326 = vmatpush1.msra.mxu0 0.0
    %4327 = vmatprep.subr.mxu0 0.0
    %4328 = vmatpush1.msra.mxu0 0.0
    %4329 = vmatprep.subr.mxu0 0.0
    %4330 = vmatpush1.msra.mxu0 0.0
    %4331 = vmatprep.subr.mxu0 0.0
    %4332 = vmatpush1.msra.mxu0 0.0
    %4333 = vmatprep.subr.mxu0 0.0
    %4334 = vmatpush1.msra.mxu0 0.0
    %4335 = vmatprep.subr.mxu0 0.0
    %4336 = vmatpush1.msra.mxu0 0.0
    %4337 = vmatprep.subr.mxu0 0.0
    %4338 = vmatpush1.msra.mxu0 0.0
    %4339 = vmatprep.subr.mxu0 0.0
    %4340 = vmatpush1.msra.mxu0 0.0
    %4341 = vmatprep.mubr.f32.mxu0 0.0
    %4342 = vmatmul.mubr.f32.gmra.mrb[0].mxu0 %v4275
    %v4343 = vpop.f32.mrb[0].mxu0
    %v4344 = vadd.f32 %v4273, %v4343
    %v4345 = vpop.f32.mrb[0].mxu0
    %4346 = vdwg.mxu0
    %vm4347 = vcmask 74752
    %v4348 = vsel %vm4347, %v4344, -inf
    %4349 = vmax.xlane.f32.xlu0 %v4348
    %v4350 = vpop.xlane.xlu0 %4349
    %v4351 = vsub.f32 %v4344, %v4350
    %v4352 = vmul.f32 %v4351, 1.442695
    %v4353 = vpow.pop %v4352
    %v4354 = vsel %vm4347, %v4353, 0.0
    %4355 = vadd.xlane.f32.xlu0 %v4354
    %v4356 = vpop.xlane.xlu0 %4355
    %v4357 = vrcp.pop %v4356
    %v4358 = vmul.f32 %v4353, %v4357
    %4359 = vst.msk [vmem:[#allocation5] sm:$0x3] %vm4347, %v4358
    // Predicated region
    $region82: #{trans_tc_forward.1} parent=1 // pred_check
      _
    $region83: #{trans_tc_forward.1} parent=1 // pred_check_branch
      %4361 = sbr.rel (0) target = $region85
    $region84: #{trans_tc_forward.1} parent=1 // pred_region
      %s4363 = ssub.s32 32, 32
      %4364 = vsyncadd [#allocation6], %s4363
      %s4366 = sshll.u32 [#allocation5], 4
      %s4367 = int_to_ptr.vmem [resolvable:$true] %s4366
      %4369 = dma.vmem_to_hbm [thread:$0]  %s4367, 32, %s5, [#allocation6]
    $region85: #{trans_tc_forward.1} parent=1 // pred_fallthru
      _
    // Predicated region
    $region86: #{trans_tc_forward.1} parent=1 // pred_check
      _
    $region87: #{trans_tc_forward.1} parent=1 // pred_check_branch
      %4371 = sbr.rel (0) target = $region89
    $region88: #{trans_tc_forward.1} parent=1 // pred_region
      %4372 = dma.done [#allocation6], 32
    $region89: #{trans_tc_forward.1} parent=1 // pred_fallthru
      _
    %4373 = vsyncpa [#allocation6], 1
  %4374 = vsyncmov [#allocation4]
  %s4375 = vpop.sfrf %4374
  %p4376 = scmp.eq.s32.totalorder %s4375, 0
  %p4377 = pneg %p4376
  %4379 = shalt.err (%p4377)
  %s4380 = scalar_lea.sflag [#allocation4], 1
  %4381 = vsyncmov %s4380
  %s4382 = vpop.sfrf %4381
  %p4383 = scmp.eq.s32.totalorder %s4382, 0
  %p4384 = pneg %p4383
  %4386 = shalt.err (%p4384)

</llo_original>
